<compile_context>
chip_gen: v6e
topology: v6e:2x2x1
jax: 0.10.0
libtpu: 0.0.40
codegen_flags: <defaults>
</compile_context>

<pallas_src>
import math

import jax
import jax.numpy as jnp
from jax.experimental import pallas as pl
from jax.experimental.pallas import tpu as pltpu

# ----------------------------- model config (mini-BERT) ----------------------
VOCAB = 128          # == lane width -> one-hot embedding matmul is lane-dense
TYPE_VOCAB = 2
MAX_POS = 64
HIDDEN = 32
N_HEADS = 4
HEAD_DIM = HIDDEN // N_HEADS
INTERMEDIATE = 64
N_LAYERS = 2
LN_EPS = 1e-12
NEG_INF = -1e9


# ------------------------- fused encoder + pooling kernel ---------------------
def fused_encoder_kernel(
    ids_ref, tt_ref, mask_ref,
    word_emb_ref, pos_emb_ref, type_emb_ref,
    emb_g_ref, emb_b_ref,
    wqkv_ref, bqkv_ref, wo_ref, bo_ref,
    ln1_g_ref, ln1_b_ref,
    w1_ref, b1_ref, w2_ref, b2_ref,
    ln2_g_ref, ln2_b_ref,
    o_ref,
):
    H, NH, hd = HIDDEN, N_HEADS, HEAD_DIM
    S = ids_ref.shape[0]
    scale = 1.0 / math.sqrt(hd)

    def layernorm(x, g, b):
        mu = jnp.mean(x, axis=-1, keepdims=True)
        var = jnp.mean((x - mu) ** 2, axis=-1, keepdims=True)
        return (x - mu) * jax.lax.rsqrt(var + LN_EPS) * g + b

    # ---- fused embedding lookup: one-hot matmul on the MXU (VOCAB == 128 lanes).
    ids = ids_ref[...]                                            # [S, 1] int32
    vocab_iota = jax.lax.broadcasted_iota(jnp.int32, (S, VOCAB), 1)
    onehot = jnp.where(ids == vocab_iota, 1.0, 0.0).astype(jnp.bfloat16)
    emb = jnp.dot(onehot, word_emb_ref[...],
                  preferred_element_type=jnp.float32)             # [S, H] f32
    tt = tt_ref[...]                                              # [S, 1] int32
    emb = emb + pos_emb_ref[...] + jnp.where(
        tt == 0, type_emb_ref[0:1, :], type_emb_ref[1:2, :])      # [S, H]
    x = layernorm(emb, emb_g_ref[...], emb_b_ref[...])            # [S, H] f32

    # ---- additive attention mask, hoisted out of the layer loop.
    mrow = mask_ref[...]                                          # [1, S] f32
    madd = ((1.0 - mrow) * NEG_INF).reshape(1, 1, S)              # [1, 1, S]

    for l in range(N_LAYERS):                                     # static unroll
        xb = x.astype(jnp.bfloat16)
        qkv = jnp.dot(xb, wqkv_ref[l],
                      preferred_element_type=jnp.float32) + bqkv_ref[l]   # [S, 3H]

        # Split heads into head-major [NH, S, hd] (static lane slices + stack).
        q = jnp.stack([qkv[:, h * hd:(h + 1) * hd] for h in range(NH)])
        k = jnp.stack([qkv[:, H + h * hd:H + (h + 1) * hd] for h in range(NH)])
        v = jnp.stack([qkv[:, 2 * H + h * hd:2 * H + (h + 1) * hd] for h in range(NH)])

        # One batched contraction per attention stage.
        s = jnp.einsum('hqd,hkd->hqk',
                       q.astype(jnp.bfloat16), k.astype(jnp.bfloat16),
                       preferred_element_type=jnp.float32) * scale + madd  # [NH,S,S]
        m = jnp.max(s, axis=-1, keepdims=True)
        p = jnp.exp(s - m)
        p = p * pl.reciprocal(jnp.sum(p, axis=-1, keepdims=True), approx=True)
        ctx = jnp.einsum('hqk,hkd->hqd',
                         p.astype(jnp.bfloat16), v.astype(jnp.bfloat16),
                         preferred_element_type=jnp.float32)               # [NH,S,hd]
        ctx = jnp.concatenate([ctx[h] for h in range(NH)], axis=-1)        # [S, H]

        attn = jnp.dot(ctx.astype(jnp.bfloat16), wo_ref[l],
                       preferred_element_type=jnp.float32) + bo_ref[l]
        x = layernorm(attn + x, ln1_g_ref[l], ln1_b_ref[l])

        ffn = jnp.dot(x.astype(jnp.bfloat16), w1_ref[l],
                      preferred_element_type=jnp.float32) + b1_ref[l]
        # TODO(synk): BERT reference GELU is exact erf; tanh approximation used here.
        ffn = jax.nn.gelu(ffn, approximate=True)
        ffn = jnp.dot(ffn.astype(jnp.bfloat16), w2_ref[l],
                      preferred_element_type=jnp.float32) + b2_ref[l]
        x = layernorm(ffn + x, ln2_g_ref[l], ln2_b_ref[l])

    # ---- masked mean pooling: one contraction + one full-width store.
    num = jnp.dot(mrow, x, preferred_element_type=jnp.float32)             # [1, H]
    den = jnp.maximum(jnp.sum(mrow, axis=-1, keepdims=True), 1e-9)         # [1, 1]
    o_ref[...] = num * pl.reciprocal(den, approx=True)


# ------------------------------ parameter init --------------------------------
def init_params(key):
    def normal(k, shape, scale=0.02, dtype=jnp.bfloat16):
        return (scale * jax.random.normal(k, shape)).astype(dtype)

    ks = iter(jax.random.split(key, 3 + 4 * N_LAYERS))
    L, H, I = N_LAYERS, HIDDEN, INTERMEDIATE
    return {
        # MXU operands stored in bf16; add-only / normalization params stay f32.
        "word_emb": normal(next(ks), (VOCAB, H)),
        "pos_emb": normal(next(ks), (MAX_POS, H), dtype=jnp.float32),
        "type_emb": normal(next(ks), (TYPE_VOCAB, H), dtype=jnp.float32),
        "emb_ln_g": jnp.ones((1, H), jnp.float32),
        "emb_ln_b": jnp.zeros((1, H), jnp.float32),
        # Per-layer weights stacked along a leading layer axis; Q/K/V fused.
        "wqkv": jnp.stack([normal(next(ks), (H, 3 * H)) for _ in range(L)]),
        "bqkv": jnp.zeros((L, 1, 3 * H), jnp.float32),
        "wo": jnp.stack([normal(next(ks), (H, H)) for _ in range(L)]),
        "bo": jnp.zeros((L, 1, H), jnp.float32),
        "ln1_g": jnp.ones((L, 1, H), jnp.float32),
        "ln1_b": jnp.zeros((L, 1, H), jnp.float32),
        "w1": jnp.stack([normal(next(ks), (H, I)) for _ in range(L)]),
        "b1": jnp.zeros((L, 1, I), jnp.float32),
        "w2": jnp.stack([normal(next(ks), (I, H)) for _ in range(L)]),
        "b2": jnp.zeros((L, 1, H), jnp.float32),
        "ln2_g": jnp.ones((L, 1, H), jnp.float32),
        "ln2_b": jnp.zeros((L, 1, H), jnp.float32),
    }


# ------------------------------- encoder forward -------------------------------
@jax.jit
def encode_and_pool(params, input_ids, attention_mask, token_type_ids):
    B, S = input_ids.shape
    ids = input_ids.astype(jnp.int32).reshape(B, S, 1)
    tts = token_type_ids.astype(jnp.int32).reshape(B, S, 1)
    mask = attention_mask.astype(jnp.float32).reshape(B, 1, S)
    pos = params["pos_emb"][:S]                                   # static slice [S, H]

    def full(arr):  # whole-array VMEM operand; index_map ignores the batch index
        return pl.BlockSpec(arr.shape, lambda b, nd=arr.ndim: (0,) * nd)

    weight_args = (
        params["word_emb"], pos, params["type_emb"],
        params["emb_ln_g"], params["emb_ln_b"],
        params["wqkv"], params["bqkv"], params["wo"], params["bo"],
        params["ln1_g"], params["ln1_b"],
        params["w1"], params["b1"], params["w2"], params["b2"],
        params["ln2_g"], params["ln2_b"],
    )
    in_specs = (
        [pl.BlockSpec((None, S, 1), lambda b: (b, 0, 0)),         # input_ids
         pl.BlockSpec((None, S, 1), lambda b: (b, 0, 0)),         # token_type_ids
         pl.BlockSpec((None, 1, S), lambda b: (b, 0, 0))]         # attention_mask
        + [full(a) for a in weight_args]
    )
    out = pl.pallas_call(
        fused_encoder_kernel,
        grid=(B,),
        out_shape=jax.ShapeDtypeStruct((B, 1, HIDDEN), jnp.float32),
        in_specs=in_specs,
        out_specs=pl.BlockSpec((None, 1, HIDDEN), lambda b: (b, 0, 0)),
        compiler_params=pltpu.CompilerParams(
            dimension_semantics=("parallel",)),                   # v7x: 2 TCs split batch
    )(ids, tts, mask, *weight_args)
    return out.reshape(B, HIDDEN)


def network_forward(params, x1, x2=None, mode="train", version=None):
    # TODO(synk): mode=='test' hidden-state averaging ('last2' / 'first&last') not implemented.
    if x2 is None or x2 is x1:
        # Encoder is deterministic here (dropout=0, augmentation hooks not reproduced),
        # so the second view is identical -> skip the redundant encode (2x saving).
        s1 = encode_and_pool(params, x1["input_ids"], x1["attention_mask"],
                             x1["token_type_ids"])
        return s1, s1
    # Two distinct views: concatenate along batch and run ONE fused kernel call.
    B = x1["input_ids"].shape[0]
    ids = jnp.concatenate([x1["input_ids"], x2["input_ids"]], axis=0)
    am = jnp.concatenate([x1["attention_mask"], x2["attention_mask"]], axis=0)
    tt = jnp.concatenate([x1["token_type_ids"], x2["token_type_ids"]], axis=0)
    s = encode_and_pool(params, ids, am, tt)
    return s[:B], s[B:]


# ------------------------------------ main -------------------------------------
if __name__ == "__main__":
    B, S = 2, 8
    key = jax.random.PRNGKey(0)
    k_params, k_ids, k_ids2 = jax.random.split(key, 3)

    params = init_params(k_params)

    input_ids = jax.random.randint(k_ids, (B, S), 0, VOCAB, dtype=jnp.int32)
    attention_mask = jnp.array([[1, 1, 1, 1, 1, 1, 1, 1],
                                [1, 1, 1, 1, 1, 0, 0, 0]], dtype=jnp.int32)
    token_type_ids = jnp.zeros((B, S), dtype=jnp.int32)

    x1 = {"input_ids": input_ids,
          "attention_mask": attention_mask,
          "token_type_ids": token_type_ids}

    # Single-view path (x2 defaults to x1 -> second encode skipped).
    s1, s2 = network_forward(params, x1)
    jax.block_until_ready((s1, s2))
    assert s1.shape == (B, HIDDEN) and s2.shape == (B, HIDDEN)
    assert jnp.all(jnp.isfinite(s1)) and jnp.all(jnp.isfinite(s2))

    # Two-view path (views concatenated along batch -> one kernel call).
    input_ids2 = jax.random.randint(k_ids2, (B, S), 0, VOCAB, dtype=jnp.int32)
    x2 = {"input_ids": input_ids2,
          "attention_mask": attention_mask,
          "token_type_ids": token_type_ids}
    t1, t2 = network_forward(params, x1, x2)
    jax.block_until_ready((t1, t2))
    assert t1.shape == (B, HIDDEN) and t2.shape == (B, HIDDEN)
    assert jnp.all(jnp.isfinite(t1)) and jnp.all(jnp.isfinite(t2))

    print("KERNEL_OK")
</pallas_src>

<mosaic_0001>
module attributes {stable_mosaic.version = 11 : i64} {
  func.func @fused_encoder_kernel(%arg0: i32, %arg1: memref<1x8x1xi32, #tpu.memory_space<vmem>>, %arg2: memref<1x8x1xi32, #tpu.memory_space<vmem>>, %arg3: memref<1x1x8xf32, #tpu.memory_space<vmem>>, %arg4: memref<128x32xbf16, #tpu.memory_space<vmem>>, %arg5: memref<8x32xf32, #tpu.memory_space<vmem>>, %arg6: memref<2x32xf32, #tpu.memory_space<vmem>>, %arg7: memref<1x32xf32, #tpu.memory_space<vmem>>, %arg8: memref<1x32xf32, #tpu.memory_space<vmem>>, %arg9: memref<2x32x96xbf16, #tpu.memory_space<vmem>>, %arg10: memref<2x1x96xf32, #tpu.memory_space<vmem>>, %arg11: memref<2x32x32xbf16, #tpu.memory_space<vmem>>, %arg12: memref<2x1x32xf32, #tpu.memory_space<vmem>>, %arg13: memref<2x1x32xf32, #tpu.memory_space<vmem>>, %arg14: memref<2x1x32xf32, #tpu.memory_space<vmem>>, %arg15: memref<2x32x64xbf16, #tpu.memory_space<vmem>>, %arg16: memref<2x1x64xf32, #tpu.memory_space<vmem>>, %arg17: memref<2x64x32xbf16, #tpu.memory_space<vmem>>, %arg18: memref<2x1x32xf32, #tpu.memory_space<vmem>>, %arg19: memref<2x1x32xf32, #tpu.memory_space<vmem>>, %arg20: memref<2x1x32xf32, #tpu.memory_space<vmem>>, %arg21: memref<1x1x32xf32, #tpu.memory_space<vmem>>) attributes {dimension_semantics = [#tpu.dimension_semantics<parallel>], iteration_bounds = array<i64: 2>, scalar_prefetch = 0 : i64, scratch_operands = 0 : i64, tpu.core_type = #tpu.core_type<tc>, window_params = [{transform_indices = @transform_0, window_bounds = array<i64: 1, 8, 1>}, {transform_indices = @transform_1, window_bounds = array<i64: 1, 8, 1>}, {transform_indices = @transform_2, window_bounds = array<i64: 1, 1, 8>}, {pipeline_mode = #tpu.pipeline_mode<synchronous>, transform_indices = @transform_3, window_bounds = array<i64: 128, 32>}, {pipeline_mode = #tpu.pipeline_mode<synchronous>, transform_indices = @transform_4, window_bounds = array<i64: 8, 32>}, {pipeline_mode = #tpu.pipeline_mode<synchronous>, transform_indices = @transform_5, window_bounds = array<i64: 2, 32>}, {pipeline_mode = #tpu.pipeline_mode<synchronous>, transform_indices = @transform_6, window_bounds = array<i64: 1, 32>}, {pipeline_mode = #tpu.pipeline_mode<synchronous>, transform_indices = @transform_7, window_bounds = array<i64: 1, 32>}, {pipeline_mode = #tpu.pipeline_mode<synchronous>, transform_indices = @transform_8, window_bounds = array<i64: 2, 32, 96>}, {pipeline_mode = #tpu.pipeline_mode<synchronous>, transform_indices = @transform_9, window_bounds = array<i64: 2, 1, 96>}, {pipeline_mode = #tpu.pipeline_mode<synchronous>, transform_indices = @transform_10, window_bounds = array<i64: 2, 32, 32>}, {pipeline_mode = #tpu.pipeline_mode<synchronous>, transform_indices = @transform_11, window_bounds = array<i64: 2, 1, 32>}, {pipeline_mode = #tpu.pipeline_mode<synchronous>, transform_indices = @transform_12, window_bounds = array<i64: 2, 1, 32>}, {pipeline_mode = #tpu.pipeline_mode<synchronous>, transform_indices = @transform_13, window_bounds = array<i64: 2, 1, 32>}, {pipeline_mode = #tpu.pipeline_mode<synchronous>, transform_indices = @transform_14, window_bounds = array<i64: 2, 32, 64>}, {pipeline_mode = #tpu.pipeline_mode<synchronous>, transform_indices = @transform_15, window_bounds = array<i64: 2, 1, 64>}, {pipeline_mode = #tpu.pipeline_mode<synchronous>, transform_indices = @transform_16, window_bounds = array<i64: 2, 64, 32>}, {pipeline_mode = #tpu.pipeline_mode<synchronous>, transform_indices = @transform_17, window_bounds = array<i64: 2, 1, 32>}, {pipeline_mode = #tpu.pipeline_mode<synchronous>, transform_indices = @transform_18, window_bounds = array<i64: 2, 1, 32>}, {pipeline_mode = #tpu.pipeline_mode<synchronous>, transform_indices = @transform_19, window_bounds = array<i64: 2, 1, 32>}, {transform_indices = @transform_20, window_bounds = array<i64: 1, 1, 32>}]} {
    %c0 = arith.constant 0 : index
    %c0_0 = arith.constant 0 : index
    %c0_1 = arith.constant 0 : index
    %0 = vector.load %arg1[%c0, %c0_0, %c0_1] : memref<1x8x1xi32, #tpu.memory_space<vmem>>, vector<1x8x1xi32>
    %1 = vector.shape_cast %0 : vector<1x8x1xi32> to vector<8x1xi32>
    %2 = tpu.iota {dimensions = array<i32: 1>} : vector<8x128xi32>
    %3 = vector.broadcast %1 : vector<8x1xi32> to vector<8x128xi32>
    %4 = arith.cmpi eq, %3, %2 : vector<8x128xi32>
    %cst = arith.constant 1.000000e+00 : f32
    %cst_2 = arith.constant 0.000000e+00 : f32
    %5 = vector.broadcast %cst : f32 to vector<8x128xf32>
    %6 = vector.broadcast %cst_2 : f32 to vector<8x128xf32>
    %7 = arith.select %4, %5, %6 : vector<8x128xi1>, vector<8x128xf32>
    %8 = arith.truncf %7 : vector<8x128xf32> to vector<8x128xbf16>
    %c0_3 = arith.constant 0 : index
    %c0_4 = arith.constant 0 : index
    %9 = vector.load %arg4[%c0_3, %c0_4] : memref<128x32xbf16, #tpu.memory_space<vmem>>, vector<128x32xbf16>
    %cst_5 = arith.constant dense<0.000000e+00> : vector<8x32xf32>
    %10 = tpu.matmul %8, %9, %cst_5 {dimension_numbers = #tpu.dot_dimension_numbers<[1], [0], [0], [1], [0, 0, 1, 1], [], []>} : vector<8x128xbf16>, vector<128x32xbf16>, vector<8x32xf32> -> vector<8x32xf32>
    %c0_6 = arith.constant 0 : index
    %c0_7 = arith.constant 0 : index
    %c0_8 = arith.constant 0 : index
    %11 = vector.load %arg2[%c0_6, %c0_7, %c0_8] : memref<1x8x1xi32, #tpu.memory_space<vmem>>, vector<1x8x1xi32>
    %12 = vector.shape_cast %11 : vector<1x8x1xi32> to vector<8x1xi32>
    %c0_9 = arith.constant 0 : index
    %c0_10 = arith.constant 0 : index
    %13 = vector.load %arg5[%c0_9, %c0_10] : memref<8x32xf32, #tpu.memory_space<vmem>>, vector<8x32xf32>
    %14 = arith.addf %10, %13 : vector<8x32xf32>
    %c0_i32 = arith.constant 0 : i32
    %15 = vector.broadcast %c0_i32 : i32 to vector<8x1xi32>
    %16 = arith.cmpi eq, %12, %15 : vector<8x1xi32>
    %c0_11 = arith.constant 0 : index
    %c0_12 = arith.constant 0 : index
    %17 = vector.load %arg6[%c0_11, %c0_12] : memref<2x32xf32, #tpu.memory_space<vmem>>, vector<1x32xf32>
    %c1 = arith.constant 1 : index
    %c0_13 = arith.constant 0 : index
    %18 = vector.load %arg6[%c1, %c0_13] : memref<2x32xf32, #tpu.memory_space<vmem>>, vector<1x32xf32>
    %19 = vector.shape_cast %16 : vector<8x1xi1> to vector<8x1xi1>
    %20 = vector.broadcast %19 : vector<8x1xi1> to vector<8x32xi1>
    %21 = vector.shape_cast %17 : vector<1x32xf32> to vector<1x32xf32>
    %22 = vector.broadcast %21 : vector<1x32xf32> to vector<8x32xf32>
    %23 = vector.shape_cast %18 : vector<1x32xf32> to vector<1x32xf32>
    %24 = vector.broadcast %23 : vector<1x32xf32> to vector<8x32xf32>
    %25 = arith.select %20, %22, %24 : vector<8x32xi1>, vector<8x32xf32>
    %26 = arith.addf %14, %25 : vector<8x32xf32>
    %c0_14 = arith.constant 0 : index
    %c0_15 = arith.constant 0 : index
    %27 = vector.load %arg7[%c0_14, %c0_15] : memref<1x32xf32, #tpu.memory_space<vmem>>, vector<1x32xf32>
    %c0_16 = arith.constant 0 : index
    %c0_17 = arith.constant 0 : index
    %28 = vector.load %arg8[%c0_16, %c0_17] : memref<1x32xf32, #tpu.memory_space<vmem>>, vector<1x32xf32>
    %cst_18 = arith.constant dense<0.000000e+00> : vector<8xf32>
    %29 = vector.multi_reduction <add>, %26, %cst_18 [1] : vector<8x32xf32> to vector<8xf32>
    %30 = vector.shape_cast %29 : vector<8xf32> to vector<8x1xf32>
    %cst_19 = arith.constant 3.200000e+01 : f32
    %31 = vector.broadcast %cst_19 : f32 to vector<8x1xf32>
    %32 = arith.divf %30, %31 : vector<8x1xf32>
    %33 = vector.broadcast %32 : vector<8x1xf32> to vector<8x32xf32>
    %34 = arith.subf %26, %33 : vector<8x32xf32>
    %35 = arith.mulf %34, %34 : vector<8x32xf32>
    %cst_20 = arith.constant dense<0.000000e+00> : vector<8xf32>
    %36 = vector.multi_reduction <add>, %35, %cst_20 [1] : vector<8x32xf32> to vector<8xf32>
    %37 = vector.shape_cast %36 : vector<8xf32> to vector<8x1xf32>
    %cst_21 = arith.constant 3.200000e+01 : f32
    %38 = vector.broadcast %cst_21 : f32 to vector<8x1xf32>
    %39 = arith.divf %37, %38 : vector<8x1xf32>
    %40 = vector.broadcast %32 : vector<8x1xf32> to vector<8x32xf32>
    %41 = arith.subf %26, %40 : vector<8x32xf32>
    %cst_22 = arith.constant 9.99999996E-13 : f32
    %42 = vector.broadcast %cst_22 : f32 to vector<8x1xf32>
    %43 = arith.addf %39, %42 : vector<8x1xf32>
    %44 = math.rsqrt %43 : vector<8x1xf32>
    %45 = vector.broadcast %44 : vector<8x1xf32> to vector<8x32xf32>
    %46 = arith.mulf %41, %45 : vector<8x32xf32>
    %47 = vector.broadcast %27 : vector<1x32xf32> to vector<8x32xf32>
    %48 = arith.mulf %46, %47 : vector<8x32xf32>
    %49 = vector.broadcast %28 : vector<1x32xf32> to vector<8x32xf32>
    %50 = arith.addf %48, %49 : vector<8x32xf32>
    %c0_23 = arith.constant 0 : index
    %c0_24 = arith.constant 0 : index
    %c0_25 = arith.constant 0 : index
    %51 = vector.load %arg3[%c0_23, %c0_24, %c0_25] : memref<1x1x8xf32, #tpu.memory_space<vmem>>, vector<1x1x8xf32>
    %52 = vector.shape_cast %51 : vector<1x1x8xf32> to vector<1x8xf32>
    %cst_26 = arith.constant 1.000000e+00 : f32
    %53 = vector.broadcast %cst_26 : f32 to vector<1x8xf32>
    %54 = arith.subf %53, %52 : vector<1x8xf32>
    %cst_27 = arith.constant -1.000000e+09 : f32
    %55 = vector.broadcast %cst_27 : f32 to vector<1x8xf32>
    %56 = arith.mulf %54, %55 : vector<1x8xf32>
    %57 = vector.shape_cast %56 : vector<1x8xf32> to vector<1x1x8xf32>
    %58 = arith.truncf %50 : vector<8x32xf32> to vector<8x32xbf16>
    %c0_28 = arith.constant 0 : index
    %c0_29 = arith.constant 0 : index
    %c0_30 = arith.constant 0 : index
    %59 = vector.load %arg9[%c0_28, %c0_29, %c0_30] : memref<2x32x96xbf16, #tpu.memory_space<vmem>>, vector<1x32x96xbf16>
    %60 = vector.shape_cast %59 : vector<1x32x96xbf16> to vector<32x96xbf16>
    %cst_31 = arith.constant dense<0.000000e+00> : vector<8x96xf32>
    %61 = tpu.matmul %58, %60, %cst_31 {dimension_numbers = #tpu.dot_dimension_numbers<[1], [0], [0], [1], [0, 0, 1, 1], [], []>} : vector<8x32xbf16>, vector<32x96xbf16>, vector<8x96xf32> -> vector<8x96xf32>
    %c0_32 = arith.constant 0 : index
    %c0_33 = arith.constant 0 : index
    %c0_34 = arith.constant 0 : index
    %62 = vector.load %arg10[%c0_32, %c0_33, %c0_34] : memref<2x1x96xf32, #tpu.memory_space<vmem>>, vector<1x1x96xf32>
    %63 = vector.shape_cast %62 : vector<1x1x96xf32> to vector<1x96xf32>
    %64 = vector.broadcast %63 : vector<1x96xf32> to vector<8x96xf32>
    %65 = arith.addf %61, %64 : vector<8x96xf32>
    %66 = vector.extract_strided_slice %65 {offsets = [0, 0], sizes = [8, 8], strides = [1, 1]} : vector<8x96xf32> to vector<8x8xf32>
    %67 = vector.extract_strided_slice %65 {offsets = [0, 8], sizes = [8, 8], strides = [1, 1]} : vector<8x96xf32> to vector<8x8xf32>
    %68 = vector.extract_strided_slice %65 {offsets = [0, 16], sizes = [8, 8], strides = [1, 1]} : vector<8x96xf32> to vector<8x8xf32>
    %69 = vector.extract_strided_slice %65 {offsets = [0, 24], sizes = [8, 8], strides = [1, 1]} : vector<8x96xf32> to vector<8x8xf32>
    %70 = vector.shape_cast %66 : vector<8x8xf32> to vector<1x8x8xf32>
    %71 = vector.shape_cast %67 : vector<8x8xf32> to vector<1x8x8xf32>
    %72 = vector.shape_cast %68 : vector<8x8xf32> to vector<1x8x8xf32>
    %73 = vector.shape_cast %69 : vector<8x8xf32> to vector<1x8x8xf32>
    %74 = tpu.concatenate %70, %71, %72, %73 in 0 : vector<1x8x8xf32>, vector<1x8x8xf32>, vector<1x8x8xf32>, vector<1x8x8xf32> -> vector<4x8x8xf32>
    %75 = vector.extract_strided_slice %65 {offsets = [0, 32], sizes = [8, 8], strides = [1, 1]} : vector<8x96xf32> to vector<8x8xf32>
    %76 = vector.extract_strided_slice %65 {offsets = [0, 40], sizes = [8, 8], strides = [1, 1]} : vector<8x96xf32> to vector<8x8xf32>
    %77 = vector.extract_strided_slice %65 {offsets = [0, 48], sizes = [8, 8], strides = [1, 1]} : vector<8x96xf32> to vector<8x8xf32>
    %78 = vector.extract_strided_slice %65 {offsets = [0, 56], sizes = [8, 8], strides = [1, 1]} : vector<8x96xf32> to vector<8x8xf32>
    %79 = vector.shape_cast %75 : vector<8x8xf32> to vector<1x8x8xf32>
    %80 = vector.shape_cast %76 : vector<8x8xf32> to vector<1x8x8xf32>
    %81 = vector.shape_cast %77 : vector<8x8xf32> to vector<1x8x8xf32>
    %82 = vector.shape_cast %78 : vector<8x8xf32> to vector<1x8x8xf32>
    %83 = tpu.concatenate %79, %80, %81, %82 in 0 : vector<1x8x8xf32>, vector<1x8x8xf32>, vector<1x8x8xf32>, vector<1x8x8xf32> -> vector<4x8x8xf32>
    %84 = vector.extract_strided_slice %65 {offsets = [0, 64], sizes = [8, 8], strides = [1, 1]} : vector<8x96xf32> to vector<8x8xf32>
    %85 = vector.extract_strided_slice %65 {offsets = [0, 72], sizes = [8, 8], strides = [1, 1]} : vector<8x96xf32> to vector<8x8xf32>
    %86 = vector.extract_strided_slice %65 {offsets = [0, 80], sizes = [8, 8], strides = [1, 1]} : vector<8x96xf32> to vector<8x8xf32>
    %87 = vector.extract_strided_slice %65 {offsets = [0, 88], sizes = [8, 8], strides = [1, 1]} : vector<8x96xf32> to vector<8x8xf32>
    %88 = vector.shape_cast %84 : vector<8x8xf32> to vector<1x8x8xf32>
    %89 = vector.shape_cast %85 : vector<8x8xf32> to vector<1x8x8xf32>
    %90 = vector.shape_cast %86 : vector<8x8xf32> to vector<1x8x8xf32>
    %91 = vector.shape_cast %87 : vector<8x8xf32> to vector<1x8x8xf32>
    %92 = tpu.concatenate %88, %89, %90, %91 in 0 : vector<1x8x8xf32>, vector<1x8x8xf32>, vector<1x8x8xf32>, vector<1x8x8xf32> -> vector<4x8x8xf32>
    %93 = arith.truncf %74 : vector<4x8x8xf32> to vector<4x8x8xbf16>
    %94 = arith.truncf %83 : vector<4x8x8xf32> to vector<4x8x8xbf16>
    "tpu.trace_start"() <{level = 10 : i32, message = "hqd,hkd->hqk"}> : () -> ()
    %cst_35 = arith.constant dense<0.000000e+00> : vector<4x8x8xf32>
    %95 = tpu.matmul %93, %94, %cst_35 {dimension_numbers = #tpu.dot_dimension_numbers<[2], [2], [1], [1], [0, 0, 0, 1, 1, 1], [0], [0]>} : vector<4x8x8xbf16>, vector<4x8x8xbf16>, vector<4x8x8xf32> -> vector<4x8x8xf32>
    "tpu.trace_stop"() : () -> ()
    %cst_36 = arith.constant 0.353553385 : f32
    %96 = vector.broadcast %cst_36 : f32 to vector<4x8x8xf32>
    %97 = arith.mulf %95, %96 : vector<4x8x8xf32>
    %98 = vector.broadcast %57 : vector<1x1x8xf32> to vector<4x8x8xf32>
    %99 = arith.addf %97, %98 : vector<4x8x8xf32>
    %cst_37 = arith.constant dense<0xFF800000> : vector<4x8xf32>
    %100 = vector.multi_reduction <maximumf>, %99, %cst_37 [2] : vector<4x8x8xf32> to vector<4x8xf32>
    %101 = vector.shape_cast %100 : vector<4x8xf32> to vector<4x8x1xf32>
    %102 = vector.broadcast %101 : vector<4x8x1xf32> to vector<4x8x8xf32>
    %103 = arith.subf %99, %102 : vector<4x8x8xf32>
    %104 = math.exp %103 : vector<4x8x8xf32>
    %cst_38 = arith.constant dense<0.000000e+00> : vector<4x8xf32>
    %105 = vector.multi_reduction <add>, %104, %cst_38 [2] : vector<4x8x8xf32> to vector<4x8xf32>
    %106 = vector.shape_cast %105 : vector<4x8xf32> to vector<4x8x1xf32>
    %107 = tpu.reciprocal %106 {approx = true} : vector<4x8x1xf32> -> vector<4x8x1xf32>
    %108 = vector.broadcast %107 : vector<4x8x1xf32> to vector<4x8x8xf32>
    %109 = arith.mulf %104, %108 : vector<4x8x8xf32>
    %110 = arith.truncf %109 : vector<4x8x8xf32> to vector<4x8x8xbf16>
    %111 = arith.truncf %92 : vector<4x8x8xf32> to vector<4x8x8xbf16>
    "tpu.trace_start"() <{level = 10 : i32, message = "hqk,hkd->hqd"}> : () -> ()
    %cst_39 = arith.constant dense<0.000000e+00> : vector<4x8x8xf32>
    %112 = tpu.matmul %110, %111, %cst_39 {dimension_numbers = #tpu.dot_dimension_numbers<[2], [1], [1], [2], [0, 0, 0, 1, 1, 2], [0], [0]>} : vector<4x8x8xbf16>, vector<4x8x8xbf16>, vector<4x8x8xf32> -> vector<4x8x8xf32>
    "tpu.trace_stop"() : () -> ()
    %113 = vector.extract_strided_slice %112 {offsets = [0, 0, 0], sizes = [1, 8, 8], strides = [1, 1, 1]} : vector<4x8x8xf32> to vector<1x8x8xf32>
    %114 = vector.shape_cast %113 : vector<1x8x8xf32> to vector<8x8xf32>
    %115 = vector.extract_strided_slice %112 {offsets = [1, 0, 0], sizes = [1, 8, 8], strides = [1, 1, 1]} : vector<4x8x8xf32> to vector<1x8x8xf32>
    %116 = vector.shape_cast %115 : vector<1x8x8xf32> to vector<8x8xf32>
    %117 = vector.extract_strided_slice %112 {offsets = [2, 0, 0], sizes = [1, 8, 8], strides = [1, 1, 1]} : vector<4x8x8xf32> to vector<1x8x8xf32>
    %118 = vector.shape_cast %117 : vector<1x8x8xf32> to vector<8x8xf32>
    %119 = vector.extract_strided_slice %112 {offsets = [3, 0, 0], sizes = [1, 8, 8], strides = [1, 1, 1]} : vector<4x8x8xf32> to vector<1x8x8xf32>
    %120 = vector.shape_cast %119 : vector<1x8x8xf32> to vector<8x8xf32>
    %121 = tpu.concatenate %114, %116, %118, %120 in 1 : vector<8x8xf32>, vector<8x8xf32>, vector<8x8xf32>, vector<8x8xf32> -> vector<8x32xf32>
    %122 = arith.truncf %121 : vector<8x32xf32> to vector<8x32xbf16>
    %c0_40 = arith.constant 0 : index
    %c0_41 = arith.constant 0 : index
    %c0_42 = arith.constant 0 : index
    %123 = vector.load %arg11[%c0_40, %c0_41, %c0_42] : memref<2x32x32xbf16, #tpu.memory_space<vmem>>, vector<1x32x32xbf16>
    %124 = vector.shape_cast %123 : vector<1x32x32xbf16> to vector<32x32xbf16>
    %cst_43 = arith.constant dense<0.000000e+00> : vector<8x32xf32>
    %125 = tpu.matmul %122, %124, %cst_43 {dimension_numbers = #tpu.dot_dimension_numbers<[1], [0], [0], [1], [0, 0, 1, 1], [], []>} : vector<8x32xbf16>, vector<32x32xbf16>, vector<8x32xf32> -> vector<8x32xf32>
    %c0_44 = arith.constant 0 : index
    %c0_45 = arith.constant 0 : index
    %c0_46 = arith.constant 0 : index
    %126 = vector.load %arg12[%c0_44, %c0_45, %c0_46] : memref<2x1x32xf32, #tpu.memory_space<vmem>>, vector<1x1x32xf32>
    %127 = vector.shape_cast %126 : vector<1x1x32xf32> to vector<1x32xf32>
    %128 = vector.broadcast %127 : vector<1x32xf32> to vector<8x32xf32>
    %129 = arith.addf %125, %128 : vector<8x32xf32>
    %130 = arith.addf %129, %50 : vector<8x32xf32>
    %c0_47 = arith.constant 0 : index
    %c0_48 = arith.constant 0 : index
    %c0_49 = arith.constant 0 : index
    %131 = vector.load %arg13[%c0_47, %c0_48, %c0_49] : memref<2x1x32xf32, #tpu.memory_space<vmem>>, vector<1x1x32xf32>
    %132 = vector.shape_cast %131 : vector<1x1x32xf32> to vector<1x32xf32>
    %c0_50 = arith.constant 0 : index
    %c0_51 = arith.constant 0 : index
    %c0_52 = arith.constant 0 : index
    %133 = vector.load %arg14[%c0_50, %c0_51, %c0_52] : memref<2x1x32xf32, #tpu.memory_space<vmem>>, vector<1x1x32xf32>
    %134 = vector.shape_cast %133 : vector<1x1x32xf32> to vector<1x32xf32>
    %cst_53 = arith.constant dense<0.000000e+00> : vector<8xf32>
    %135 = vector.multi_reduction <add>, %130, %cst_53 [1] : vector<8x32xf32> to vector<8xf32>
    %136 = vector.shape_cast %135 : vector<8xf32> to vector<8x1xf32>
    %cst_54 = arith.constant 3.200000e+01 : f32
    %137 = vector.broadcast %cst_54 : f32 to vector<8x1xf32>
    %138 = arith.divf %136, %137 : vector<8x1xf32>
    %139 = vector.broadcast %138 : vector<8x1xf32> to vector<8x32xf32>
    %140 = arith.subf %130, %139 : vector<8x32xf32>
    %141 = arith.mulf %140, %140 : vector<8x32xf32>
    %cst_55 = arith.constant dense<0.000000e+00> : vector<8xf32>
    %142 = vector.multi_reduction <add>, %141, %cst_55 [1] : vector<8x32xf32> to vector<8xf32>
    %143 = vector.shape_cast %142 : vector<8xf32> to vector<8x1xf32>
    %cst_56 = arith.constant 3.200000e+01 : f32
    %144 = vector.broadcast %cst_56 : f32 to vector<8x1xf32>
    %145 = arith.divf %143, %144 : vector<8x1xf32>
    %146 = vector.broadcast %138 : vector<8x1xf32> to vector<8x32xf32>
    %147 = arith.subf %130, %146 : vector<8x32xf32>
    %cst_57 = arith.constant 9.99999996E-13 : f32
    %148 = vector.broadcast %cst_57 : f32 to vector<8x1xf32>
    %149 = arith.addf %145, %148 : vector<8x1xf32>
    %150 = math.rsqrt %149 : vector<8x1xf32>
    %151 = vector.broadcast %150 : vector<8x1xf32> to vector<8x32xf32>
    %152 = arith.mulf %147, %151 : vector<8x32xf32>
    %153 = vector.broadcast %132 : vector<1x32xf32> to vector<8x32xf32>
    %154 = arith.mulf %152, %153 : vector<8x32xf32>
    %155 = vector.broadcast %134 : vector<1x32xf32> to vector<8x32xf32>
    %156 = arith.addf %154, %155 : vector<8x32xf32>
    %157 = arith.truncf %156 : vector<8x32xf32> to vector<8x32xbf16>
    %c0_58 = arith.constant 0 : index
    %c0_59 = arith.constant 0 : index
    %c0_60 = arith.constant 0 : index
    %158 = vector.load %arg15[%c0_58, %c0_59, %c0_60] : memref<2x32x64xbf16, #tpu.memory_space<vmem>>, vector<1x32x64xbf16>
    %159 = vector.shape_cast %158 : vector<1x32x64xbf16> to vector<32x64xbf16>
    %cst_61 = arith.constant dense<0.000000e+00> : vector<8x64xf32>
    %160 = tpu.matmul %157, %159, %cst_61 {dimension_numbers = #tpu.dot_dimension_numbers<[1], [0], [0], [1], [0, 0, 1, 1], [], []>} : vector<8x32xbf16>, vector<32x64xbf16>, vector<8x64xf32> -> vector<8x64xf32>
    %c0_62 = arith.constant 0 : index
    %c0_63 = arith.constant 0 : index
    %c0_64 = arith.constant 0 : index
    %161 = vector.load %arg16[%c0_62, %c0_63, %c0_64] : memref<2x1x64xf32, #tpu.memory_space<vmem>>, vector<1x1x64xf32>
    %162 = vector.shape_cast %161 : vector<1x1x64xf32> to vector<1x64xf32>
    %163 = vector.broadcast %162 : vector<1x64xf32> to vector<8x64xf32>
    %164 = arith.addf %160, %163 : vector<8x64xf32>
    %165 = arith.mulf %164, %164 : vector<8x64xf32>
    %166 = arith.mulf %164, %165 : vector<8x64xf32>
    %cst_65 = arith.constant 4.471500e-02 : f32
    %167 = vector.broadcast %cst_65 : f32 to vector<8x64xf32>
    %168 = arith.mulf %167, %166 : vector<8x64xf32>
    %169 = arith.addf %164, %168 : vector<8x64xf32>
    %cst_66 = arith.constant 0.797884583 : f32
    %170 = vector.broadcast %cst_66 : f32 to vector<8x64xf32>
    %171 = arith.mulf %170, %169 : vector<8x64xf32>
    %172 = math.tanh %171 : vector<8x64xf32>
    %cst_67 = arith.constant 1.000000e+00 : f32
    %173 = vector.broadcast %cst_67 : f32 to vector<8x64xf32>
    %174 = arith.addf %173, %172 : vector<8x64xf32>
    %cst_68 = arith.constant 5.000000e-01 : f32
    %175 = vector.broadcast %cst_68 : f32 to vector<8x64xf32>
    %176 = arith.mulf %175, %174 : vector<8x64xf32>
    %177 = arith.mulf %164, %176 : vector<8x64xf32>
    %178 = arith.truncf %177 : vector<8x64xf32> to vector<8x64xbf16>
    %c0_69 = arith.constant 0 : index
    %c0_70 = arith.constant 0 : index
    %c0_71 = arith.constant 0 : index
    %179 = vector.load %arg17[%c0_69, %c0_70, %c0_71] : memref<2x64x32xbf16, #tpu.memory_space<vmem>>, vector<1x64x32xbf16>
    %180 = vector.shape_cast %179 : vector<1x64x32xbf16> to vector<64x32xbf16>
    %cst_72 = arith.constant dense<0.000000e+00> : vector<8x32xf32>
    %181 = tpu.matmul %178, %180, %cst_72 {dimension_numbers = #tpu.dot_dimension_numbers<[1], [0], [0], [1], [0, 0, 1, 1], [], []>} : vector<8x64xbf16>, vector<64x32xbf16>, vector<8x32xf32> -> vector<8x32xf32>
    %c0_73 = arith.constant 0 : index
    %c0_74 = arith.constant 0 : index
    %c0_75 = arith.constant 0 : index
    %182 = vector.load %arg18[%c0_73, %c0_74, %c0_75] : memref<2x1x32xf32, #tpu.memory_space<vmem>>, vector<1x1x32xf32>
    %183 = vector.shape_cast %182 : vector<1x1x32xf32> to vector<1x32xf32>
    %184 = vector.broadcast %183 : vector<1x32xf32> to vector<8x32xf32>
    %185 = arith.addf %181, %184 : vector<8x32xf32>
    %186 = arith.addf %185, %156 : vector<8x32xf32>
    %c0_76 = arith.constant 0 : index
    %c0_77 = arith.constant 0 : index
    %c0_78 = arith.constant 0 : index
    %187 = vector.load %arg19[%c0_76, %c0_77, %c0_78] : memref<2x1x32xf32, #tpu.memory_space<vmem>>, vector<1x1x32xf32>
    %188 = vector.shape_cast %187 : vector<1x1x32xf32> to vector<1x32xf32>
    %c0_79 = arith.constant 0 : index
    %c0_80 = arith.constant 0 : index
    %c0_81 = arith.constant 0 : index
    %189 = vector.load %arg20[%c0_79, %c0_80, %c0_81] : memref<2x1x32xf32, #tpu.memory_space<vmem>>, vector<1x1x32xf32>
    %190 = vector.shape_cast %189 : vector<1x1x32xf32> to vector<1x32xf32>
    %cst_82 = arith.constant dense<0.000000e+00> : vector<8xf32>
    %191 = vector.multi_reduction <add>, %186, %cst_82 [1] : vector<8x32xf32> to vector<8xf32>
    %192 = vector.shape_cast %191 : vector<8xf32> to vector<8x1xf32>
    %cst_83 = arith.constant 3.200000e+01 : f32
    %193 = vector.broadcast %cst_83 : f32 to vector<8x1xf32>
    %194 = arith.divf %192, %193 : vector<8x1xf32>
    %195 = vector.broadcast %194 : vector<8x1xf32> to vector<8x32xf32>
    %196 = arith.subf %186, %195 : vector<8x32xf32>
    %197 = arith.mulf %196, %196 : vector<8x32xf32>
    %cst_84 = arith.constant dense<0.000000e+00> : vector<8xf32>
    %198 = vector.multi_reduction <add>, %197, %cst_84 [1] : vector<8x32xf32> to vector<8xf32>
    %199 = vector.shape_cast %198 : vector<8xf32> to vector<8x1xf32>
    %cst_85 = arith.constant 3.200000e+01 : f32
    %200 = vector.broadcast %cst_85 : f32 to vector<8x1xf32>
    %201 = arith.divf %199, %200 : vector<8x1xf32>
    %202 = vector.broadcast %194 : vector<8x1xf32> to vector<8x32xf32>
    %203 = arith.subf %186, %202 : vector<8x32xf32>
    %cst_86 = arith.constant 9.99999996E-13 : f32
    %204 = vector.broadcast %cst_86 : f32 to vector<8x1xf32>
    %205 = arith.addf %201, %204 : vector<8x1xf32>
    %206 = math.rsqrt %205 : vector<8x1xf32>
    %207 = vector.broadcast %206 : vector<8x1xf32> to vector<8x32xf32>
    %208 = arith.mulf %203, %207 : vector<8x32xf32>
    %209 = vector.broadcast %188 : vector<1x32xf32> to vector<8x32xf32>
    %210 = arith.mulf %208, %209 : vector<8x32xf32>
    %211 = vector.broadcast %190 : vector<1x32xf32> to vector<8x32xf32>
    %212 = arith.addf %210, %211 : vector<8x32xf32>
    %213 = arith.truncf %212 : vector<8x32xf32> to vector<8x32xbf16>
    %c1_87 = arith.constant 1 : index
    %c0_88 = arith.constant 0 : index
    %c0_89 = arith.constant 0 : index
    %214 = vector.load %arg9[%c1_87, %c0_88, %c0_89] : memref<2x32x96xbf16, #tpu.memory_space<vmem>>, vector<1x32x96xbf16>
    %215 = vector.shape_cast %214 : vector<1x32x96xbf16> to vector<32x96xbf16>
    %cst_90 = arith.constant dense<0.000000e+00> : vector<8x96xf32>
    %216 = tpu.matmul %213, %215, %cst_90 {dimension_numbers = #tpu.dot_dimension_numbers<[1], [0], [0], [1], [0, 0, 1, 1], [], []>} : vector<8x32xbf16>, vector<32x96xbf16>, vector<8x96xf32> -> vector<8x96xf32>
    %c1_91 = arith.constant 1 : index
    %c0_92 = arith.constant 0 : index
    %c0_93 = arith.constant 0 : index
    %217 = vector.load %arg10[%c1_91, %c0_92, %c0_93] : memref<2x1x96xf32, #tpu.memory_space<vmem>>, vector<1x1x96xf32>
    %218 = vector.shape_cast %217 : vector<1x1x96xf32> to vector<1x96xf32>
    %219 = vector.broadcast %218 : vector<1x96xf32> to vector<8x96xf32>
    %220 = arith.addf %216, %219 : vector<8x96xf32>
    %221 = vector.extract_strided_slice %220 {offsets = [0, 0], sizes = [8, 8], strides = [1, 1]} : vector<8x96xf32> to vector<8x8xf32>
    %222 = vector.extract_strided_slice %220 {offsets = [0, 8], sizes = [8, 8], strides = [1, 1]} : vector<8x96xf32> to vector<8x8xf32>
    %223 = vector.extract_strided_slice %220 {offsets = [0, 16], sizes = [8, 8], strides = [1, 1]} : vector<8x96xf32> to vector<8x8xf32>
    %224 = vector.extract_strided_slice %220 {offsets = [0, 24], sizes = [8, 8], strides = [1, 1]} : vector<8x96xf32> to vector<8x8xf32>
    %225 = vector.shape_cast %221 : vector<8x8xf32> to vector<1x8x8xf32>
    %226 = vector.shape_cast %222 : vector<8x8xf32> to vector<1x8x8xf32>
    %227 = vector.shape_cast %223 : vector<8x8xf32> to vector<1x8x8xf32>
    %228 = vector.shape_cast %224 : vector<8x8xf32> to vector<1x8x8xf32>
    %229 = tpu.concatenate %225, %226, %227, %228 in 0 : vector<1x8x8xf32>, vector<1x8x8xf32>, vector<1x8x8xf32>, vector<1x8x8xf32> -> vector<4x8x8xf32>
    %230 = vector.extract_strided_slice %220 {offsets = [0, 32], sizes = [8, 8], strides = [1, 1]} : vector<8x96xf32> to vector<8x8xf32>
    %231 = vector.extract_strided_slice %220 {offsets = [0, 40], sizes = [8, 8], strides = [1, 1]} : vector<8x96xf32> to vector<8x8xf32>
    %232 = vector.extract_strided_slice %220 {offsets = [0, 48], sizes = [8, 8], strides = [1, 1]} : vector<8x96xf32> to vector<8x8xf32>
    %233 = vector.extract_strided_slice %220 {offsets = [0, 56], sizes = [8, 8], strides = [1, 1]} : vector<8x96xf32> to vector<8x8xf32>
    %234 = vector.shape_cast %230 : vector<8x8xf32> to vector<1x8x8xf32>
    %235 = vector.shape_cast %231 : vector<8x8xf32> to vector<1x8x8xf32>
    %236 = vector.shape_cast %232 : vector<8x8xf32> to vector<1x8x8xf32>
    %237 = vector.shape_cast %233 : vector<8x8xf32> to vector<1x8x8xf32>
    %238 = tpu.concatenate %234, %235, %236, %237 in 0 : vector<1x8x8xf32>, vector<1x8x8xf32>, vector<1x8x8xf32>, vector<1x8x8xf32> -> vector<4x8x8xf32>
    %239 = vector.extract_strided_slice %220 {offsets = [0, 64], sizes = [8, 8], strides = [1, 1]} : vector<8x96xf32> to vector<8x8xf32>
    %240 = vector.extract_strided_slice %220 {offsets = [0, 72], sizes = [8, 8], strides = [1, 1]} : vector<8x96xf32> to vector<8x8xf32>
    %241 = vector.extract_strided_slice %220 {offsets = [0, 80], sizes = [8, 8], strides = [1, 1]} : vector<8x96xf32> to vector<8x8xf32>
    %242 = vector.extract_strided_slice %220 {offsets = [0, 88], sizes = [8, 8], strides = [1, 1]} : vector<8x96xf32> to vector<8x8xf32>
    %243 = vector.shape_cast %239 : vector<8x8xf32> to vector<1x8x8xf32>
    %244 = vector.shape_cast %240 : vector<8x8xf32> to vector<1x8x8xf32>
    %245 = vector.shape_cast %241 : vector<8x8xf32> to vector<1x8x8xf32>
    %246 = vector.shape_cast %242 : vector<8x8xf32> to vector<1x8x8xf32>
    %247 = tpu.concatenate %243, %244, %245, %246 in 0 : vector<1x8x8xf32>, vector<1x8x8xf32>, vector<1x8x8xf32>, vector<1x8x8xf32> -> vector<4x8x8xf32>
    %248 = arith.truncf %229 : vector<4x8x8xf32> to vector<4x8x8xbf16>
    %249 = arith.truncf %238 : vector<4x8x8xf32> to vector<4x8x8xbf16>
    "tpu.trace_start"() <{level = 10 : i32, message = "hqd,hkd->hqk"}> : () -> ()
    %cst_94 = arith.constant dense<0.000000e+00> : vector<4x8x8xf32>
    %250 = tpu.matmul %248, %249, %cst_94 {dimension_numbers = #tpu.dot_dimension_numbers<[2], [2], [1], [1], [0, 0, 0, 1, 1, 1], [0], [0]>} : vector<4x8x8xbf16>, vector<4x8x8xbf16>, vector<4x8x8xf32> -> vector<4x8x8xf32>
    "tpu.trace_stop"() : () -> ()
    %cst_95 = arith.constant 0.353553385 : f32
    %251 = vector.broadcast %cst_95 : f32 to vector<4x8x8xf32>
    %252 = arith.mulf %250, %251 : vector<4x8x8xf32>
    %253 = vector.broadcast %57 : vector<1x1x8xf32> to vector<4x8x8xf32>
    %254 = arith.addf %252, %253 : vector<4x8x8xf32>
    %cst_96 = arith.constant dense<0xFF800000> : vector<4x8xf32>
    %255 = vector.multi_reduction <maximumf>, %254, %cst_96 [2] : vector<4x8x8xf32> to vector<4x8xf32>
    %256 = vector.shape_cast %255 : vector<4x8xf32> to vector<4x8x1xf32>
    %257 = vector.broadcast %256 : vector<4x8x1xf32> to vector<4x8x8xf32>
    %258 = arith.subf %254, %257 : vector<4x8x8xf32>
    %259 = math.exp %258 : vector<4x8x8xf32>
    %cst_97 = arith.constant dense<0.000000e+00> : vector<4x8xf32>
    %260 = vector.multi_reduction <add>, %259, %cst_97 [2] : vector<4x8x8xf32> to vector<4x8xf32>
    %261 = vector.shape_cast %260 : vector<4x8xf32> to vector<4x8x1xf32>
    %262 = tpu.reciprocal %261 {approx = true} : vector<4x8x1xf32> -> vector<4x8x1xf32>
    %263 = vector.broadcast %262 : vector<4x8x1xf32> to vector<4x8x8xf32>
    %264 = arith.mulf %259, %263 : vector<4x8x8xf32>
    %265 = arith.truncf %264 : vector<4x8x8xf32> to vector<4x8x8xbf16>
    %266 = arith.truncf %247 : vector<4x8x8xf32> to vector<4x8x8xbf16>
    "tpu.trace_start"() <{level = 10 : i32, message = "hqk,hkd->hqd"}> : () -> ()
    %cst_98 = arith.constant dense<0.000000e+00> : vector<4x8x8xf32>
    %267 = tpu.matmul %265, %266, %cst_98 {dimension_numbers = #tpu.dot_dimension_numbers<[2], [1], [1], [2], [0, 0, 0, 1, 1, 2], [0], [0]>} : vector<4x8x8xbf16>, vector<4x8x8xbf16>, vector<4x8x8xf32> -> vector<4x8x8xf32>
    "tpu.trace_stop"() : () -> ()
    %268 = vector.extract_strided_slice %267 {offsets = [0, 0, 0], sizes = [1, 8, 8], strides = [1, 1, 1]} : vector<4x8x8xf32> to vector<1x8x8xf32>
    %269 = vector.shape_cast %268 : vector<1x8x8xf32> to vector<8x8xf32>
    %270 = vector.extract_strided_slice %267 {offsets = [1, 0, 0], sizes = [1, 8, 8], strides = [1, 1, 1]} : vector<4x8x8xf32> to vector<1x8x8xf32>
    %271 = vector.shape_cast %270 : vector<1x8x8xf32> to vector<8x8xf32>
    %272 = vector.extract_strided_slice %267 {offsets = [2, 0, 0], sizes = [1, 8, 8], strides = [1, 1, 1]} : vector<4x8x8xf32> to vector<1x8x8xf32>
    %273 = vector.shape_cast %272 : vector<1x8x8xf32> to vector<8x8xf32>
    %274 = vector.extract_strided_slice %267 {offsets = [3, 0, 0], sizes = [1, 8, 8], strides = [1, 1, 1]} : vector<4x8x8xf32> to vector<1x8x8xf32>
    %275 = vector.shape_cast %274 : vector<1x8x8xf32> to vector<8x8xf32>
    %276 = tpu.concatenate %269, %271, %273, %275 in 1 : vector<8x8xf32>, vector<8x8xf32>, vector<8x8xf32>, vector<8x8xf32> -> vector<8x32xf32>
    %277 = arith.truncf %276 : vector<8x32xf32> to vector<8x32xbf16>
    %c1_99 = arith.constant 1 : index
    %c0_100 = arith.constant 0 : index
    %c0_101 = arith.constant 0 : index
    %278 = vector.load %arg11[%c1_99, %c0_100, %c0_101] : memref<2x32x32xbf16, #tpu.memory_space<vmem>>, vector<1x32x32xbf16>
    %279 = vector.shape_cast %278 : vector<1x32x32xbf16> to vector<32x32xbf16>
    %cst_102 = arith.constant dense<0.000000e+00> : vector<8x32xf32>
    %280 = tpu.matmul %277, %279, %cst_102 {dimension_numbers = #tpu.dot_dimension_numbers<[1], [0], [0], [1], [0, 0, 1, 1], [], []>} : vector<8x32xbf16>, vector<32x32xbf16>, vector<8x32xf32> -> vector<8x32xf32>
    %c1_103 = arith.constant 1 : index
    %c0_104 = arith.constant 0 : index
    %c0_105 = arith.constant 0 : index
    %281 = vector.load %arg12[%c1_103, %c0_104, %c0_105] : memref<2x1x32xf32, #tpu.memory_space<vmem>>, vector<1x1x32xf32>
    %282 = vector.shape_cast %281 : vector<1x1x32xf32> to vector<1x32xf32>
    %283 = vector.broadcast %282 : vector<1x32xf32> to vector<8x32xf32>
    %284 = arith.addf %280, %283 : vector<8x32xf32>
    %285 = arith.addf %284, %212 : vector<8x32xf32>
    %c1_106 = arith.constant 1 : index
    %c0_107 = arith.constant 0 : index
    %c0_108 = arith.constant 0 : index
    %286 = vector.load %arg13[%c1_106, %c0_107, %c0_108] : memref<2x1x32xf32, #tpu.memory_space<vmem>>, vector<1x1x32xf32>
    %287 = vector.shape_cast %286 : vector<1x1x32xf32> to vector<1x32xf32>
    %c1_109 = arith.constant 1 : index
    %c0_110 = arith.constant 0 : index
    %c0_111 = arith.constant 0 : index
    %288 = vector.load %arg14[%c1_109, %c0_110, %c0_111] : memref<2x1x32xf32, #tpu.memory_space<vmem>>, vector<1x1x32xf32>
    %289 = vector.shape_cast %288 : vector<1x1x32xf32> to vector<1x32xf32>
    %cst_112 = arith.constant dense<0.000000e+00> : vector<8xf32>
    %290 = vector.multi_reduction <add>, %285, %cst_112 [1] : vector<8x32xf32> to vector<8xf32>
    %291 = vector.shape_cast %290 : vector<8xf32> to vector<8x1xf32>
    %cst_113 = arith.constant 3.200000e+01 : f32
    %292 = vector.broadcast %cst_113 : f32 to vector<8x1xf32>
    %293 = arith.divf %291, %292 : vector<8x1xf32>
    %294 = vector.broadcast %293 : vector<8x1xf32> to vector<8x32xf32>
    %295 = arith.subf %285, %294 : vector<8x32xf32>
    %296 = arith.mulf %295, %295 : vector<8x32xf32>
    %cst_114 = arith.constant dense<0.000000e+00> : vector<8xf32>
    %297 = vector.multi_reduction <add>, %296, %cst_114 [1] : vector<8x32xf32> to vector<8xf32>
    %298 = vector.shape_cast %297 : vector<8xf32> to vector<8x1xf32>
    %cst_115 = arith.constant 3.200000e+01 : f32
    %299 = vector.broadcast %cst_115 : f32 to vector<8x1xf32>
    %300 = arith.divf %298, %299 : vector<8x1xf32>
    %301 = vector.broadcast %293 : vector<8x1xf32> to vector<8x32xf32>
    %302 = arith.subf %285, %301 : vector<8x32xf32>
    %cst_116 = arith.constant 9.99999996E-13 : f32
    %303 = vector.broadcast %cst_116 : f32 to vector<8x1xf32>
    %304 = arith.addf %300, %303 : vector<8x1xf32>
    %305 = math.rsqrt %304 : vector<8x1xf32>
    %306 = vector.broadcast %305 : vector<8x1xf32> to vector<8x32xf32>
    %307 = arith.mulf %302, %306 : vector<8x32xf32>
    %308 = vector.broadcast %287 : vector<1x32xf32> to vector<8x32xf32>
    %309 = arith.mulf %307, %308 : vector<8x32xf32>
    %310 = vector.broadcast %289 : vector<1x32xf32> to vector<8x32xf32>
    %311 = arith.addf %309, %310 : vector<8x32xf32>
    %312 = arith.truncf %311 : vector<8x32xf32> to vector<8x32xbf16>
    %c1_117 = arith.constant 1 : index
    %c0_118 = arith.constant 0 : index
    %c0_119 = arith.constant 0 : index
    %313 = vector.load %arg15[%c1_117, %c0_118, %c0_119] : memref<2x32x64xbf16, #tpu.memory_space<vmem>>, vector<1x32x64xbf16>
    %314 = vector.shape_cast %313 : vector<1x32x64xbf16> to vector<32x64xbf16>
    %cst_120 = arith.constant dense<0.000000e+00> : vector<8x64xf32>
    %315 = tpu.matmul %312, %314, %cst_120 {dimension_numbers = #tpu.dot_dimension_numbers<[1], [0], [0], [1], [0, 0, 1, 1], [], []>} : vector<8x32xbf16>, vector<32x64xbf16>, vector<8x64xf32> -> vector<8x64xf32>
    %c1_121 = arith.constant 1 : index
    %c0_122 = arith.constant 0 : index
    %c0_123 = arith.constant 0 : index
    %316 = vector.load %arg16[%c1_121, %c0_122, %c0_123] : memref<2x1x64xf32, #tpu.memory_space<vmem>>, vector<1x1x64xf32>
    %317 = vector.shape_cast %316 : vector<1x1x64xf32> to vector<1x64xf32>
    %318 = vector.broadcast %317 : vector<1x64xf32> to vector<8x64xf32>
    %319 = arith.addf %315, %318 : vector<8x64xf32>
    %320 = arith.mulf %319, %319 : vector<8x64xf32>
    %321 = arith.mulf %319, %320 : vector<8x64xf32>
    %cst_124 = arith.constant 4.471500e-02 : f32
    %322 = vector.broadcast %cst_124 : f32 to vector<8x64xf32>
    %323 = arith.mulf %322, %321 : vector<8x64xf32>
    %324 = arith.addf %319, %323 : vector<8x64xf32>
    %cst_125 = arith.constant 0.797884583 : f32
    %325 = vector.broadcast %cst_125 : f32 to vector<8x64xf32>
    %326 = arith.mulf %325, %324 : vector<8x64xf32>
    %327 = math.tanh %326 : vector<8x64xf32>
    %cst_126 = arith.constant 1.000000e+00 : f32
    %328 = vector.broadcast %cst_126 : f32 to vector<8x64xf32>
    %329 = arith.addf %328, %327 : vector<8x64xf32>
    %cst_127 = arith.constant 5.000000e-01 : f32
    %330 = vector.broadcast %cst_127 : f32 to vector<8x64xf32>
    %331 = arith.mulf %330, %329 : vector<8x64xf32>
    %332 = arith.mulf %319, %331 : vector<8x64xf32>
    %333 = arith.truncf %332 : vector<8x64xf32> to vector<8x64xbf16>
    %c1_128 = arith.constant 1 : index
    %c0_129 = arith.constant 0 : index
    %c0_130 = arith.constant 0 : index
    %334 = vector.load %arg17[%c1_128, %c0_129, %c0_130] : memref<2x64x32xbf16, #tpu.memory_space<vmem>>, vector<1x64x32xbf16>
    %335 = vector.shape_cast %334 : vector<1x64x32xbf16> to vector<64x32xbf16>
    %cst_131 = arith.constant dense<0.000000e+00> : vector<8x32xf32>
    %336 = tpu.matmul %333, %335, %cst_131 {dimension_numbers = #tpu.dot_dimension_numbers<[1], [0], [0], [1], [0, 0, 1, 1], [], []>} : vector<8x64xbf16>, vector<64x32xbf16>, vector<8x32xf32> -> vector<8x32xf32>
    %c1_132 = arith.constant 1 : index
    %c0_133 = arith.constant 0 : index
    %c0_134 = arith.constant 0 : index
    %337 = vector.load %arg18[%c1_132, %c0_133, %c0_134] : memref<2x1x32xf32, #tpu.memory_space<vmem>>, vector<1x1x32xf32>
    %338 = vector.shape_cast %337 : vector<1x1x32xf32> to vector<1x32xf32>
    %339 = vector.broadcast %338 : vector<1x32xf32> to vector<8x32xf32>
    %340 = arith.addf %336, %339 : vector<8x32xf32>
    %341 = arith.addf %340, %311 : vector<8x32xf32>
    %c1_135 = arith.constant 1 : index
    %c0_136 = arith.constant 0 : index
    %c0_137 = arith.constant 0 : index
    %342 = vector.load %arg19[%c1_135, %c0_136, %c0_137] : memref<2x1x32xf32, #tpu.memory_space<vmem>>, vector<1x1x32xf32>
    %343 = vector.shape_cast %342 : vector<1x1x32xf32> to vector<1x32xf32>
    %c1_138 = arith.constant 1 : index
    %c0_139 = arith.constant 0 : index
    %c0_140 = arith.constant 0 : index
    %344 = vector.load %arg20[%c1_138, %c0_139, %c0_140] : memref<2x1x32xf32, #tpu.memory_space<vmem>>, vector<1x1x32xf32>
    %345 = vector.shape_cast %344 : vector<1x1x32xf32> to vector<1x32xf32>
    %cst_141 = arith.constant dense<0.000000e+00> : vector<8xf32>
    %346 = vector.multi_reduction <add>, %341, %cst_141 [1] : vector<8x32xf32> to vector<8xf32>
    %347 = vector.shape_cast %346 : vector<8xf32> to vector<8x1xf32>
    %cst_142 = arith.constant 3.200000e+01 : f32
    %348 = vector.broadcast %cst_142 : f32 to vector<8x1xf32>
    %349 = arith.divf %347, %348 : vector<8x1xf32>
    %350 = vector.broadcast %349 : vector<8x1xf32> to vector<8x32xf32>
    %351 = arith.subf %341, %350 : vector<8x32xf32>
    %352 = arith.mulf %351, %351 : vector<8x32xf32>
    %cst_143 = arith.constant dense<0.000000e+00> : vector<8xf32>
    %353 = vector.multi_reduction <add>, %352, %cst_143 [1] : vector<8x32xf32> to vector<8xf32>
    %354 = vector.shape_cast %353 : vector<8xf32> to vector<8x1xf32>
    %cst_144 = arith.constant 3.200000e+01 : f32
    %355 = vector.broadcast %cst_144 : f32 to vector<8x1xf32>
    %356 = arith.divf %354, %355 : vector<8x1xf32>
    %357 = vector.broadcast %349 : vector<8x1xf32> to vector<8x32xf32>
    %358 = arith.subf %341, %357 : vector<8x32xf32>
    %cst_145 = arith.constant 9.99999996E-13 : f32
    %359 = vector.broadcast %cst_145 : f32 to vector<8x1xf32>
    %360 = arith.addf %356, %359 : vector<8x1xf32>
    %361 = math.rsqrt %360 : vector<8x1xf32>
    %362 = vector.broadcast %361 : vector<8x1xf32> to vector<8x32xf32>
    %363 = arith.mulf %358, %362 : vector<8x32xf32>
    %364 = vector.broadcast %343 : vector<1x32xf32> to vector<8x32xf32>
    %365 = arith.mulf %363, %364 : vector<8x32xf32>
    %366 = vector.broadcast %345 : vector<1x32xf32> to vector<8x32xf32>
    %367 = arith.addf %365, %366 : vector<8x32xf32>
    %cst_146 = arith.constant dense<0.000000e+00> : vector<1x32xf32>
    %368 = tpu.matmul %52, %367, %cst_146 {dimension_numbers = #tpu.dot_dimension_numbers<[1], [0], [0], [1], [0, 0, 1, 1], [], []>} : vector<1x8xf32>, vector<8x32xf32>, vector<1x32xf32> -> vector<1x32xf32>
    %cst_147 = arith.constant dense<0.000000e+00> : vector<1xf32>
    %369 = vector.multi_reduction <add>, %52, %cst_147 [1] : vector<1x8xf32> to vector<1xf32>
    %370 = vector.shape_cast %369 : vector<1xf32> to vector<1x1xf32>
    %cst_148 = arith.constant 9.99999971E-10 : f32
    %371 = vector.broadcast %cst_148 : f32 to vector<1x1xf32>
    %372 = arith.maximumf %370, %371 : vector<1x1xf32>
    %373 = tpu.reciprocal %372 {approx = true} : vector<1x1xf32> -> vector<1x1xf32>
    %374 = vector.broadcast %373 : vector<1x1xf32> to vector<1x32xf32>
    %375 = arith.mulf %368, %374 : vector<1x32xf32>
    %c0_149 = arith.constant 0 : index
    %c0_150 = arith.constant 0 : index
    %c0_151 = arith.constant 0 : index
    %376 = vector.load %arg21[%c0_149, %c0_150, %c0_151] : memref<1x1x32xf32, #tpu.memory_space<vmem>>, vector<1x1x32xf32>
    %377 = vector.shape_cast %376 : vector<1x1x32xf32> to vector<1x32xf32>
    %378 = vector.shape_cast %375 : vector<1x32xf32> to vector<1x1x32xf32>
    tpu.vector_store %arg21[%c0_149, %c0_150, %c0_151], %378 {strides = array<i32>} : memref<1x1x32xf32, #tpu.memory_space<vmem>>, vector<1x1x32xf32>,
    return
  }
  func.func @transform_0(%arg0: i32) -> (i32, i32, i32) {
    %c0_i32 = arith.constant 0 : i32
    %c0_i32_0 = arith.constant 0 : i32
    %c0_i32_1 = arith.constant 0 : i32
    return %arg0, %c0_i32, %c0_i32_0 : i32, i32, i32
  }
  func.func @transform_1(%arg0: i32) -> (i32, i32, i32) {
    %c0_i32 = arith.constant 0 : i32
    %c0_i32_0 = arith.constant 0 : i32
    %c0_i32_1 = arith.constant 0 : i32
    return %arg0, %c0_i32, %c0_i32_0 : i32, i32, i32
  }
  func.func @transform_2(%arg0: i32) -> (i32, i32, i32) {
    %c0_i32 = arith.constant 0 : i32
    %c0_i32_0 = arith.constant 0 : i32
    %c0_i32_1 = arith.constant 0 : i32
    return %arg0, %c0_i32, %c0_i32_0 : i32, i32, i32
  }
  func.func @transform_3(%arg0: i32) -> (i32, i32) {
    %c0_i32 = arith.constant 0 : i32
    %c0_i32_0 = arith.constant 0 : i32
    %c0_i32_1 = arith.constant 0 : i32
    return %c0_i32, %c0_i32_0 : i32, i32
  }
  func.func @transform_4(%arg0: i32) -> (i32, i32) {
    %c0_i32 = arith.constant 0 : i32
    %c0_i32_0 = arith.constant 0 : i32
    %c0_i32_1 = arith.constant 0 : i32
    return %c0_i32, %c0_i32_0 : i32, i32
  }
  func.func @transform_5(%arg0: i32) -> (i32, i32) {
    %c0_i32 = arith.constant 0 : i32
    %c0_i32_0 = arith.constant 0 : i32
    %c0_i32_1 = arith.constant 0 : i32
    return %c0_i32, %c0_i32_0 : i32, i32
  }
  func.func @transform_6(%arg0: i32) -> (i32, i32) {
    %c0_i32 = arith.constant 0 : i32
    %c0_i32_0 = arith.constant 0 : i32
    %c0_i32_1 = arith.constant 0 : i32
    return %c0_i32, %c0_i32_0 : i32, i32
  }
  func.func @transform_7(%arg0: i32) -> (i32, i32) {
    %c0_i32 = arith.constant 0 : i32
    %c0_i32_0 = arith.constant 0 : i32
    %c0_i32_1 = arith.constant 0 : i32
    return %c0_i32, %c0_i32_0 : i32, i32
  }
  func.func @transform_8(%arg0: i32) -> (i32, i32, i32) {
    %c0_i32 = arith.constant 0 : i32
    %c0_i32_0 = arith.constant 0 : i32
    %c0_i32_1 = arith.constant 0 : i32
    %c0_i32_2 = arith.constant 0 : i32
    return %c0_i32, %c0_i32_0, %c0_i32_1 : i32, i32, i32
  }
  func.func @transform_9(%arg0: i32) -> (i32, i32, i32) {
    %c0_i32 = arith.constant 0 : i32
    %c0_i32_0 = arith.constant 0 : i32
    %c0_i32_1 = arith.constant 0 : i32
    %c0_i32_2 = arith.constant 0 : i32
    return %c0_i32, %c0_i32_0, %c0_i32_1 : i32, i32, i32
  }
  func.func @transform_10(%arg0: i32) -> (i32, i32, i32) {
    %c0_i32 = arith.constant 0 : i32
    %c0_i32_0 = arith.constant 0 : i32
    %c0_i32_1 = arith.constant 0 : i32
    %c0_i32_2 = arith.constant 0 : i32
    return %c0_i32, %c0_i32_0, %c0_i32_1 : i32, i32, i32
  }
  func.func @transform_11(%arg0: i32) -> (i32, i32, i32) {
    %c0_i32 = arith.constant 0 : i32
    %c0_i32_0 = arith.constant 0 : i32
    %c0_i32_1 = arith.constant 0 : i32
    %c0_i32_2 = arith.constant 0 : i32
    return %c0_i32, %c0_i32_0, %c0_i32_1 : i32, i32, i32
  }
  func.func @transform_12(%arg0: i32) -> (i32, i32, i32) {
    %c0_i32 = arith.constant 0 : i32
    %c0_i32_0 = arith.constant 0 : i32
    %c0_i32_1 = arith.constant 0 : i32
    %c0_i32_2 = arith.constant 0 : i32
    return %c0_i32, %c0_i32_0, %c0_i32_1 : i32, i32, i32
  }
  func.func @transform_13(%arg0: i32) -> (i32, i32, i32) {
    %c0_i32 = arith.constant 0 : i32
    %c0_i32_0 = arith.constant 0 : i32
    %c0_i32_1 = arith.constant 0 : i32
    %c0_i32_2 = arith.constant 0 : i32
    return %c0_i32, %c0_i32_0, %c0_i32_1 : i32, i32, i32
  }
  func.func @transform_14(%arg0: i32) -> (i32, i32, i32) {
    %c0_i32 = arith.constant 0 : i32
    %c0_i32_0 = arith.constant 0 : i32
    %c0_i32_1 = arith.constant 0 : i32
    %c0_i32_2 = arith.constant 0 : i32
    return %c0_i32, %c0_i32_0, %c0_i32_1 : i32, i32, i32
  }
  func.func @transform_15(%arg0: i32) -> (i32, i32, i32) {
    %c0_i32 = arith.constant 0 : i32
    %c0_i32_0 = arith.constant 0 : i32
    %c0_i32_1 = arith.constant 0 : i32
    %c0_i32_2 = arith.constant 0 : i32
    return %c0_i32, %c0_i32_0, %c0_i32_1 : i32, i32, i32
  }
  func.func @transform_16(%arg0: i32) -> (i32, i32, i32) {
    %c0_i32 = arith.constant 0 : i32
    %c0_i32_0 = arith.constant 0 : i32
    %c0_i32_1 = arith.constant 0 : i32
    %c0_i32_2 = arith.constant 0 : i32
    return %c0_i32, %c0_i32_0, %c0_i32_1 : i32, i32, i32
  }
  func.func @transform_17(%arg0: i32) -> (i32, i32, i32) {
    %c0_i32 = arith.constant 0 : i32
    %c0_i32_0 = arith.constant 0 : i32
    %c0_i32_1 = arith.constant 0 : i32
    %c0_i32_2 = arith.constant 0 : i32
    return %c0_i32, %c0_i32_0, %c0_i32_1 : i32, i32, i32
  }
  func.func @transform_18(%arg0: i32) -> (i32, i32, i32) {
    %c0_i32 = arith.constant 0 : i32
    %c0_i32_0 = arith.constant 0 : i32
    %c0_i32_1 = arith.constant 0 : i32
    %c0_i32_2 = arith.constant 0 : i32
    return %c0_i32, %c0_i32_0, %c0_i32_1 : i32, i32, i32
  }
  func.func @transform_19(%arg0: i32) -> (i32, i32, i32) {
    %c0_i32 = arith.constant 0 : i32
    %c0_i32_0 = arith.constant 0 : i32
    %c0_i32_1 = arith.constant 0 : i32
    %c0_i32_2 = arith.constant 0 : i32
    return %c0_i32, %c0_i32_0, %c0_i32_1 : i32, i32, i32
  }
  func.func @transform_20(%arg0: i32) -> (i32, i32, i32) {
    %c0_i32 = arith.constant 0 : i32
    %c0_i32_0 = arith.constant 0 : i32
    %c0_i32_1 = arith.constant 0 : i32
    return %arg0, %c0_i32, %c0_i32_0 : i32, i32, i32
  }
}

</mosaic_0001>

<llo_original>
// kernel: encode_and_pool.1
$region0: #{encode_and_pool.1}
  #allocation0 [shape = 'u32[]', space=smem, size = 0x4, offset = 0x4, fixed_abs, tag = 'smem constant byte address 0x4 - core index']
  #allocation1 [shape = 'u32[144,128]{1,0:T(1,128)}', space=vmem, size = 0x12000, scoped, tag = 'internal scratch']
  %s0 = inlined_call_operand.vmem [shape: s32[2,8,1], index: 0, kind: input, shape index: {}]
  %s1 = inlined_call_operand.vmem [shape: s32[2,8,1], index: 1, kind: input, shape index: {}]
  %s2 = inlined_call_operand.vmem [shape: f32[2,1,8], index: 2, kind: input, shape index: {}]
  %s3 = inlined_call_operand.vmem [shape: bf16[128,32], index: 3, kind: input, shape index: {}]
  %s4 = inlined_call_operand.vmem [shape: f32[8,32], index: 4, kind: input, shape index: {}]
  %s5 = inlined_call_operand.vmem [shape: f32[2,32], index: 5, kind: input, shape index: {}]
  %s6 = inlined_call_operand.vmem [shape: f32[1,32], index: 6, kind: input, shape index: {}]
  %s7 = inlined_call_operand.vmem [shape: f32[1,32], index: 7, kind: input, shape index: {}]
  %s8 = inlined_call_operand.vmem [shape: bf16[2,32,96], index: 8, kind: input, shape index: {}]
  %s9 = inlined_call_operand.vmem [shape: f32[2,1,96], index: 9, kind: input, shape index: {}]
  %s10 = inlined_call_operand.vmem [shape: bf16[2,32,32], index: 10, kind: input, shape index: {}]
  %s11 = inlined_call_operand.vmem [shape: f32[2,1,32], index: 11, kind: input, shape index: {}]
  %s12 = inlined_call_operand.vmem [shape: f32[2,1,32], index: 12, kind: input, shape index: {}]
  %s13 = inlined_call_operand.vmem [shape: f32[2,1,32], index: 13, kind: input, shape index: {}]
  %s14 = inlined_call_operand.vmem [shape: bf16[2,32,64], index: 14, kind: input, shape index: {}]
  %s15 = inlined_call_operand.vmem [shape: f32[2,1,64], index: 15, kind: input, shape index: {}]
  %s16 = inlined_call_operand.vmem [shape: bf16[2,64,32], index: 16, kind: input, shape index: {}]
  %s17 = inlined_call_operand.vmem [shape: f32[2,1,32], index: 17, kind: input, shape index: {}]
  %s18 = inlined_call_operand.vmem [shape: f32[2,1,32], index: 18, kind: input, shape index: {}]
  %s19 = inlined_call_operand.vmem [shape: f32[2,1,32], index: 19, kind: input, shape index: {}]
  %s20 = inlined_call_operand.hbm [shape: f32[2,1,32], index: 20, kind: output, shape index: {}]
  %s21 = sld [smem:[#allocation0]]
  $region113: #{encode_and_pool.1} parent=0
    _
  %s23 = ssub.s32 1, %s21
  %s24 = scalar_select 0, %s23, %s21
  $region1: #{encode_and_pool.1} parent=0
    #allocation2 [shape = 'u8[1024]{0}', space=vmem, size = 0x400, scoped, tag = 'output window, operand 0']
    #allocation3 [shape = 's32[2]{0}', space=sflag, size = 0x8, scoped, tag = 'scoped memory for encode_and_pool.1']
    %25 = vsyncpa [#allocation3], 0
    %s26 = scalar_lea.sflag [#allocation3], 1
    %27 = vsyncpa %s26, 0
    loop: start=0, step=1, limit=4
    $region2: #{encode_and_pool.1} parent=1 // loop_pre_header
      _
    $region3: #{encode_and_pool.1} parent=1 // loop_header
      %s29 = sphi 0, %s33
      %p30 = scmp.ge.s32.totalorder %s29, 4
      %s39 = sphi 0, %s41
      %s42 = sphi 0, %s39
      %s43 = sphi 0, %s42
      %s59 = sphi 0, %s43
      %s65 = sphi 0, %s67
      %s68 = sphi 0, %s65
      %s69 = sphi 0, %s68
      %s85 = sphi 0, %s69
      %s91 = sphi 0, %s93
      %s94 = sphi 0, %s91
      %s95 = sphi 0, %s94
      %s111 = sphi 0, %s95
      %s115 = sphi 0, %s115
      %s117 = sphi 0, %s115
      %s118 = sphi 0, %s117
      %s132 = sphi 0, %s118
      %s136 = sphi 0, %s136
      %s138 = sphi 0, %s136
      %s139 = sphi 0, %s138
      %s153 = sphi 0, %s139
      %s157 = sphi 0, %s157
      %s159 = sphi 0, %s157
      %s160 = sphi 0, %s159
      %s174 = sphi 0, %s160
      %s178 = sphi 0, %s178
      %s180 = sphi 0, %s178
      %s181 = sphi 0, %s180
      %s195 = sphi 0, %s181
      %s199 = sphi 0, %s199
      %s201 = sphi 0, %s199
      %s202 = sphi 0, %s201
      %s216 = sphi 0, %s202
      %s220 = sphi 0, %s220
      %s222 = sphi 0, %s220
      %s223 = sphi 0, %s222
      %s237 = sphi 0, %s223
      %s241 = sphi 0, %s241
      %s243 = sphi 0, %s241
      %s244 = sphi 0, %s243
      %s258 = sphi 0, %s244
      %s262 = sphi 0, %s262
      %s264 = sphi 0, %s262
      %s265 = sphi 0, %s264
      %s279 = sphi 0, %s265
      %s283 = sphi 0, %s283
      %s285 = sphi 0, %s283
      %s286 = sphi 0, %s285
      %s300 = sphi 0, %s286
      %s304 = sphi 0, %s304
      %s306 = sphi 0, %s304
      %s307 = sphi 0, %s306
      %s321 = sphi 0, %s307
      %s325 = sphi 0, %s325
      %s327 = sphi 0, %s325
      %s328 = sphi 0, %s327
      %s342 = sphi 0, %s328
      %s346 = sphi 0, %s346
      %s348 = sphi 0, %s346
      %s349 = sphi 0, %s348
      %s363 = sphi 0, %s349
      %s367 = sphi 0, %s367
      %s369 = sphi 0, %s367
      %s370 = sphi 0, %s369
      %s384 = sphi 0, %s370
      %s388 = sphi 0, %s388
      %s390 = sphi 0, %s388
      %s391 = sphi 0, %s390
      %s405 = sphi 0, %s391
      %s409 = sphi 0, %s409
      %s411 = sphi 0, %s409
      %s412 = sphi 0, %s411
      %s426 = sphi 0, %s412
      %s430 = sphi 0, %s430
      %s432 = sphi 0, %s430
      %s433 = sphi 0, %s432
      %s447 = sphi 0, %s433
      %s451 = sphi 0, %s451
      %s453 = sphi 0, %s451
      %s454 = sphi 0, %s453
      %s468 = sphi 0, %s454
      %s474 = sphi 0, %s476
      %s477 = sphi 0, %s474
      %s478 = sphi 0, %s477
      %s494 = sphi 0, %s478
    $region4: #{encode_and_pool.1} parent=1 // loop_header_branch
      %32 = sbr.rel (%p30) target = $region8
    $region5: #{encode_and_pool.1} parent=1 // loop_body
      %s34 = ssub.s32 %s29, 1
      %s35 = ssub.s32 %s29, 2
      %s36 = sadd.s32 %s29, 1
      %s37 = ssub.s32 %s29, %s36
      %p38 = scmp.eq.s32.totalorder %s37, 0
      %s40 = sadd.s32 %s39, 1
      %s41 = scalar_select %p38, %s39, %s40
      %p44 = pneg %p38
      %p45 = scmp.eq.s32.totalorder %s29, 1
      %p46 = por %p44, %p45
      %p47 = scmp.ne.s32.totalorder %s39, %s42
      %p48 = scmp.eq.s32.totalorder %s29, 0
      %p49 = por %p47, %p48
      %p50 = scmp.ne.s32.totalorder %s39, %s42
      %p51 = scmp.eq.s32.totalorder %s34, 1
      %p52 = por %p50, %p51
      %p53 = scmp.ne.s32.totalorder %s42, %s43
      %p54 = scmp.eq.s32.totalorder %s34, 0
      %p55 = por %p53, %p54
      %p56 = scmp.ne.s32.totalorder %s42, %s43
      %p57 = scmp.eq.s32.totalorder %s35, 1
      %p58 = por %p56, %p57
      %p60 = scmp.ne.s32.totalorder %s43, %s59
      %p61 = scmp.eq.s32.totalorder %s35, 0
      %p62 = por %p60, %p61
      %s63 = ssub.s32 %s29, %s36
      %p64 = scmp.eq.s32.totalorder %s63, 0
      %s66 = sadd.s32 %s65, 1
      %s67 = scalar_select %p64, %s65, %s66
      %p70 = pneg %p64
      %p71 = scmp.eq.s32.totalorder %s29, 1
      %p72 = por %p70, %p71
      %p73 = scmp.ne.s32.totalorder %s65, %s68
      %p74 = scmp.eq.s32.totalorder %s29, 0
      %p75 = por %p73, %p74
      %p76 = scmp.ne.s32.totalorder %s65, %s68
      %p77 = scmp.eq.s32.totalorder %s34, 1
      %p78 = por %p76, %p77
      %p79 = scmp.ne.s32.totalorder %s68, %s69
      %p80 = scmp.eq.s32.totalorder %s34, 0
      %p81 = por %p79, %p80
      %p82 = scmp.ne.s32.totalorder %s68, %s69
      %p83 = scmp.eq.s32.totalorder %s35, 1
      %p84 = por %p82, %p83
      %p86 = scmp.ne.s32.totalorder %s69, %s85
      %p87 = scmp.eq.s32.totalorder %s35, 0
      %p88 = por %p86, %p87
      %s89 = ssub.s32 %s29, %s36
      %p90 = scmp.eq.s32.totalorder %s89, 0
      %s92 = sadd.s32 %s91, 1
      %s93 = scalar_select %p90, %s91, %s92
      %p96 = pneg %p90
      %p97 = scmp.eq.s32.totalorder %s29, 1
      %p98 = por %p96, %p97
      %p99 = scmp.ne.s32.totalorder %s91, %s94
      %p100 = scmp.eq.s32.totalorder %s29, 0
      %p101 = por %p99, %p100
      %p102 = scmp.ne.s32.totalorder %s91, %s94
      %p103 = scmp.eq.s32.totalorder %s34, 1
      %p104 = por %p102, %p103
      %p105 = scmp.ne.s32.totalorder %s94, %s95
      %p106 = scmp.eq.s32.totalorder %s34, 0
      %p107 = por %p105, %p106
      %p108 = scmp.ne.s32.totalorder %s94, %s95
      %p109 = scmp.eq.s32.totalorder %s35, 1
      %p110 = por %p108, %p109
      %p112 = scmp.ne.s32.totalorder %s95, %s111
      %p113 = scmp.eq.s32.totalorder %s35, 0
      %p114 = por %p112, %p113
      %s116 = sadd.s32 %s115, 1
      %p119 = scmp.eq.s32.totalorder %s29, 1
      %p120 = scmp.ne.s32.totalorder %s115, %s117
      %p121 = scmp.eq.s32.totalorder %s29, 0
      %p122 = por %p120, %p121
      %p123 = scmp.ne.s32.totalorder %s115, %s117
      %p124 = scmp.eq.s32.totalorder %s34, 1
      %p125 = por %p123, %p124
      %p126 = scmp.ne.s32.totalorder %s117, %s118
      %p127 = scmp.eq.s32.totalorder %s34, 0
      %p128 = por %p126, %p127
      %p129 = scmp.ne.s32.totalorder %s117, %s118
      %p130 = scmp.eq.s32.totalorder %s35, 1
      %p131 = por %p129, %p130
      %p133 = scmp.ne.s32.totalorder %s118, %s132
      %p134 = scmp.eq.s32.totalorder %s35, 0
      %p135 = por %p133, %p134
      %s137 = sadd.s32 %s136, 1
      %p140 = scmp.eq.s32.totalorder %s29, 1
      %p141 = scmp.ne.s32.totalorder %s136, %s138
      %p142 = scmp.eq.s32.totalorder %s29, 0
      %p143 = por %p141, %p142
      %p144 = scmp.ne.s32.totalorder %s136, %s138
      %p145 = scmp.eq.s32.totalorder %s34, 1
      %p146 = por %p144, %p145
      %p147 = scmp.ne.s32.totalorder %s138, %s139
      %p148 = scmp.eq.s32.totalorder %s34, 0
      %p149 = por %p147, %p148
      %p150 = scmp.ne.s32.totalorder %s138, %s139
      %p151 = scmp.eq.s32.totalorder %s35, 1
      %p152 = por %p150, %p151
      %p154 = scmp.ne.s32.totalorder %s139, %s153
      %p155 = scmp.eq.s32.totalorder %s35, 0
      %p156 = por %p154, %p155
      %s158 = sadd.s32 %s157, 1
      %p161 = scmp.eq.s32.totalorder %s29, 1
      %p162 = scmp.ne.s32.totalorder %s157, %s159
      %p163 = scmp.eq.s32.totalorder %s29, 0
      %p164 = por %p162, %p163
      %p165 = scmp.ne.s32.totalorder %s157, %s159
      %p166 = scmp.eq.s32.totalorder %s34, 1
      %p167 = por %p165, %p166
      %p168 = scmp.ne.s32.totalorder %s159, %s160
      %p169 = scmp.eq.s32.totalorder %s34, 0
      %p170 = por %p168, %p169
      %p171 = scmp.ne.s32.totalorder %s159, %s160
      %p172 = scmp.eq.s32.totalorder %s35, 1
      %p173 = por %p171, %p172
      %p175 = scmp.ne.s32.totalorder %s160, %s174
      %p176 = scmp.eq.s32.totalorder %s35, 0
      %p177 = por %p175, %p176
      %s179 = sadd.s32 %s178, 1
      %p182 = scmp.eq.s32.totalorder %s29, 1
      %p183 = scmp.ne.s32.totalorder %s178, %s180
      %p184 = scmp.eq.s32.totalorder %s29, 0
      %p185 = por %p183, %p184
      %p186 = scmp.ne.s32.totalorder %s178, %s180
      %p187 = scmp.eq.s32.totalorder %s34, 1
      %p188 = por %p186, %p187
      %p189 = scmp.ne.s32.totalorder %s180, %s181
      %p190 = scmp.eq.s32.totalorder %s34, 0
      %p191 = por %p189, %p190
      %p192 = scmp.ne.s32.totalorder %s180, %s181
      %p193 = scmp.eq.s32.totalorder %s35, 1
      %p194 = por %p192, %p193
      %p196 = scmp.ne.s32.totalorder %s181, %s195
      %p197 = scmp.eq.s32.totalorder %s35, 0
      %p198 = por %p196, %p197
      %s200 = sadd.s32 %s199, 1
      %p203 = scmp.eq.s32.totalorder %s29, 1
      %p204 = scmp.ne.s32.totalorder %s199, %s201
      %p205 = scmp.eq.s32.totalorder %s29, 0
      %p206 = por %p204, %p205
      %p207 = scmp.ne.s32.totalorder %s199, %s201
      %p208 = scmp.eq.s32.totalorder %s34, 1
      %p209 = por %p207, %p208
      %p210 = scmp.ne.s32.totalorder %s201, %s202
      %p211 = scmp.eq.s32.totalorder %s34, 0
      %p212 = por %p210, %p211
      %p213 = scmp.ne.s32.totalorder %s201, %s202
      %p214 = scmp.eq.s32.totalorder %s35, 1
      %p215 = por %p213, %p214
      %p217 = scmp.ne.s32.totalorder %s202, %s216
      %p218 = scmp.eq.s32.totalorder %s35, 0
      %p219 = por %p217, %p218
      %s221 = sadd.s32 %s220, 1
      %p224 = scmp.eq.s32.totalorder %s29, 1
      %p225 = scmp.ne.s32.totalorder %s220, %s222
      %p226 = scmp.eq.s32.totalorder %s29, 0
      %p227 = por %p225, %p226
      %p228 = scmp.ne.s32.totalorder %s220, %s222
      %p229 = scmp.eq.s32.totalorder %s34, 1
      %p230 = por %p228, %p229
      %p231 = scmp.ne.s32.totalorder %s222, %s223
      %p232 = scmp.eq.s32.totalorder %s34, 0
      %p233 = por %p231, %p232
      %p234 = scmp.ne.s32.totalorder %s222, %s223
      %p235 = scmp.eq.s32.totalorder %s35, 1
      %p236 = por %p234, %p235
      %p238 = scmp.ne.s32.totalorder %s223, %s237
      %p239 = scmp.eq.s32.totalorder %s35, 0
      %p240 = por %p238, %p239
      %s242 = sadd.s32 %s241, 1
      %p245 = scmp.eq.s32.totalorder %s29, 1
      %p246 = scmp.ne.s32.totalorder %s241, %s243
      %p247 = scmp.eq.s32.totalorder %s29, 0
      %p248 = por %p246, %p247
      %p249 = scmp.ne.s32.totalorder %s241, %s243
      %p250 = scmp.eq.s32.totalorder %s34, 1
      %p251 = por %p249, %p250
      %p252 = scmp.ne.s32.totalorder %s243, %s244
      %p253 = scmp.eq.s32.totalorder %s34, 0
      %p254 = por %p252, %p253
      %p255 = scmp.ne.s32.totalorder %s243, %s244
      %p256 = scmp.eq.s32.totalorder %s35, 1
      %p257 = por %p255, %p256
      %p259 = scmp.ne.s32.totalorder %s244, %s258
      %p260 = scmp.eq.s32.totalorder %s35, 0
      %p261 = por %p259, %p260
      %s263 = sadd.s32 %s262, 1
      %p266 = scmp.eq.s32.totalorder %s29, 1
      %p267 = scmp.ne.s32.totalorder %s262, %s264
      %p268 = scmp.eq.s32.totalorder %s29, 0
      %p269 = por %p267, %p268
      %p270 = scmp.ne.s32.totalorder %s262, %s264
      %p271 = scmp.eq.s32.totalorder %s34, 1
      %p272 = por %p270, %p271
      %p273 = scmp.ne.s32.totalorder %s264, %s265
      %p274 = scmp.eq.s32.totalorder %s34, 0
      %p275 = por %p273, %p274
      %p276 = scmp.ne.s32.totalorder %s264, %s265
      %p277 = scmp.eq.s32.totalorder %s35, 1
      %p278 = por %p276, %p277
      %p280 = scmp.ne.s32.totalorder %s265, %s279
      %p281 = scmp.eq.s32.totalorder %s35, 0
      %p282 = por %p280, %p281
      %s284 = sadd.s32 %s283, 1
      %p287 = scmp.eq.s32.totalorder %s29, 1
      %p288 = scmp.ne.s32.totalorder %s283, %s285
      %p289 = scmp.eq.s32.totalorder %s29, 0
      %p290 = por %p288, %p289
      %p291 = scmp.ne.s32.totalorder %s283, %s285
      %p292 = scmp.eq.s32.totalorder %s34, 1
      %p293 = por %p291, %p292
      %p294 = scmp.ne.s32.totalorder %s285, %s286
      %p295 = scmp.eq.s32.totalorder %s34, 0
      %p296 = por %p294, %p295
      %p297 = scmp.ne.s32.totalorder %s285, %s286
      %p298 = scmp.eq.s32.totalorder %s35, 1
      %p299 = por %p297, %p298
      %p301 = scmp.ne.s32.totalorder %s286, %s300
      %p302 = scmp.eq.s32.totalorder %s35, 0
      %p303 = por %p301, %p302
      %s305 = sadd.s32 %s304, 1
      %p308 = scmp.eq.s32.totalorder %s29, 1
      %p309 = scmp.ne.s32.totalorder %s304, %s306
      %p310 = scmp.eq.s32.totalorder %s29, 0
      %p311 = por %p309, %p310
      %p312 = scmp.ne.s32.totalorder %s304, %s306
      %p313 = scmp.eq.s32.totalorder %s34, 1
      %p314 = por %p312, %p313
      %p315 = scmp.ne.s32.totalorder %s306, %s307
      %p316 = scmp.eq.s32.totalorder %s34, 0
      %p317 = por %p315, %p316
      %p318 = scmp.ne.s32.totalorder %s306, %s307
      %p319 = scmp.eq.s32.totalorder %s35, 1
      %p320 = por %p318, %p319
      %p322 = scmp.ne.s32.totalorder %s307, %s321
      %p323 = scmp.eq.s32.totalorder %s35, 0
      %p324 = por %p322, %p323
      %s326 = sadd.s32 %s325, 1
      %p329 = scmp.eq.s32.totalorder %s29, 1
      %p330 = scmp.ne.s32.totalorder %s325, %s327
      %p331 = scmp.eq.s32.totalorder %s29, 0
      %p332 = por %p330, %p331
      %p333 = scmp.ne.s32.totalorder %s325, %s327
      %p334 = scmp.eq.s32.totalorder %s34, 1
      %p335 = por %p333, %p334
      %p336 = scmp.ne.s32.totalorder %s327, %s328
      %p337 = scmp.eq.s32.totalorder %s34, 0
      %p338 = por %p336, %p337
      %p339 = scmp.ne.s32.totalorder %s327, %s328
      %p340 = scmp.eq.s32.totalorder %s35, 1
      %p341 = por %p339, %p340
      %p343 = scmp.ne.s32.totalorder %s328, %s342
      %p344 = scmp.eq.s32.totalorder %s35, 0
      %p345 = por %p343, %p344
      %s347 = sadd.s32 %s346, 1
      %p350 = scmp.eq.s32.totalorder %s29, 1
      %p351 = scmp.ne.s32.totalorder %s346, %s348
      %p352 = scmp.eq.s32.totalorder %s29, 0
      %p353 = por %p351, %p352
      %p354 = scmp.ne.s32.totalorder %s346, %s348
      %p355 = scmp.eq.s32.totalorder %s34, 1
      %p356 = por %p354, %p355
      %p357 = scmp.ne.s32.totalorder %s348, %s349
      %p358 = scmp.eq.s32.totalorder %s34, 0
      %p359 = por %p357, %p358
      %p360 = scmp.ne.s32.totalorder %s348, %s349
      %p361 = scmp.eq.s32.totalorder %s35, 1
      %p362 = por %p360, %p361
      %p364 = scmp.ne.s32.totalorder %s349, %s363
      %p365 = scmp.eq.s32.totalorder %s35, 0
      %p366 = por %p364, %p365
      %s368 = sadd.s32 %s367, 1
      %p371 = scmp.eq.s32.totalorder %s29, 1
      %p372 = scmp.ne.s32.totalorder %s367, %s369
      %p373 = scmp.eq.s32.totalorder %s29, 0
      %p374 = por %p372, %p373
      %p375 = scmp.ne.s32.totalorder %s367, %s369
      %p376 = scmp.eq.s32.totalorder %s34, 1
      %p377 = por %p375, %p376
      %p378 = scmp.ne.s32.totalorder %s369, %s370
      %p379 = scmp.eq.s32.totalorder %s34, 0
      %p380 = por %p378, %p379
      %p381 = scmp.ne.s32.totalorder %s369, %s370
      %p382 = scmp.eq.s32.totalorder %s35, 1
      %p383 = por %p381, %p382
      %p385 = scmp.ne.s32.totalorder %s370, %s384
      %p386 = scmp.eq.s32.totalorder %s35, 0
      %p387 = por %p385, %p386
      %s389 = sadd.s32 %s388, 1
      %p392 = scmp.eq.s32.totalorder %s29, 1
      %p393 = scmp.ne.s32.totalorder %s388, %s390
      %p394 = scmp.eq.s32.totalorder %s29, 0
      %p395 = por %p393, %p394
      %p396 = scmp.ne.s32.totalorder %s388, %s390
      %p397 = scmp.eq.s32.totalorder %s34, 1
      %p398 = por %p396, %p397
      %p399 = scmp.ne.s32.totalorder %s390, %s391
      %p400 = scmp.eq.s32.totalorder %s34, 0
      %p401 = por %p399, %p400
      %p402 = scmp.ne.s32.totalorder %s390, %s391
      %p403 = scmp.eq.s32.totalorder %s35, 1
      %p404 = por %p402, %p403
      %p406 = scmp.ne.s32.totalorder %s391, %s405
      %p407 = scmp.eq.s32.totalorder %s35, 0
      %p408 = por %p406, %p407
      %s410 = sadd.s32 %s409, 1
      %p413 = scmp.eq.s32.totalorder %s29, 1
      %p414 = scmp.ne.s32.totalorder %s409, %s411
      %p415 = scmp.eq.s32.totalorder %s29, 0
      %p416 = por %p414, %p415
      %p417 = scmp.ne.s32.totalorder %s409, %s411
      %p418 = scmp.eq.s32.totalorder %s34, 1
      %p419 = por %p417, %p418
      %p420 = scmp.ne.s32.totalorder %s411, %s412
      %p421 = scmp.eq.s32.totalorder %s34, 0
      %p422 = por %p420, %p421
      %p423 = scmp.ne.s32.totalorder %s411, %s412
      %p424 = scmp.eq.s32.totalorder %s35, 1
      %p425 = por %p423, %p424
      %p427 = scmp.ne.s32.totalorder %s412, %s426
      %p428 = scmp.eq.s32.totalorder %s35, 0
      %p429 = por %p427, %p428
      %s431 = sadd.s32 %s430, 1
      %p434 = scmp.eq.s32.totalorder %s29, 1
      %p435 = scmp.ne.s32.totalorder %s430, %s432
      %p436 = scmp.eq.s32.totalorder %s29, 0
      %p437 = por %p435, %p436
      %p438 = scmp.ne.s32.totalorder %s430, %s432
      %p439 = scmp.eq.s32.totalorder %s34, 1
      %p440 = por %p438, %p439
      %p441 = scmp.ne.s32.totalorder %s432, %s433
      %p442 = scmp.eq.s32.totalorder %s34, 0
      %p443 = por %p441, %p442
      %p444 = scmp.ne.s32.totalorder %s432, %s433
      %p445 = scmp.eq.s32.totalorder %s35, 1
      %p446 = por %p444, %p445
      %p448 = scmp.ne.s32.totalorder %s433, %s447
      %p449 = scmp.eq.s32.totalorder %s35, 0
      %p450 = por %p448, %p449
      %s452 = sadd.s32 %s451, 1
      %p455 = scmp.eq.s32.totalorder %s29, 1
      %p456 = scmp.ne.s32.totalorder %s451, %s453
      %p457 = scmp.eq.s32.totalorder %s29, 0
      %p458 = por %p456, %p457
      %p459 = scmp.ne.s32.totalorder %s451, %s453
      %p460 = scmp.eq.s32.totalorder %s34, 1
      %p461 = por %p459, %p460
      %p462 = scmp.ne.s32.totalorder %s453, %s454
      %p463 = scmp.eq.s32.totalorder %s34, 0
      %p464 = por %p462, %p463
      %p465 = scmp.ne.s32.totalorder %s453, %s454
      %p466 = scmp.eq.s32.totalorder %s35, 1
      %p467 = por %p465, %p466
      %p469 = scmp.ne.s32.totalorder %s454, %s468
      %p470 = scmp.eq.s32.totalorder %s35, 0
      %p471 = por %p469, %p470
      %s472 = ssub.s32 %s29, %s36
      %p473 = scmp.eq.s32.totalorder %s472, 0
      %s475 = sadd.s32 %s474, 1
      %s476 = scalar_select %p473, %s474, %s475
      %p479 = pneg %p473
      %p480 = scmp.eq.s32.totalorder %s29, 1
      %p481 = por %p479, %p480
      %p482 = scmp.ne.s32.totalorder %s474, %s477
      %p483 = scmp.eq.s32.totalorder %s29, 0
      %p484 = por %p482, %p483
      %p485 = scmp.ne.s32.totalorder %s474, %s477
      %p486 = scmp.eq.s32.totalorder %s34, 1
      %p487 = por %p485, %p486
      %p488 = scmp.ne.s32.totalorder %s477, %s478
      %p489 = scmp.eq.s32.totalorder %s34, 0
      %p490 = por %p488, %p489
      %p491 = scmp.ne.s32.totalorder %s477, %s478
      %p492 = scmp.eq.s32.totalorder %s35, 1
      %p493 = por %p491, %p492
      %p495 = scmp.ne.s32.totalorder %s478, %s494
      %p496 = scmp.eq.s32.totalorder %s35, 0
      %p497 = por %p495, %p496
      %p498 = scmp.le.s32.totalorder 1, %s29
      %p499 = scmp.lt.s32.totalorder %s29, 3
      %p500 = pnand %p498, %p499
      %p501 = pneg %p500
      // Predicated region
      $region9: #{encode_and_pool.1} parent=5 // pred_check
        _
      $region10: #{encode_and_pool.1} parent=5 // pred_check_branch
        %503 = sbr.rel (%p500) target = $region12
      $region11: #{encode_and_pool.1} parent=5 // pred_region
        %s504 = ssub.s32 %s29, 1
        // Predicated region
        $region13: #{encode_and_pool.1} parent=11 // pred_check
          %p505 = pneg %p128
        $region14: #{encode_and_pool.1} parent=11 // pred_check_branch
          %507 = sbr.rel (%p505) target = $region16
        $region15: #{encode_and_pool.1} parent=11 // pred_region
          _
        $region16: #{encode_and_pool.1} parent=11 // pred_fallthru
          _
        // Predicated region
        $region17: #{encode_and_pool.1} parent=11 // pred_check
          %p508 = pneg %p149
        $region18: #{encode_and_pool.1} parent=11 // pred_check_branch
          %510 = sbr.rel (%p508) target = $region20
        $region19: #{encode_and_pool.1} parent=11 // pred_region
          _
        $region20: #{encode_and_pool.1} parent=11 // pred_fallthru
          _
        // Predicated region
        $region21: #{encode_and_pool.1} parent=11 // pred_check
          %p511 = pneg %p170
        $region22: #{encode_and_pool.1} parent=11 // pred_check_branch
          %513 = sbr.rel (%p511) target = $region24
        $region23: #{encode_and_pool.1} parent=11 // pred_region
          _
        $region24: #{encode_and_pool.1} parent=11 // pred_fallthru
          _
        // Predicated region
        $region25: #{encode_and_pool.1} parent=11 // pred_check
          %p514 = pneg %p191
        $region26: #{encode_and_pool.1} parent=11 // pred_check_branch
          %516 = sbr.rel (%p514) target = $region28
        $region27: #{encode_and_pool.1} parent=11 // pred_region
          _
        $region28: #{encode_and_pool.1} parent=11 // pred_fallthru
          _
        // Predicated region
        $region29: #{encode_and_pool.1} parent=11 // pred_check
          %p517 = pneg %p212
        $region30: #{encode_and_pool.1} parent=11 // pred_check_branch
          %519 = sbr.rel (%p517) target = $region32
        $region31: #{encode_and_pool.1} parent=11 // pred_region
          _
        $region32: #{encode_and_pool.1} parent=11 // pred_fallthru
          _
        // Predicated region
        $region33: #{encode_and_pool.1} parent=11 // pred_check
          %p520 = pneg %p233
        $region34: #{encode_and_pool.1} parent=11 // pred_check_branch
          %522 = sbr.rel (%p520) target = $region36
        $region35: #{encode_and_pool.1} parent=11 // pred_region
          _
        $region36: #{encode_and_pool.1} parent=11 // pred_fallthru
          _
        // Predicated region
        $region37: #{encode_and_pool.1} parent=11 // pred_check
          %p523 = pneg %p254
        $region38: #{encode_and_pool.1} parent=11 // pred_check_branch
          %525 = sbr.rel (%p523) target = $region40
        $region39: #{encode_and_pool.1} parent=11 // pred_region
          _
        $region40: #{encode_and_pool.1} parent=11 // pred_fallthru
          _
        // Predicated region
        $region41: #{encode_and_pool.1} parent=11 // pred_check
          %p526 = pneg %p275
        $region42: #{encode_and_pool.1} parent=11 // pred_check_branch
          %528 = sbr.rel (%p526) target = $region44
        $region43: #{encode_and_pool.1} parent=11 // pred_region
          _
        $region44: #{encode_and_pool.1} parent=11 // pred_fallthru
          _
        // Predicated region
        $region45: #{encode_and_pool.1} parent=11 // pred_check
          %p529 = pneg %p296
        $region46: #{encode_and_pool.1} parent=11 // pred_check_branch
          %531 = sbr.rel (%p529) target = $region48
        $region47: #{encode_and_pool.1} parent=11 // pred_region
          _
        $region48: #{encode_and_pool.1} parent=11 // pred_fallthru
          _
        // Predicated region
        $region49: #{encode_and_pool.1} parent=11 // pred_check
          %p532 = pneg %p317
        $region50: #{encode_and_pool.1} parent=11 // pred_check_branch
          %534 = sbr.rel (%p532) target = $region52
        $region51: #{encode_and_pool.1} parent=11 // pred_region
          _
        $region52: #{encode_and_pool.1} parent=11 // pred_fallthru
          _
        // Predicated region
        $region53: #{encode_and_pool.1} parent=11 // pred_check
          %p535 = pneg %p338
        $region54: #{encode_and_pool.1} parent=11 // pred_check_branch
          %537 = sbr.rel (%p535) target = $region56
        $region55: #{encode_and_pool.1} parent=11 // pred_region
          _
        $region56: #{encode_and_pool.1} parent=11 // pred_fallthru
          _
        // Predicated region
        $region57: #{encode_and_pool.1} parent=11 // pred_check
          %p538 = pneg %p359
        $region58: #{encode_and_pool.1} parent=11 // pred_check_branch
          %540 = sbr.rel (%p538) target = $region60
        $region59: #{encode_and_pool.1} parent=11 // pred_region
          _
        $region60: #{encode_and_pool.1} parent=11 // pred_fallthru
          _
        // Predicated region
        $region61: #{encode_and_pool.1} parent=11 // pred_check
          %p541 = pneg %p380
        $region62: #{encode_and_pool.1} parent=11 // pred_check_branch
          %543 = sbr.rel (%p541) target = $region64
        $region63: #{encode_and_pool.1} parent=11 // pred_region
          _
        $region64: #{encode_and_pool.1} parent=11 // pred_fallthru
          _
        // Predicated region
        $region65: #{encode_and_pool.1} parent=11 // pred_check
          %p544 = pneg %p401
        $region66: #{encode_and_pool.1} parent=11 // pred_check_branch
          %546 = sbr.rel (%p544) target = $region68
        $region67: #{encode_and_pool.1} parent=11 // pred_region
          _
        $region68: #{encode_and_pool.1} parent=11 // pred_fallthru
          _
        // Predicated region
        $region69: #{encode_and_pool.1} parent=11 // pred_check
          %p547 = pneg %p422
        $region70: #{encode_and_pool.1} parent=11 // pred_check_branch
          %549 = sbr.rel (%p547) target = $region72
        $region71: #{encode_and_pool.1} parent=11 // pred_region
          _
        $region72: #{encode_and_pool.1} parent=11 // pred_fallthru
          _
        // Predicated region
        $region73: #{encode_and_pool.1} parent=11 // pred_check
          %p550 = pneg %p443
        $region74: #{encode_and_pool.1} parent=11 // pred_check_branch
          %552 = sbr.rel (%p550) target = $region76
        $region75: #{encode_and_pool.1} parent=11 // pred_region
          _
        $region76: #{encode_and_pool.1} parent=11 // pred_fallthru
          _
        // Predicated region
        $region77: #{encode_and_pool.1} parent=11 // pred_check
          %p553 = pneg %p464
        $region78: #{encode_and_pool.1} parent=11 // pred_check_branch
          %555 = sbr.rel (%p553) target = $region80
        $region79: #{encode_and_pool.1} parent=11 // pred_region
          _
        $region80: #{encode_and_pool.1} parent=11 // pred_fallthru
          _
      $region12: #{encode_and_pool.1} parent=5 // pred_fallthru
        _
      %p556 = scmp.lt.s32.totalorder %s29, 2
      // Predicated region
      $region81: #{encode_and_pool.1} parent=5 // pred_check
        %p557 = pneg %p556
      $region82: #{encode_and_pool.1} parent=5 // pred_check_branch
        %559 = sbr.rel (%p557) target = $region84
      $region83: #{encode_and_pool.1} parent=5 // pred_region
        // Predicated region
        $region85: #{encode_and_pool.1} parent=83 // pred_check
          %p560 = pneg %p49
        $region86: #{encode_and_pool.1} parent=83 // pred_check_branch
          %562 = sbr.rel (%p560) target = $region88
        $region87: #{encode_and_pool.1} parent=83 // pred_region
          %p563 = scmp.lt.s32.totalorder %s29, 1
          %s564 = scalar_select %p563, %s29, 1
          %s565 = smul.addr %s564, 8
          %s566 = scalar_lea.vmem %s0, %s565
        $region88: #{encode_and_pool.1} parent=83 // pred_fallthru
          _
        // Predicated region
        $region89: #{encode_and_pool.1} parent=83 // pred_check
          %p567 = pneg %p75
        $region90: #{encode_and_pool.1} parent=83 // pred_check_branch
          %569 = sbr.rel (%p567) target = $region92
        $region91: #{encode_and_pool.1} parent=83 // pred_region
          %p570 = scmp.lt.s32.totalorder %s29, 1
          %s571 = scalar_select %p570, %s29, 1
          %s572 = smul.addr %s571, 8
          %s573 = scalar_lea.vmem %s1, %s572
        $region92: #{encode_and_pool.1} parent=83 // pred_fallthru
          _
        // Predicated region
        $region93: #{encode_and_pool.1} parent=83 // pred_check
          %p574 = pneg %p101
        $region94: #{encode_and_pool.1} parent=83 // pred_check_branch
          %576 = sbr.rel (%p574) target = $region96
        $region95: #{encode_and_pool.1} parent=83 // pred_region
          %p577 = scmp.lt.s32.totalorder %s29, 1
          %s578 = scalar_select %p577, %s29, 1
          %s579 = scalar_lea.vmem %s2, %s578
        $region96: #{encode_and_pool.1} parent=83 // pred_fallthru
          _
      $region84: #{encode_and_pool.1} parent=5 // pred_fallthru
        _
      %p580 = scmp.le.s32.totalorder 1, %s29
      %p581 = scmp.lt.s32.totalorder %s29, 3
      %p582 = pnand %p580, %p581
      %p583 = pneg %p582
      // Predicated region
      $region97: #{encode_and_pool.1} parent=5 // pred_check
        _
      $region98: #{encode_and_pool.1} parent=5 // pred_check_branch
        %585 = sbr.rel (%p582) target = $region100
      $region99: #{encode_and_pool.1} parent=5 // pred_region
        %s586 = ssub.s32 %s29, 1
        %p587 = scmp.lt.s32.totalorder %s34, 1
        %s588 = scalar_select %p587, %s34, 1
        %s589 = smul.addr %s588, 8
        %s590 = scalar_lea.vmem %s0, %s589
        %p591 = pneg %p55
        %p592 = pneg %p52
        %p593 = scmp.lt.s32.totalorder %s34, 1
        %s594 = scalar_select %p593, %s34, 1
        %s595 = smul.addr %s594, 8
        %s596 = scalar_lea.vmem %s1, %s595
        %p597 = pneg %p81
        %p598 = pneg %p78
        %p599 = scmp.lt.s32.totalorder %s34, 1
        %s600 = scalar_select %p599, %s34, 1
        %s601 = scalar_lea.vmem %s2, %s600
        %p602 = pneg %p107
        %p603 = pneg %p104
        %p604 = pneg %p128
        %p605 = pneg %p125
        %p606 = pneg %p149
        %p607 = pneg %p146
        %p608 = pneg %p170
        %p609 = pneg %p167
        %p610 = pneg %p191
        %p611 = pneg %p188
        %p612 = pneg %p212
        %p613 = pneg %p209
        %p614 = pneg %p233
        %p615 = pneg %p230
        %p616 = pneg %p254
        %p617 = pneg %p251
        %p618 = pneg %p275
        %p619 = pneg %p272
        %p620 = pneg %p296
        %p621 = pneg %p293
        %p622 = pneg %p317
        %p623 = pneg %p314
        %p624 = pneg %p338
        %p625 = pneg %p335
        %p626 = pneg %p359
        %p627 = pneg %p356
        %p628 = pneg %p380
        %p629 = pneg %p377
        %p630 = pneg %p401
        %p631 = pneg %p398
        %p632 = pneg %p422
        %p633 = pneg %p419
        %p634 = pneg %p443
        %p635 = pneg %p440
        %p636 = pneg %p464
        %p637 = pneg %p461
        %p638 = pneg %p490
        %p639 = pneg %p487
        %s640 = sand.u32 %s477, 1
        %s641 = scalar_lea.sflag [#allocation3], %s640
        %s642 = sand.u32 %s477, 1
        %s643 = scalar_lea.vmem [#allocation2], %s642
        %p644 = scmp.lt.s32.totalorder %s34, 1
        %s645 = scalar_select %p644, %s34, 1
        %s646 = smul.addr %s645, 8
        %s647 = scalar_lea.vmem %s0, %s646
        %p648 = scmp.lt.s32.totalorder %s34, 1
        %s649 = scalar_select %p648, %s34, 1
        %s650 = smul.addr %s649, 8
        %s651 = scalar_lea.vmem %s1, %s650
        %p652 = scmp.lt.s32.totalorder %s34, 1
        %s653 = scalar_select %p652, %s34, 1
        %s654 = scalar_lea.vmem %s2, %s653
        %v656 = vld [vmem:[%s647] sm:$0xff]
        %v657 = vlaneseq
        %v658 = vand.u32 %v657, 127
        %659 = vset.pattern.permute.xlu0 0
        %660 = vperm.xlu0 %659, %v656
        %v661 = vpop.permute.xlu0 %660
        %vm662 = vcmp.eq.s32.totalorder %v661, %v658
        %v663 = vsel %vm662, 1.0, 0.0
        %v664 = vpack.c.bf16 %v663, %v663
        %v665 = vld [vmem:[%s3] sm:$0xf]
        %v666 = vld [vmem:[%s3 + $0x4] sm:$0xf]
        %v667 = vld [vmem:[%s3 + $0x8] sm:$0xf]
        %v668 = vld [vmem:[%s3 + $0xc] sm:$0xf]
        %v669 = vld [vmem:[%s3 + $0x10] sm:$0xf]
        %v670 = vld [vmem:[%s3 + $0x14] sm:$0xf]
        %v671 = vld [vmem:[%s3 + $0x18] sm:$0xf]
        %v672 = vld [vmem:[%s3 + $0x1c] sm:$0xf]
        %v673 = vld [vmem:[%s3 + $0x20] sm:$0xf]
        %v674 = vld [vmem:[%s3 + $0x24] sm:$0xf]
        %v675 = vld [vmem:[%s3 + $0x28] sm:$0xf]
        %v676 = vld [vmem:[%s3 + $0x2c] sm:$0xf]
        %v677 = vld [vmem:[%s3 + $0x30] sm:$0xf]
        %v678 = vld [vmem:[%s3 + $0x34] sm:$0xf]
        %v679 = vld [vmem:[%s3 + $0x38] sm:$0xf]
        %v680 = vld [vmem:[%s3 + $0x3c] sm:$0xf]
        %v681 = vld [vmem:[%s651] sm:$0xff]
        %v682 = vld [vmem:[%s4] sm:$0xff]
        %v699 = vunpack.c.l.b16 %v665
        %v700 = vunpack.c.l.b16 %v666
        %v701 = vunpack.c.l.b16 %v667
        %v702 = vunpack.c.l.b16 %v668
        %v703 = vunpack.c.l.b16 %v669
        %v704 = vunpack.c.l.b16 %v670
        %v705 = vunpack.c.l.b16 %v671
        %v706 = vunpack.c.l.b16 %v672
        %v707 = vunpack.c.l.b16 %v673
        %v708 = vunpack.c.l.b16 %v674
        %v709 = vunpack.c.l.b16 %v675
        %v710 = vunpack.c.l.b16 %v676
        %v711 = vunpack.c.l.b16 %v677
        %v712 = vunpack.c.l.b16 %v678
        %v713 = vunpack.c.l.b16 %v679
        %v714 = vunpack.c.l.b16 %v680
        %v715 = vpack.c.b16 %v700, %v699
        %v716 = vpack.c.b16 %v702, %v701
        %v717 = vpack.c.b16 %v704, %v703
        %v718 = vpack.c.b16 %v706, %v705
        %v719 = vpack.c.b16 %v708, %v707
        %v720 = vpack.c.b16 %v710, %v709
        %v721 = vpack.c.b16 %v712, %v711
        %v722 = vpack.c.b16 %v714, %v713
        %731 = vmatprep.subr.bf16.mxu0 0
        %732 = vmatpush1.bf16.msra.mxu0 %v722
        %733 = vmatprep.subr.bf16.mxu0 0
        %734 = vmatpush1.bf16.msra.mxu0 %v721
        %735 = vmatprep.subr.bf16.mxu0 0
        %736 = vmatpush1.bf16.msra.mxu0 %v720
        %737 = vmatprep.subr.bf16.mxu0 0
        %738 = vmatpush1.bf16.msra.mxu0 %v719
        %739 = vmatprep.subr.bf16.mxu0 0
        %740 = vmatpush1.bf16.msra.mxu0 %v718
        %741 = vmatprep.subr.bf16.mxu0 0
        %742 = vmatpush1.bf16.msra.mxu0 %v717
        %743 = vmatprep.subr.bf16.mxu0 0
        %744 = vmatpush1.bf16.msra.mxu0 %v716
        %745 = vmatprep.subr.bf16.mxu0 0
        %746 = vmatpush1.bf16.msra.mxu0 %v715
        %747 = vmatprep.subr.bf16.mxu0 0
        %748 = vmatpush2.bf16.msra.mxu0 0
        %749 = vmatprep.subr.bf16.mxu0 0
        %750 = vmatpush2.bf16.msra.mxu0 0
        %751 = vmatprep.subr.bf16.mxu0 0
        %752 = vmatpush2.bf16.msra.mxu0 0
        %753 = vmatprep.subr.bf16.mxu0 0
        %754 = vmatpush2.bf16.msra.mxu0 0
        %755 = vmatprep.subr.bf16.mxu0 0
        %756 = vmatpush2.bf16.msra.mxu0 0
        %757 = vmatprep.subr.bf16.mxu0 0
        %758 = vmatpush2.bf16.msra.mxu0 0
        %759 = vmatprep.subr.bf16.mxu0 0
        %760 = vmatpush2.bf16.msra.mxu0 0
        %761 = vmatprep.subr.bf16.mxu0 0
        %762 = vmatpush2.bf16.msra.mxu0 0
        %763 = vmatprep.mubr.bf16.mxu0 0
        %764 = vmatmul.mubr.bf16.gmra.mxu0 %v664
        %v765 = vpop.f32.mrf.mxu0
        %v766 = vadd.f32 %v682, %v765
        %v767 = vpop.f32.mrf.mxu0
        %v768 = vpop.f32.mrf.mxu0
        %v769 = vpop.f32.mrf.mxu0
        %770 = vdwg.mxu0
        %vm771 = vcmp.eq.s32.totalorder %v681, 0
        %v772 = vld [vmem:[%s5] sm:$0x1]
        %v773 = vld [vmem:[%s5 + $0x1] sm:$0x1]
        %v774 = vsel %vm771, 1, 0
        %775 = vset.pattern.permute.xlu0 0
        %776 = vperm.xlu0 %775, %v774
        %v777 = vpop.permute.xlu0 %776
        %vm778 = vcmp.eq.s32.totalorder %v777, 1
        %v779 = vlaneseq
        %v780 = vshrl.u32 %v779, 7
        %v781 = vsub.s32 0, %v780
        %v782 = vrot.slane %v772, %v781
        %v783 = vlaneseq
        %v784 = vshrl.u32 %v783, 7
        %v785 = vsub.s32 0, %v784
        %v786 = vrot.slane %v773, %v785
        %v787 = vsel %vm778, %v782, %v786
        %v788 = vadd.f32 %v766, %v787
        %v789 = vld [vmem:[%s6] sm:$0x1]
        %v790 = vld [vmem:[%s7] sm:$0x1]
        %vm791 = vcmask 261120
        %v792 = vsel %vm791, %v788, 0.0
        %793 = vadd.xlane.f32.xlu0 %v792
        %v794 = vpop.xlane.xlu0 %793
        %v795 = vrcp.pop 32.0
        %v796 = vmul.f32 %v794, %v795
        %v797 = vsub.f32 %v788, %v796
        %v798 = vmul.f32 %v797, %v797
        %v799 = vsel %vm791, %v798, 0.0
        %800 = vadd.xlane.f32.xlu0 %v799
        %v801 = vpop.xlane.xlu0 %800
        %v802 = vmul.f32 %v801, %v795
        %v803 = vadd.f32 %v802, 1e-12
        %v804 = vrsqrt.pop %v803
        %v805 = vmul.f32 %v797, %v804
        %v807 = vlaneseq
        %v808 = vshrl.u32 %v807, 7
        %v809 = vsub.s32 0, %v808
        %v810 = vrot.slane %v789, %v809
        %v812 = vmul.f32 %v805, %v810
        %v814 = vlaneseq
        %v815 = vshrl.u32 %v814, 7
        %v816 = vsub.s32 0, %v815
        %v817 = vrot.slane %v790, %v816
        %v819 = vadd.f32 %v812, %v817
        %v820 = vld [vmem:[%s654] sm:$0x1]
        %v821 = vsub.f32 1.0, %v820
        %v822 = vmul.f32 %v821, -1e+09
        %v823 = vpack.c.bf16 %v819, %v819
        %v824 = vld [vmem:[%s8] sm:$0xf]
        %v825 = vld [vmem:[%s8 + $0x4] sm:$0xf]
        %v826 = vld [vmem:[%s8 + $0x8] sm:$0xf]
        %v827 = vld [vmem:[%s8 + $0xc] sm:$0xf]
        %v828 = vld [vmem:[%s9] sm:$0x1]
        %v830 = vlaneseq
        %v831 = vshrl.u32 %v830, 7
        %v832 = vsub.s32 0, %v831
        %v833 = vrot.slane %v828, %v832
        %v839 = vunpack.c.l.b16 %v824
        %v840 = vunpack.c.l.b16 %v825
        %v841 = vunpack.c.l.b16 %v826
        %v842 = vunpack.c.l.b16 %v827
        %v843 = vpack.c.b16 %v840, %v839
        %v844 = vpack.c.b16 %v842, %v841
        %v848 = vsel %vm791, %v823, 0
        %850 = vmatprep.subr.bf16.mxu0 0
        %851 = vmatpush1.bf16.msra.mxu0 0
        %852 = vmatprep.subr.bf16.mxu0 0
        %853 = vmatpush1.bf16.msra.mxu0 0
        %854 = vmatprep.subr.bf16.mxu0 0
        %855 = vmatpush1.bf16.msra.mxu0 0
        %856 = vmatprep.subr.bf16.mxu0 0
        %857 = vmatpush1.bf16.msra.mxu0 0
        %858 = vmatprep.subr.bf16.mxu0 0
        %859 = vmatpush1.bf16.msra.mxu0 0
        %860 = vmatprep.subr.bf16.mxu0 0
        %861 = vmatpush1.bf16.msra.mxu0 0
        %862 = vmatprep.subr.bf16.mxu0 0
        %863 = vmatpush1.bf16.msra.mxu0 %v844
        %864 = vmatprep.subr.bf16.mxu0 0
        %865 = vmatpush1.bf16.msra.mxu0 %v843
        %866 = vmatprep.subr.bf16.mxu0 0
        %867 = vmatpush2.bf16.msra.mxu0 0
        %868 = vmatprep.subr.bf16.mxu0 0
        %869 = vmatpush2.bf16.msra.mxu0 0
        %870 = vmatprep.subr.bf16.mxu0 0
        %871 = vmatpush2.bf16.msra.mxu0 0
        %872 = vmatprep.subr.bf16.mxu0 0
        %873 = vmatpush2.bf16.msra.mxu0 0
        %874 = vmatprep.subr.bf16.mxu0 0
        %875 = vmatpush2.bf16.msra.mxu0 0
        %876 = vmatprep.subr.bf16.mxu0 0
        %877 = vmatpush2.bf16.msra.mxu0 0
        %878 = vmatprep.subr.bf16.mxu0 0
        %879 = vmatpush2.bf16.msra.mxu0 0
        %880 = vmatprep.subr.bf16.mxu0 0
        %881 = vmatpush2.bf16.msra.mxu0 0
        %882 = vmatprep.mubr.bf16.mxu0 0
        %883 = vmatmul.mubr.bf16.gmra.mxu0 %v848
        %v884 = vpop.f32.mrf.mxu0
        %v885 = vadd.f32 %v833, %v884
        %v886 = vpop.f32.mrf.mxu0
        %v887 = vpop.f32.mrf.mxu0
        %v888 = vpop.f32.mrf.mxu0
        %889 = vdwg.mxu0
        %891 = vrot.lane.b32.xlu0 %v885, 120
        %v892 = vpop.permute.xlu0 %891
        %894 = vrot.lane.b32.xlu0 %v885, 112
        %v895 = vpop.permute.xlu0 %894
        %897 = vrot.lane.b32.xlu0 %v885, 104
        %v898 = vpop.permute.xlu0 %897
        %v900 = vpack.c.bf16 %v885, %v885
        %v901 = vpack.c.bf16 %v892, %v892
        %v902 = vpack.c.bf16 %v895, %v895
        %v903 = vpack.c.bf16 %v898, %v898
        %905 = vrot.lane.b32.xlu0 %v900, 96
        %v906 = vpop.permute.xlu0 %905
        %vm907 = vcmask 64512
        %v909 = vsel %vm907, %v900, 0
        %v912 = vsel %vm907, %v906, 0
        %914 = vmatprep.subr.bf16.mxu0 0
        %915 = vmatpush1.bf16.xpose.msra.mxu0 0
        %916 = vmatprep.subr.bf16.mxu0 0
        %917 = vmatpush1.bf16.xpose.msra.mxu0 0
        %918 = vmatprep.subr.bf16.mxu0 0
        %919 = vmatpush1.bf16.xpose.msra.mxu0 0
        %920 = vmatprep.subr.bf16.mxu0 0
        %921 = vmatpush1.bf16.xpose.msra.mxu0 0
        %922 = vmatprep.subr.bf16.mxu0 0
        %923 = vmatpush1.bf16.xpose.msra.mxu0 0
        %924 = vmatprep.subr.bf16.mxu0 0
        %925 = vmatpush1.bf16.xpose.msra.mxu0 0
        %926 = vmatprep.subr.bf16.mxu0 0
        %927 = vmatpush1.bf16.xpose.msra.mxu0 0
        %928 = vmatprep.subr.bf16.mxu0 0
        %929 = vmatpush1.bf16.xpose.msra.mxu0 %v912
        %930 = vmatprep.subr.bf16.mxu0 0
        %931 = vmatpush2.bf16.xpose.msra.mxu0 0
        %932 = vmatprep.subr.bf16.mxu0 0
        %933 = vmatpush2.bf16.xpose.msra.mxu0 0
        %934 = vmatprep.subr.bf16.mxu0 0
        %935 = vmatpush2.bf16.xpose.msra.mxu0 0
        %936 = vmatprep.subr.bf16.mxu0 0
        %937 = vmatpush2.bf16.xpose.msra.mxu0 0
        %938 = vmatprep.subr.bf16.mxu0 0
        %939 = vmatpush2.bf16.xpose.msra.mxu0 0
        %940 = vmatprep.subr.bf16.mxu0 0
        %941 = vmatpush2.bf16.xpose.msra.mxu0 0
        %942 = vmatprep.subr.bf16.mxu0 0
        %943 = vmatpush2.bf16.xpose.msra.mxu0 0
        %944 = vmatprep.subr.bf16.mxu0 0
        %945 = vmatpush2.bf16.xpose.msra.mxu0 0
        %946 = vmatprep.mubr.bf16.mxu0 0
        %947 = vmatmul.mubr.bf16.gmra.mxu0 %v909
        %v948 = vpop.f32.mrf.mxu0
        %v949 = vadd.f32 0.0, %v948
        %v950 = vpop.f32.mrf.mxu0
        %v951 = vpop.f32.mrf.mxu0
        %v952 = vpop.f32.mrf.mxu0
        %953 = vdwg.mxu0
        %955 = vrot.lane.b32.xlu0 %v901, 96
        %v956 = vpop.permute.xlu0 %955
        %v958 = vsel %vm907, %v901, 0
        %v961 = vsel %vm907, %v956, 0
        %963 = vmatprep.subr.bf16.mxu0 0
        %964 = vmatpush1.bf16.xpose.msra.mxu0 0
        %965 = vmatprep.subr.bf16.mxu0 0
        %966 = vmatpush1.bf16.xpose.msra.mxu0 0
        %967 = vmatprep.subr.bf16.mxu0 0
        %968 = vmatpush1.bf16.xpose.msra.mxu0 0
        %969 = vmatprep.subr.bf16.mxu0 0
        %970 = vmatpush1.bf16.xpose.msra.mxu0 0
        %971 = vmatprep.subr.bf16.mxu0 0
        %972 = vmatpush1.bf16.xpose.msra.mxu0 0
        %973 = vmatprep.subr.bf16.mxu0 0
        %974 = vmatpush1.bf16.xpose.msra.mxu0 0
        %975 = vmatprep.subr.bf16.mxu0 0
        %976 = vmatpush1.bf16.xpose.msra.mxu0 0
        %977 = vmatprep.subr.bf16.mxu0 0
        %978 = vmatpush1.bf16.xpose.msra.mxu0 %v961
        %979 = vmatprep.subr.bf16.mxu0 0
        %980 = vmatpush2.bf16.xpose.msra.mxu0 0
        %981 = vmatprep.subr.bf16.mxu0 0
        %982 = vmatpush2.bf16.xpose.msra.mxu0 0
        %983 = vmatprep.subr.bf16.mxu0 0
        %984 = vmatpush2.bf16.xpose.msra.mxu0 0
        %985 = vmatprep.subr.bf16.mxu0 0
        %986 = vmatpush2.bf16.xpose.msra.mxu0 0
        %987 = vmatprep.subr.bf16.mxu0 0
        %988 = vmatpush2.bf16.xpose.msra.mxu0 0
        %989 = vmatprep.subr.bf16.mxu0 0
        %990 = vmatpush2.bf16.xpose.msra.mxu0 0
        %991 = vmatprep.subr.bf16.mxu0 0
        %992 = vmatpush2.bf16.xpose.msra.mxu0 0
        %993 = vmatprep.subr.bf16.mxu0 0
        %994 = vmatpush2.bf16.xpose.msra.mxu0 0
        %995 = vmatprep.mubr.bf16.mxu0 0
        %996 = vmatmul.mubr.bf16.gmra.mxu0 %v958
        %v997 = vpop.f32.mrf.mxu0
        %v998 = vadd.f32 0.0, %v997
        %v999 = vpop.f32.mrf.mxu0
        %v1000 = vpop.f32.mrf.mxu0
        %v1001 = vpop.f32.mrf.mxu0
        %1002 = vdwg.mxu0
        %1004 = vrot.lane.b32.xlu0 %v902, 96
        %v1005 = vpop.permute.xlu0 %1004
        %v1007 = vsel %vm907, %v902, 0
        %v1010 = vsel %vm907, %v1005, 0
        %1012 = vmatprep.subr.bf16.mxu0 0
        %1013 = vmatpush1.bf16.xpose.msra.mxu0 0
        %1014 = vmatprep.subr.bf16.mxu0 0
        %1015 = vmatpush1.bf16.xpose.msra.mxu0 0
        %1016 = vmatprep.subr.bf16.mxu0 0
        %1017 = vmatpush1.bf16.xpose.msra.mxu0 0
        %1018 = vmatprep.subr.bf16.mxu0 0
        %1019 = vmatpush1.bf16.xpose.msra.mxu0 0
        %1020 = vmatprep.subr.bf16.mxu0 0
        %1021 = vmatpush1.bf16.xpose.msra.mxu0 0
        %1022 = vmatprep.subr.bf16.mxu0 0
        %1023 = vmatpush1.bf16.xpose.msra.mxu0 0
        %1024 = vmatprep.subr.bf16.mxu0 0
        %1025 = vmatpush1.bf16.xpose.msra.mxu0 0
        %1026 = vmatprep.subr.bf16.mxu0 0
        %1027 = vmatpush1.bf16.xpose.msra.mxu0 %v1010
        %1028 = vmatprep.subr.bf16.mxu0 0
        %1029 = vmatpush2.bf16.xpose.msra.mxu0 0
        %1030 = vmatprep.subr.bf16.mxu0 0
        %1031 = vmatpush2.bf16.xpose.msra.mxu0 0
        %1032 = vmatprep.subr.bf16.mxu0 0
        %1033 = vmatpush2.bf16.xpose.msra.mxu0 0
        %1034 = vmatprep.subr.bf16.mxu0 0
        %1035 = vmatpush2.bf16.xpose.msra.mxu0 0
        %1036 = vmatprep.subr.bf16.mxu0 0
        %1037 = vmatpush2.bf16.xpose.msra.mxu0 0
        %1038 = vmatprep.subr.bf16.mxu0 0
        %1039 = vmatpush2.bf16.xpose.msra.mxu0 0
        %1040 = vmatprep.subr.bf16.mxu0 0
        %1041 = vmatpush2.bf16.xpose.msra.mxu0 0
        %1042 = vmatprep.subr.bf16.mxu0 0
        %1043 = vmatpush2.bf16.xpose.msra.mxu0 0
        %1044 = vmatprep.mubr.bf16.mxu0 0
        %1045 = vmatmul.mubr.bf16.gmra.mxu0 %v1007
        %v1046 = vpop.f32.mrf.mxu0
        %v1047 = vadd.f32 0.0, %v1046
        %v1048 = vpop.f32.mrf.mxu0
        %v1049 = vpop.f32.mrf.mxu0
        %v1050 = vpop.f32.mrf.mxu0
        %1051 = vdwg.mxu0
        %1053 = vrot.lane.b32.xlu0 %v903, 96
        %v1054 = vpop.permute.xlu0 %1053
        %v1056 = vsel %vm907, %v903, 0
        %v1059 = vsel %vm907, %v1054, 0
        %1061 = vmatprep.subr.bf16.mxu0 0
        %1062 = vmatpush1.bf16.xpose.msra.mxu0 0
        %1063 = vmatprep.subr.bf16.mxu0 0
        %1064 = vmatpush1.bf16.xpose.msra.mxu0 0
        %1065 = vmatprep.subr.bf16.mxu0 0
        %1066 = vmatpush1.bf16.xpose.msra.mxu0 0
        %1067 = vmatprep.subr.bf16.mxu0 0
        %1068 = vmatpush1.bf16.xpose.msra.mxu0 0
        %1069 = vmatprep.subr.bf16.mxu0 0
        %1070 = vmatpush1.bf16.xpose.msra.mxu0 0
        %1071 = vmatprep.subr.bf16.mxu0 0
        %1072 = vmatpush1.bf16.xpose.msra.mxu0 0
        %1073 = vmatprep.subr.bf16.mxu0 0
        %1074 = vmatpush1.bf16.xpose.msra.mxu0 0
        %1075 = vmatprep.subr.bf16.mxu0 0
        %1076 = vmatpush1.bf16.xpose.msra.mxu0 %v1059
        %1077 = vmatprep.subr.bf16.mxu0 0
        %1078 = vmatpush2.bf16.xpose.msra.mxu0 0
        %1079 = vmatprep.subr.bf16.mxu0 0
        %1080 = vmatpush2.bf16.xpose.msra.mxu0 0
        %1081 = vmatprep.subr.bf16.mxu0 0
        %1082 = vmatpush2.bf16.xpose.msra.mxu0 0
        %1083 = vmatprep.subr.bf16.mxu0 0
        %1084 = vmatpush2.bf16.xpose.msra.mxu0 0
        %1085 = vmatprep.subr.bf16.mxu0 0
        %1086 = vmatpush2.bf16.xpose.msra.mxu0 0
        %1087 = vmatprep.subr.bf16.mxu0 0
        %1088 = vmatpush2.bf16.xpose.msra.mxu0 0
        %1089 = vmatprep.subr.bf16.mxu0 0
        %1090 = vmatpush2.bf16.xpose.msra.mxu0 0
        %1091 = vmatprep.subr.bf16.mxu0 0
        %1092 = vmatpush2.bf16.xpose.msra.mxu0 0
        %1093 = vmatprep.mubr.bf16.mxu0 0
        %1094 = vmatmul.mubr.bf16.gmra.mxu0 %v1056
        %v1095 = vpop.f32.mrf.mxu0
        %v1096 = vadd.f32 0.0, %v1095
        %v1097 = vpop.f32.mrf.mxu0
        %v1098 = vpop.f32.mrf.mxu0
        %v1099 = vpop.f32.mrf.mxu0
        %1100 = vdwg.mxu0
        %v1101 = vmul.f32 %v949, 0.35355338
        %v1102 = vmul.f32 %v998, 0.35355338
        %v1103 = vmul.f32 %v1047, 0.35355338
        %v1104 = vmul.f32 %v1096, 0.35355338
        %v1106 = vlaneseq
        %v1107 = vshrl.u32 %v1106, 7
        %v1108 = vsub.s32 0, %v1107
        %v1109 = vrot.slane %v822, %v1108
        %v1111 = vadd.f32 %v1101, %v1109
        %v1112 = vadd.f32 %v1102, %v1109
        %v1113 = vadd.f32 %v1103, %v1109
        %v1114 = vadd.f32 %v1104, %v1109
        %v1115 = vsel %vm907, %v1111, -inf
        %1116 = vmax.xlane.f32.xlu0 %v1115
        %v1117 = vpop.xlane.xlu0 %1116
        %v1118 = vsel %vm907, %v1112, -inf
        %1119 = vmax.xlane.f32.xlu0 %v1118
        %v1120 = vpop.xlane.xlu0 %1119
        %v1121 = vsel %vm907, %v1113, -inf
        %1122 = vmax.xlane.f32.xlu0 %v1121
        %v1123 = vpop.xlane.xlu0 %1122
        %v1124 = vsel %vm907, %v1114, -inf
        %1125 = vmax.xlane.f32.xlu0 %v1124
        %v1126 = vpop.xlane.xlu0 %1125
        %v1127 = vsub.f32 %v1111, %v1117
        %v1128 = vsub.f32 %v1112, %v1120
        %v1129 = vsub.f32 %v1113, %v1123
        %v1130 = vsub.f32 %v1114, %v1126
        %v1131 = vmul.f32 %v1127, 1.442695
        %v1132 = vpow.pop %v1131
        %v1133 = vmul.f32 %v1128, 1.442695
        %v1134 = vpow.pop %v1133
        %v1135 = vmul.f32 %v1129, 1.442695
        %v1136 = vpow.pop %v1135
        %v1137 = vmul.f32 %v1130, 1.442695
        %v1138 = vpow.pop %v1137
        %v1139 = vsel %vm907, %v1132, 0.0
        %1140 = vadd.xlane.f32.xlu0 %v1139
        %v1141 = vpop.xlane.xlu0 %1140
        %v1142 = vsel %vm907, %v1134, 0.0
        %1143 = vadd.xlane.f32.xlu0 %v1142
        %v1144 = vpop.xlane.xlu0 %1143
        %v1145 = vsel %vm907, %v1136, 0.0
        %1146 = vadd.xlane.f32.xlu0 %v1145
        %v1147 = vpop.xlane.xlu0 %1146
        %v1148 = vsel %vm907, %v1138, 0.0
        %1149 = vadd.xlane.f32.xlu0 %v1148
        %v1150 = vpop.xlane.xlu0 %1149
        %v1151 = vrcp.pop %v1141
        %v1152 = vrcp.pop %v1144
        %v1153 = vrcp.pop %v1147
        %v1154 = vrcp.pop %v1150
        %v1155 = vmul.f32 %v1132, %v1151
        %v1156 = vmul.f32 %v1134, %v1152
        %v1157 = vmul.f32 %v1136, %v1153
        %v1158 = vmul.f32 %v1138, %v1154
        %v1159 = vpack.c.bf16 %v1155, %v1155
        %v1160 = vpack.c.bf16 %v1156, %v1156
        %v1161 = vpack.c.bf16 %v1157, %v1157
        %v1162 = vpack.c.bf16 %v1158, %v1158
        %1163 = vrot.lane.b32.xlu0 %v900, 64
        %v1164 = vpop.permute.xlu0 %1163
        %v1166 = vsel %vm907, %v1159, 0
        %vm1168 = vcmask 1043456
        %v1170 = vsel %vm1168, %v1164, 0
        %1172 = vmatprep.subr.bf16.mxu0 0
        %1173 = vmatpush1.bf16.msra.mxu0 0
        %1174 = vmatprep.subr.bf16.mxu0 0
        %1175 = vmatpush1.bf16.msra.mxu0 0
        %1176 = vmatprep.subr.bf16.mxu0 0
        %1177 = vmatpush1.bf16.msra.mxu0 0
        %1178 = vmatprep.subr.bf16.mxu0 0
        %1179 = vmatpush1.bf16.msra.mxu0 0
        %1180 = vmatprep.subr.bf16.mxu0 0
        %1181 = vmatpush1.bf16.msra.mxu0 0
        %1182 = vmatprep.subr.bf16.mxu0 0
        %1183 = vmatpush1.bf16.msra.mxu0 0
        %1184 = vmatprep.subr.bf16.mxu0 0
        %1185 = vmatpush1.bf16.msra.mxu0 0
        %1186 = vmatprep.subr.bf16.mxu0 0
        %1187 = vmatpush1.bf16.msra.mxu0 %v1170
        %1188 = vmatprep.subr.bf16.mxu0 0
        %1189 = vmatpush2.bf16.msra.mxu0 0
        %1190 = vmatprep.subr.bf16.mxu0 0
        %1191 = vmatpush2.bf16.msra.mxu0 0
        %1192 = vmatprep.subr.bf16.mxu0 0
        %1193 = vmatpush2.bf16.msra.mxu0 0
        %1194 = vmatprep.subr.bf16.mxu0 0
        %1195 = vmatpush2.bf16.msra.mxu0 0
        %1196 = vmatprep.subr.bf16.mxu0 0
        %1197 = vmatpush2.bf16.msra.mxu0 0
        %1198 = vmatprep.subr.bf16.mxu0 0
        %1199 = vmatpush2.bf16.msra.mxu0 0
        %1200 = vmatprep.subr.bf16.mxu0 0
        %1201 = vmatpush2.bf16.msra.mxu0 0
        %1202 = vmatprep.subr.bf16.mxu0 0
        %1203 = vmatpush2.bf16.msra.mxu0 0
        %1204 = vmatprep.mubr.bf16.mxu0 0
        %1205 = vmatmul.mubr.bf16.gmra.mxu0 %v1166
        %v1206 = vpop.f32.mrf.mxu0
        %v1207 = vadd.f32 0.0, %v1206
        %v1208 = vpop.f32.mrf.mxu0
        %v1209 = vpop.f32.mrf.mxu0
        %v1210 = vpop.f32.mrf.mxu0
        %1211 = vdwg.mxu0
        %1212 = vrot.lane.b32.xlu0 %v901, 64
        %v1213 = vpop.permute.xlu0 %1212
        %v1215 = vsel %vm907, %v1160, 0
        %v1218 = vsel %vm1168, %v1213, 0
        %1220 = vmatprep.subr.bf16.mxu0 0
        %1221 = vmatpush1.bf16.msra.mxu0 0
        %1222 = vmatprep.subr.bf16.mxu0 0
        %1223 = vmatpush1.bf16.msra.mxu0 0
        %1224 = vmatprep.subr.bf16.mxu0 0
        %1225 = vmatpush1.bf16.msra.mxu0 0
        %1226 = vmatprep.subr.bf16.mxu0 0
        %1227 = vmatpush1.bf16.msra.mxu0 0
        %1228 = vmatprep.subr.bf16.mxu0 0
        %1229 = vmatpush1.bf16.msra.mxu0 0
        %1230 = vmatprep.subr.bf16.mxu0 0
        %1231 = vmatpush1.bf16.msra.mxu0 0
        %1232 = vmatprep.subr.bf16.mxu0 0
        %1233 = vmatpush1.bf16.msra.mxu0 0
        %1234 = vmatprep.subr.bf16.mxu0 0
        %1235 = vmatpush1.bf16.msra.mxu0 %v1218
        %1236 = vmatprep.subr.bf16.mxu0 0
        %1237 = vmatpush2.bf16.msra.mxu0 0
        %1238 = vmatprep.subr.bf16.mxu0 0
        %1239 = vmatpush2.bf16.msra.mxu0 0
        %1240 = vmatprep.subr.bf16.mxu0 0
        %1241 = vmatpush2.bf16.msra.mxu0 0
        %1242 = vmatprep.subr.bf16.mxu0 0
        %1243 = vmatpush2.bf16.msra.mxu0 0
        %1244 = vmatprep.subr.bf16.mxu0 0
        %1245 = vmatpush2.bf16.msra.mxu0 0
        %1246 = vmatprep.subr.bf16.mxu0 0
        %1247 = vmatpush2.bf16.msra.mxu0 0
        %1248 = vmatprep.subr.bf16.mxu0 0
        %1249 = vmatpush2.bf16.msra.mxu0 0
        %1250 = vmatprep.subr.bf16.mxu0 0
        %1251 = vmatpush2.bf16.msra.mxu0 0
        %1252 = vmatprep.mubr.bf16.mxu0 0
        %1253 = vmatmul.mubr.bf16.gmra.mxu0 %v1215
        %v1254 = vpop.f32.mrf.mxu0
        %v1255 = vadd.f32 0.0, %v1254
        %v1256 = vpop.f32.mrf.mxu0
        %v1257 = vpop.f32.mrf.mxu0
        %v1258 = vpop.f32.mrf.mxu0
        %1259 = vdwg.mxu0
        %1260 = vrot.lane.b32.xlu0 %v902, 64
        %v1261 = vpop.permute.xlu0 %1260
        %v1263 = vsel %vm907, %v1161, 0
        %v1266 = vsel %vm1168, %v1261, 0
        %1268 = vmatprep.subr.bf16.mxu0 0
        %1269 = vmatpush1.bf16.msra.mxu0 0
        %1270 = vmatprep.subr.bf16.mxu0 0
        %1271 = vmatpush1.bf16.msra.mxu0 0
        %1272 = vmatprep.subr.bf16.mxu0 0
        %1273 = vmatpush1.bf16.msra.mxu0 0
        %1274 = vmatprep.subr.bf16.mxu0 0
        %1275 = vmatpush1.bf16.msra.mxu0 0
        %1276 = vmatprep.subr.bf16.mxu0 0
        %1277 = vmatpush1.bf16.msra.mxu0 0
        %1278 = vmatprep.subr.bf16.mxu0 0
        %1279 = vmatpush1.bf16.msra.mxu0 0
        %1280 = vmatprep.subr.bf16.mxu0 0
        %1281 = vmatpush1.bf16.msra.mxu0 0
        %1282 = vmatprep.subr.bf16.mxu0 0
        %1283 = vmatpush1.bf16.msra.mxu0 %v1266
        %1284 = vmatprep.subr.bf16.mxu0 0
        %1285 = vmatpush2.bf16.msra.mxu0 0
        %1286 = vmatprep.subr.bf16.mxu0 0
        %1287 = vmatpush2.bf16.msra.mxu0 0
        %1288 = vmatprep.subr.bf16.mxu0 0
        %1289 = vmatpush2.bf16.msra.mxu0 0
        %1290 = vmatprep.subr.bf16.mxu0 0
        %1291 = vmatpush2.bf16.msra.mxu0 0
        %1292 = vmatprep.subr.bf16.mxu0 0
        %1293 = vmatpush2.bf16.msra.mxu0 0
        %1294 = vmatprep.subr.bf16.mxu0 0
        %1295 = vmatpush2.bf16.msra.mxu0 0
        %1296 = vmatprep.subr.bf16.mxu0 0
        %1297 = vmatpush2.bf16.msra.mxu0 0
        %1298 = vmatprep.subr.bf16.mxu0 0
        %1299 = vmatpush2.bf16.msra.mxu0 0
        %1300 = vmatprep.mubr.bf16.mxu0 0
        %1301 = vmatmul.mubr.bf16.gmra.mxu0 %v1263
        %v1302 = vpop.f32.mrf.mxu0
        %v1303 = vadd.f32 0.0, %v1302
        %v1304 = vpop.f32.mrf.mxu0
        %v1305 = vpop.f32.mrf.mxu0
        %v1306 = vpop.f32.mrf.mxu0
        %1307 = vdwg.mxu0
        %1308 = vrot.lane.b32.xlu0 %v903, 64
        %v1309 = vpop.permute.xlu0 %1308
        %v1311 = vsel %vm907, %v1162, 0
        %v1314 = vsel %vm1168, %v1309, 0
        %1316 = vmatprep.subr.bf16.mxu0 0
        %1317 = vmatpush1.bf16.msra.mxu0 0
        %1318 = vmatprep.subr.bf16.mxu0 0
        %1319 = vmatpush1.bf16.msra.mxu0 0
        %1320 = vmatprep.subr.bf16.mxu0 0
        %1321 = vmatpush1.bf16.msra.mxu0 0
        %1322 = vmatprep.subr.bf16.mxu0 0
        %1323 = vmatpush1.bf16.msra.mxu0 0
        %1324 = vmatprep.subr.bf16.mxu0 0
        %1325 = vmatpush1.bf16.msra.mxu0 0
        %1326 = vmatprep.subr.bf16.mxu0 0
        %1327 = vmatpush1.bf16.msra.mxu0 0
        %1328 = vmatprep.subr.bf16.mxu0 0
        %1329 = vmatpush1.bf16.msra.mxu0 0
        %1330 = vmatprep.subr.bf16.mxu0 0
        %1331 = vmatpush1.bf16.msra.mxu0 %v1314
        %1332 = vmatprep.subr.bf16.mxu0 0
        %1333 = vmatpush2.bf16.msra.mxu0 0
        %1334 = vmatprep.subr.bf16.mxu0 0
        %1335 = vmatpush2.bf16.msra.mxu0 0
        %1336 = vmatprep.subr.bf16.mxu0 0
        %1337 = vmatpush2.bf16.msra.mxu0 0
        %1338 = vmatprep.subr.bf16.mxu0 0
        %1339 = vmatpush2.bf16.msra.mxu0 0
        %1340 = vmatprep.subr.bf16.mxu0 0
        %1341 = vmatpush2.bf16.msra.mxu0 0
        %1342 = vmatprep.subr.bf16.mxu0 0
        %1343 = vmatpush2.bf16.msra.mxu0 0
        %1344 = vmatprep.subr.bf16.mxu0 0
        %1345 = vmatpush2.bf16.msra.mxu0 0
        %1346 = vmatprep.subr.bf16.mxu0 0
        %1347 = vmatpush2.bf16.msra.mxu0 0
        %1348 = vmatprep.mubr.bf16.mxu0 0
        %1349 = vmatmul.mubr.bf16.gmra.mxu0 %v1311
        %v1350 = vpop.f32.mrf.mxu0
        %v1351 = vadd.f32 0.0, %v1350
        %v1352 = vpop.f32.mrf.mxu0
        %v1353 = vpop.f32.mrf.mxu0
        %v1354 = vpop.f32.mrf.mxu0
        %1355 = vdwg.mxu0
        %1357 = vrot.lane.b32.xlu0 %v1255, 8
        %v1358 = vpop.permute.xlu0 %1357
        %1361 = vrot.lane.b32.xlu0 %v1303, 16
        %v1362 = vpop.permute.xlu0 %1361
        %1365 = vrot.lane.b32.xlu0 %v1351, 24
        %v1366 = vpop.permute.xlu0 %1365
        %v1368 = vsel %vm907, %v1207, %v1358
        %vm1369 = vcmask 130048
        %v1370 = vsel %vm1369, %v1368, %v1362
        %vm1371 = vcmask 195584
        %v1372 = vsel %vm1371, %v1370, %v1366
        %v1373 = vpack.c.bf16 %v1372, %v1372
        %v1374 = vld [vmem:[%s10] sm:$0xf]
        %v1375 = vld [vmem:[%s10 + $0x4] sm:$0xf]
        %v1376 = vld [vmem:[%s10 + $0x8] sm:$0xf]
        %v1377 = vld [vmem:[%s10 + $0xc] sm:$0xf]
        %v1378 = vld [vmem:[%s11] sm:$0x1]
        %v1380 = vlaneseq
        %v1381 = vshrl.u32 %v1380, 7
        %v1382 = vsub.s32 0, %v1381
        %v1383 = vrot.slane %v1378, %v1382
        %v1389 = vunpack.c.l.b16 %v1374
        %v1390 = vunpack.c.l.b16 %v1375
        %v1391 = vunpack.c.l.b16 %v1376
        %v1392 = vunpack.c.l.b16 %v1377
        %v1393 = vpack.c.b16 %v1390, %v1389
        %v1394 = vpack.c.b16 %v1392, %v1391
        %v1398 = vsel %vm791, %v1373, 0
        %1400 = vmatprep.subr.bf16.mxu0 0
        %1401 = vmatpush1.bf16.msra.mxu0 0
        %1402 = vmatprep.subr.bf16.mxu0 0
        %1403 = vmatpush1.bf16.msra.mxu0 0
        %1404 = vmatprep.subr.bf16.mxu0 0
        %1405 = vmatpush1.bf16.msra.mxu0 0
        %1406 = vmatprep.subr.bf16.mxu0 0
        %1407 = vmatpush1.bf16.msra.mxu0 0
        %1408 = vmatprep.subr.bf16.mxu0 0
        %1409 = vmatpush1.bf16.msra.mxu0 0
        %1410 = vmatprep.subr.bf16.mxu0 0
        %1411 = vmatpush1.bf16.msra.mxu0 0
        %1412 = vmatprep.subr.bf16.mxu0 0
        %1413 = vmatpush1.bf16.msra.mxu0 %v1394
        %1414 = vmatprep.subr.bf16.mxu0 0
        %1415 = vmatpush1.bf16.msra.mxu0 %v1393
        %1416 = vmatprep.subr.bf16.mxu0 0
        %1417 = vmatpush2.bf16.msra.mxu0 0
        %1418 = vmatprep.subr.bf16.mxu0 0
        %1419 = vmatpush2.bf16.msra.mxu0 0
        %1420 = vmatprep.subr.bf16.mxu0 0
        %1421 = vmatpush2.bf16.msra.mxu0 0
        %1422 = vmatprep.subr.bf16.mxu0 0
        %1423 = vmatpush2.bf16.msra.mxu0 0
        %1424 = vmatprep.subr.bf16.mxu0 0
        %1425 = vmatpush2.bf16.msra.mxu0 0
        %1426 = vmatprep.subr.bf16.mxu0 0
        %1427 = vmatpush2.bf16.msra.mxu0 0
        %1428 = vmatprep.subr.bf16.mxu0 0
        %1429 = vmatpush2.bf16.msra.mxu0 0
        %1430 = vmatprep.subr.bf16.mxu0 0
        %1431 = vmatpush2.bf16.msra.mxu0 0
        %1432 = vmatprep.mubr.bf16.mxu0 0
        %1433 = vmatmul.mubr.bf16.gmra.mxu0 %v1398
        %v1434 = vpop.f32.mrf.mxu0
        %v1435 = vadd.f32 %v1383, %v1434
        %v1436 = vpop.f32.mrf.mxu0
        %v1437 = vpop.f32.mrf.mxu0
        %v1438 = vpop.f32.mrf.mxu0
        %1439 = vdwg.mxu0
        %v1440 = vadd.f32 %v1435, %v819
        %v1441 = vld [vmem:[%s12] sm:$0x1]
        %v1442 = vld [vmem:[%s13] sm:$0x1]
        %v1443 = vsel %vm791, %v1440, 0.0
        %1444 = vadd.xlane.f32.xlu0 %v1443
        %v1445 = vpop.xlane.xlu0 %1444
        %v1446 = vmul.f32 %v1445, %v795
        %v1447 = vsub.f32 %v1440, %v1446
        %v1448 = vmul.f32 %v1447, %v1447
        %v1449 = vsel %vm791, %v1448, 0.0
        %1450 = vadd.xlane.f32.xlu0 %v1449
        %v1451 = vpop.xlane.xlu0 %1450
        %v1452 = vmul.f32 %v1451, %v795
        %v1453 = vadd.f32 %v1452, 1e-12
        %v1454 = vrsqrt.pop %v1453
        %v1455 = vmul.f32 %v1447, %v1454
        %v1457 = vlaneseq
        %v1458 = vshrl.u32 %v1457, 7
        %v1459 = vsub.s32 0, %v1458
        %v1460 = vrot.slane %v1441, %v1459
        %v1462 = vmul.f32 %v1455, %v1460
        %v1464 = vlaneseq
        %v1465 = vshrl.u32 %v1464, 7
        %v1466 = vsub.s32 0, %v1465
        %v1467 = vrot.slane %v1442, %v1466
        %v1469 = vadd.f32 %v1462, %v1467
        %v1470 = vpack.c.bf16 %v1469, %v1469
        %v1471 = vld [vmem:[%s14] sm:$0xf]
        %v1472 = vld [vmem:[%s14 + $0x4] sm:$0xf]
        %v1473 = vld [vmem:[%s14 + $0x8] sm:$0xf]
        %v1474 = vld [vmem:[%s14 + $0xc] sm:$0xf]
        %v1475 = vld [vmem:[%s15] sm:$0x1]
        %v1477 = vlaneseq
        %v1478 = vshrl.u32 %v1477, 7
        %v1479 = vsub.s32 0, %v1478
        %v1480 = vrot.slane %v1475, %v1479
        %v1486 = vunpack.c.l.b16 %v1471
        %v1487 = vunpack.c.l.b16 %v1472
        %v1488 = vunpack.c.l.b16 %v1473
        %v1489 = vunpack.c.l.b16 %v1474
        %v1490 = vpack.c.b16 %v1487, %v1486
        %v1491 = vpack.c.b16 %v1489, %v1488
        %v1495 = vsel %vm791, %v1470, 0
        %1497 = vmatprep.subr.bf16.mxu0 0
        %1498 = vmatpush1.bf16.msra.mxu0 0
        %1499 = vmatprep.subr.bf16.mxu0 0
        %1500 = vmatpush1.bf16.msra.mxu0 0
        %1501 = vmatprep.subr.bf16.mxu0 0
        %1502 = vmatpush1.bf16.msra.mxu0 0
        %1503 = vmatprep.subr.bf16.mxu0 0
        %1504 = vmatpush1.bf16.msra.mxu0 0
        %1505 = vmatprep.subr.bf16.mxu0 0
        %1506 = vmatpush1.bf16.msra.mxu0 0
        %1507 = vmatprep.subr.bf16.mxu0 0
        %1508 = vmatpush1.bf16.msra.mxu0 0
        %1509 = vmatprep.subr.bf16.mxu0 0
        %1510 = vmatpush1.bf16.msra.mxu0 %v1491
        %1511 = vmatprep.subr.bf16.mxu0 0
        %1512 = vmatpush1.bf16.msra.mxu0 %v1490
        %1513 = vmatprep.subr.bf16.mxu0 0
        %1514 = vmatpush2.bf16.msra.mxu0 0
        %1515 = vmatprep.subr.bf16.mxu0 0
        %1516 = vmatpush2.bf16.msra.mxu0 0
        %1517 = vmatprep.subr.bf16.mxu0 0
        %1518 = vmatpush2.bf16.msra.mxu0 0
        %1519 = vmatprep.subr.bf16.mxu0 0
        %1520 = vmatpush2.bf16.msra.mxu0 0
        %1521 = vmatprep.subr.bf16.mxu0 0
        %1522 = vmatpush2.bf16.msra.mxu0 0
        %1523 = vmatprep.subr.bf16.mxu0 0
        %1524 = vmatpush2.bf16.msra.mxu0 0
        %1525 = vmatprep.subr.bf16.mxu0 0
        %1526 = vmatpush2.bf16.msra.mxu0 0
        %1527 = vmatprep.subr.bf16.mxu0 0
        %1528 = vmatpush2.bf16.msra.mxu0 0
        %1529 = vmatprep.mubr.bf16.mxu0 0
        %1530 = vmatmul.mubr.bf16.gmra.mxu0 %v1495
        %v1531 = vpop.f32.mrf.mxu0
        %v1532 = vadd.f32 %v1480, %v1531
        %v1533 = vpop.f32.mrf.mxu0
        %v1534 = vpop.f32.mrf.mxu0
        %v1535 = vpop.f32.mrf.mxu0
        %1536 = vdwg.mxu0
        %v1537 = vmul.f32 %v1532, %v1532
        %v1538 = vmul.f32 %v1532, %v1537
        %v1539 = vmul.f32 %v1538, 0.044715
        %v1540 = vadd.f32 %v1532, %v1539
        %v1541 = vmul.f32 %v1540, 0.7978846
        %v1542 = vtanh.pop %v1541
        %v1543 = vadd.f32 %v1542, 1.0
        %v1544 = vmul.f32 %v1543, 0.5
        %v1545 = vmul.f32 %v1532, %v1544
        %v1546 = vpack.c.bf16 %v1545, %v1545
        %v1547 = vld [vmem:[%s16] sm:$0xf]
        %v1548 = vld [vmem:[%s16 + $0x4] sm:$0xf]
        %v1549 = vld [vmem:[%s16 + $0x8] sm:$0xf]
        %v1550 = vld [vmem:[%s16 + $0xc] sm:$0xf]
        %v1551 = vld [vmem:[%s16 + $0x10] sm:$0xf]
        %v1552 = vld [vmem:[%s16 + $0x14] sm:$0xf]
        %v1553 = vld [vmem:[%s16 + $0x18] sm:$0xf]
        %v1554 = vld [vmem:[%s16 + $0x1c] sm:$0xf]
        %v1555 = vld [vmem:[%s17] sm:$0x1]
        %v1557 = vlaneseq
        %v1558 = vshrl.u32 %v1557, 7
        %v1559 = vsub.s32 0, %v1558
        %v1560 = vrot.slane %v1555, %v1559
        %v1570 = vunpack.c.l.b16 %v1547
        %v1571 = vunpack.c.l.b16 %v1548
        %v1572 = vunpack.c.l.b16 %v1549
        %v1573 = vunpack.c.l.b16 %v1550
        %v1574 = vunpack.c.l.b16 %v1551
        %v1575 = vunpack.c.l.b16 %v1552
        %v1576 = vunpack.c.l.b16 %v1553
        %v1577 = vunpack.c.l.b16 %v1554
        %v1578 = vpack.c.b16 %v1571, %v1570
        %v1579 = vpack.c.b16 %v1573, %v1572
        %v1580 = vpack.c.b16 %v1575, %v1574
        %v1581 = vpack.c.b16 %v1577, %v1576
        %vm1586 = vcmask 523264
        %v1588 = vsel %vm1586, %v1546, 0
        %1590 = vmatprep.subr.bf16.mxu0 0
        %1591 = vmatpush1.bf16.msra.mxu0 0
        %1592 = vmatprep.subr.bf16.mxu0 0
        %1593 = vmatpush1.bf16.msra.mxu0 0
        %1594 = vmatprep.subr.bf16.mxu0 0
        %1595 = vmatpush1.bf16.msra.mxu0 0
        %1596 = vmatprep.subr.bf16.mxu0 0
        %1597 = vmatpush1.bf16.msra.mxu0 0
        %1598 = vmatprep.subr.bf16.mxu0 0
        %1599 = vmatpush1.bf16.msra.mxu0 %v1581
        %1600 = vmatprep.subr.bf16.mxu0 0
        %1601 = vmatpush1.bf16.msra.mxu0 %v1580
        %1602 = vmatprep.subr.bf16.mxu0 0
        %1603 = vmatpush1.bf16.msra.mxu0 %v1579
        %1604 = vmatprep.subr.bf16.mxu0 0
        %1605 = vmatpush1.bf16.msra.mxu0 %v1578
        %1606 = vmatprep.subr.bf16.mxu0 0
        %1607 = vmatpush2.bf16.msra.mxu0 0
        %1608 = vmatprep.subr.bf16.mxu0 0
        %1609 = vmatpush2.bf16.msra.mxu0 0
        %1610 = vmatprep.subr.bf16.mxu0 0
        %1611 = vmatpush2.bf16.msra.mxu0 0
        %1612 = vmatprep.subr.bf16.mxu0 0
        %1613 = vmatpush2.bf16.msra.mxu0 0
        %1614 = vmatprep.subr.bf16.mxu0 0
        %1615 = vmatpush2.bf16.msra.mxu0 0
        %1616 = vmatprep.subr.bf16.mxu0 0
        %1617 = vmatpush2.bf16.msra.mxu0 0
        %1618 = vmatprep.subr.bf16.mxu0 0
        %1619 = vmatpush2.bf16.msra.mxu0 0
        %1620 = vmatprep.subr.bf16.mxu0 0
        %1621 = vmatpush2.bf16.msra.mxu0 0
        %1622 = vmatprep.mubr.bf16.mxu0 0
        %1623 = vmatmul.mubr.bf16.gmra.mxu0 %v1588
        %v1624 = vpop.f32.mrf.mxu0
        %v1625 = vadd.f32 %v1560, %v1624
        %v1626 = vpop.f32.mrf.mxu0
        %v1627 = vpop.f32.mrf.mxu0
        %v1628 = vpop.f32.mrf.mxu0
        %1629 = vdwg.mxu0
        %v1630 = vadd.f32 %v1625, %v1469
        %v1631 = vld [vmem:[%s18] sm:$0x1]
        %v1632 = vld [vmem:[%s19] sm:$0x1]
        %v1633 = vsel %vm791, %v1630, 0.0
        %1634 = vadd.xlane.f32.xlu0 %v1633
        %v1635 = vpop.xlane.xlu0 %1634
        %v1636 = vmul.f32 %v1635, %v795
        %v1637 = vsub.f32 %v1630, %v1636
        %v1638 = vmul.f32 %v1637, %v1637
        %v1639 = vsel %vm791, %v1638, 0.0
        %1640 = vadd.xlane.f32.xlu0 %v1639
        %v1641 = vpop.xlane.xlu0 %1640
        %v1642 = vmul.f32 %v1641, %v795
        %v1643 = vadd.f32 %v1642, 1e-12
        %v1644 = vrsqrt.pop %v1643
        %v1645 = vmul.f32 %v1637, %v1644
        %v1647 = vlaneseq
        %v1648 = vshrl.u32 %v1647, 7
        %v1649 = vsub.s32 0, %v1648
        %v1650 = vrot.slane %v1631, %v1649
        %v1652 = vmul.f32 %v1645, %v1650
        %v1654 = vlaneseq
        %v1655 = vshrl.u32 %v1654, 7
        %v1656 = vsub.s32 0, %v1655
        %v1657 = vrot.slane %v1632, %v1656
        %v1659 = vadd.f32 %v1652, %v1657
        %v1660 = vpack.c.bf16 %v1659, %v1659
        %s1661 = scalar_lea.vmem %s8, 16
        %v1662 = vld [vmem:[%s1661] sm:$0xf]
        %v1663 = vld [vmem:[%s1661 + $0x4] sm:$0xf]
        %v1664 = vld [vmem:[%s1661 + $0x8] sm:$0xf]
        %v1665 = vld [vmem:[%s1661 + $0xc] sm:$0xf]
        %s1666 = scalar_lea.vmem %s9, 1
        %v1667 = vld [vmem:[%s1666] sm:$0x1]
        %v1669 = vlaneseq
        %v1670 = vshrl.u32 %v1669, 7
        %v1671 = vsub.s32 0, %v1670
        %v1672 = vrot.slane %v1667, %v1671
        %v1678 = vunpack.c.l.b16 %v1662
        %v1679 = vunpack.c.l.b16 %v1663
        %v1680 = vunpack.c.l.b16 %v1664
        %v1681 = vunpack.c.l.b16 %v1665
        %v1682 = vpack.c.b16 %v1679, %v1678
        %v1683 = vpack.c.b16 %v1681, %v1680
        %v1687 = vsel %vm791, %v1660, 0
        %1689 = vmatprep.subr.bf16.mxu0 0
        %1690 = vmatpush1.bf16.msra.mxu0 0
        %1691 = vmatprep.subr.bf16.mxu0 0
        %1692 = vmatpush1.bf16.msra.mxu0 0
        %1693 = vmatprep.subr.bf16.mxu0 0
        %1694 = vmatpush1.bf16.msra.mxu0 0
        %1695 = vmatprep.subr.bf16.mxu0 0
        %1696 = vmatpush1.bf16.msra.mxu0 0
        %1697 = vmatprep.subr.bf16.mxu0 0
        %1698 = vmatpush1.bf16.msra.mxu0 0
        %1699 = vmatprep.subr.bf16.mxu0 0
        %1700 = vmatpush1.bf16.msra.mxu0 0
        %1701 = vmatprep.subr.bf16.mxu0 0
        %1702 = vmatpush1.bf16.msra.mxu0 %v1683
        %1703 = vmatprep.subr.bf16.mxu0 0
        %1704 = vmatpush1.bf16.msra.mxu0 %v1682
        %1705 = vmatprep.subr.bf16.mxu0 0
        %1706 = vmatpush2.bf16.msra.mxu0 0
        %1707 = vmatprep.subr.bf16.mxu0 0
        %1708 = vmatpush2.bf16.msra.mxu0 0
        %1709 = vmatprep.subr.bf16.mxu0 0
        %1710 = vmatpush2.bf16.msra.mxu0 0
        %1711 = vmatprep.subr.bf16.mxu0 0
        %1712 = vmatpush2.bf16.msra.mxu0 0
        %1713 = vmatprep.subr.bf16.mxu0 0
        %1714 = vmatpush2.bf16.msra.mxu0 0
        %1715 = vmatprep.subr.bf16.mxu0 0
        %1716 = vmatpush2.bf16.msra.mxu0 0
        %1717 = vmatprep.subr.bf16.mxu0 0
        %1718 = vmatpush2.bf16.msra.mxu0 0
        %1719 = vmatprep.subr.bf16.mxu0 0
        %1720 = vmatpush2.bf16.msra.mxu0 0
        %1721 = vmatprep.mubr.bf16.mxu0 0
        %1722 = vmatmul.mubr.bf16.gmra.mxu0 %v1687
        %v1723 = vpop.f32.mrf.mxu0
        %v1724 = vadd.f32 %v1672, %v1723
        %v1725 = vpop.f32.mrf.mxu0
        %v1726 = vpop.f32.mrf.mxu0
        %v1727 = vpop.f32.mrf.mxu0
        %1728 = vdwg.mxu0
        %1730 = vrot.lane.b32.xlu0 %v1724, 120
        %v1731 = vpop.permute.xlu0 %1730
        %1733 = vrot.lane.b32.xlu0 %v1724, 112
        %v1734 = vpop.permute.xlu0 %1733
        %1736 = vrot.lane.b32.xlu0 %v1724, 104
        %v1737 = vpop.permute.xlu0 %1736
        %v1739 = vpack.c.bf16 %v1724, %v1724
        %v1740 = vpack.c.bf16 %v1731, %v1731
        %v1741 = vpack.c.bf16 %v1734, %v1734
        %v1742 = vpack.c.bf16 %v1737, %v1737
        %1744 = vrot.lane.b32.xlu0 %v1739, 96
        %v1745 = vpop.permute.xlu0 %1744
        %v1747 = vsel %vm907, %v1739, 0
        %v1750 = vsel %vm907, %v1745, 0
        %1752 = vmatprep.subr.bf16.mxu0 0
        %1753 = vmatpush1.bf16.xpose.msra.mxu0 0
        %1754 = vmatprep.subr.bf16.mxu0 0
        %1755 = vmatpush1.bf16.xpose.msra.mxu0 0
        %1756 = vmatprep.subr.bf16.mxu0 0
        %1757 = vmatpush1.bf16.xpose.msra.mxu0 0
        %1758 = vmatprep.subr.bf16.mxu0 0
        %1759 = vmatpush1.bf16.xpose.msra.mxu0 0
        %1760 = vmatprep.subr.bf16.mxu0 0
        %1761 = vmatpush1.bf16.xpose.msra.mxu0 0
        %1762 = vmatprep.subr.bf16.mxu0 0
        %1763 = vmatpush1.bf16.xpose.msra.mxu0 0
        %1764 = vmatprep.subr.bf16.mxu0 0
        %1765 = vmatpush1.bf16.xpose.msra.mxu0 0
        %1766 = vmatprep.subr.bf16.mxu0 0
        %1767 = vmatpush1.bf16.xpose.msra.mxu0 %v1750
        %1768 = vmatprep.subr.bf16.mxu0 0
        %1769 = vmatpush2.bf16.xpose.msra.mxu0 0
        %1770 = vmatprep.subr.bf16.mxu0 0
        %1771 = vmatpush2.bf16.xpose.msra.mxu0 0
        %1772 = vmatprep.subr.bf16.mxu0 0
        %1773 = vmatpush2.bf16.xpose.msra.mxu0 0
        %1774 = vmatprep.subr.bf16.mxu0 0
        %1775 = vmatpush2.bf16.xpose.msra.mxu0 0
        %1776 = vmatprep.subr.bf16.mxu0 0
        %1777 = vmatpush2.bf16.xpose.msra.mxu0 0
        %1778 = vmatprep.subr.bf16.mxu0 0
        %1779 = vmatpush2.bf16.xpose.msra.mxu0 0
        %1780 = vmatprep.subr.bf16.mxu0 0
        %1781 = vmatpush2.bf16.xpose.msra.mxu0 0
        %1782 = vmatprep.subr.bf16.mxu0 0
        %1783 = vmatpush2.bf16.xpose.msra.mxu0 0
        %1784 = vmatprep.mubr.bf16.mxu0 0
        %1785 = vmatmul.mubr.bf16.gmra.mxu0 %v1747
        %v1786 = vpop.f32.mrf.mxu0
        %v1787 = vadd.f32 0.0, %v1786
        %v1788 = vpop.f32.mrf.mxu0
        %v1789 = vpop.f32.mrf.mxu0
        %v1790 = vpop.f32.mrf.mxu0
        %1791 = vdwg.mxu0
        %1793 = vrot.lane.b32.xlu0 %v1740, 96
        %v1794 = vpop.permute.xlu0 %1793
        %v1796 = vsel %vm907, %v1740, 0
        %v1799 = vsel %vm907, %v1794, 0
        %1801 = vmatprep.subr.bf16.mxu0 0
        %1802 = vmatpush1.bf16.xpose.msra.mxu0 0
        %1803 = vmatprep.subr.bf16.mxu0 0
        %1804 = vmatpush1.bf16.xpose.msra.mxu0 0
        %1805 = vmatprep.subr.bf16.mxu0 0
        %1806 = vmatpush1.bf16.xpose.msra.mxu0 0
        %1807 = vmatprep.subr.bf16.mxu0 0
        %1808 = vmatpush1.bf16.xpose.msra.mxu0 0
        %1809 = vmatprep.subr.bf16.mxu0 0
        %1810 = vmatpush1.bf16.xpose.msra.mxu0 0
        %1811 = vmatprep.subr.bf16.mxu0 0
        %1812 = vmatpush1.bf16.xpose.msra.mxu0 0
        %1813 = vmatprep.subr.bf16.mxu0 0
        %1814 = vmatpush1.bf16.xpose.msra.mxu0 0
        %1815 = vmatprep.subr.bf16.mxu0 0
        %1816 = vmatpush1.bf16.xpose.msra.mxu0 %v1799
        %1817 = vmatprep.subr.bf16.mxu0 0
        %1818 = vmatpush2.bf16.xpose.msra.mxu0 0
        %1819 = vmatprep.subr.bf16.mxu0 0
        %1820 = vmatpush2.bf16.xpose.msra.mxu0 0
        %1821 = vmatprep.subr.bf16.mxu0 0
        %1822 = vmatpush2.bf16.xpose.msra.mxu0 0
        %1823 = vmatprep.subr.bf16.mxu0 0
        %1824 = vmatpush2.bf16.xpose.msra.mxu0 0
        %1825 = vmatprep.subr.bf16.mxu0 0
        %1826 = vmatpush2.bf16.xpose.msra.mxu0 0
        %1827 = vmatprep.subr.bf16.mxu0 0
        %1828 = vmatpush2.bf16.xpose.msra.mxu0 0
        %1829 = vmatprep.subr.bf16.mxu0 0
        %1830 = vmatpush2.bf16.xpose.msra.mxu0 0
        %1831 = vmatprep.subr.bf16.mxu0 0
        %1832 = vmatpush2.bf16.xpose.msra.mxu0 0
        %1833 = vmatprep.mubr.bf16.mxu0 0
        %1834 = vmatmul.mubr.bf16.gmra.mxu0 %v1796
        %v1835 = vpop.f32.mrf.mxu0
        %v1836 = vadd.f32 0.0, %v1835
        %v1837 = vpop.f32.mrf.mxu0
        %v1838 = vpop.f32.mrf.mxu0
        %v1839 = vpop.f32.mrf.mxu0
        %1840 = vdwg.mxu0
        %1842 = vrot.lane.b32.xlu0 %v1741, 96
        %v1843 = vpop.permute.xlu0 %1842
        %v1845 = vsel %vm907, %v1741, 0
        %v1848 = vsel %vm907, %v1843, 0
        %1850 = vmatprep.subr.bf16.mxu0 0
        %1851 = vmatpush1.bf16.xpose.msra.mxu0 0
        %1852 = vmatprep.subr.bf16.mxu0 0
        %1853 = vmatpush1.bf16.xpose.msra.mxu0 0
        %1854 = vmatprep.subr.bf16.mxu0 0
        %1855 = vmatpush1.bf16.xpose.msra.mxu0 0
        %1856 = vmatprep.subr.bf16.mxu0 0
        %1857 = vmatpush1.bf16.xpose.msra.mxu0 0
        %1858 = vmatprep.subr.bf16.mxu0 0
        %1859 = vmatpush1.bf16.xpose.msra.mxu0 0
        %1860 = vmatprep.subr.bf16.mxu0 0
        %1861 = vmatpush1.bf16.xpose.msra.mxu0 0
        %1862 = vmatprep.subr.bf16.mxu0 0
        %1863 = vmatpush1.bf16.xpose.msra.mxu0 0
        %1864 = vmatprep.subr.bf16.mxu0 0
        %1865 = vmatpush1.bf16.xpose.msra.mxu0 %v1848
        %1866 = vmatprep.subr.bf16.mxu0 0
        %1867 = vmatpush2.bf16.xpose.msra.mxu0 0
        %1868 = vmatprep.subr.bf16.mxu0 0
        %1869 = vmatpush2.bf16.xpose.msra.mxu0 0
        %1870 = vmatprep.subr.bf16.mxu0 0
        %1871 = vmatpush2.bf16.xpose.msra.mxu0 0
        %1872 = vmatprep.subr.bf16.mxu0 0
        %1873 = vmatpush2.bf16.xpose.msra.mxu0 0
        %1874 = vmatprep.subr.bf16.mxu0 0
        %1875 = vmatpush2.bf16.xpose.msra.mxu0 0
        %1876 = vmatprep.subr.bf16.mxu0 0
        %1877 = vmatpush2.bf16.xpose.msra.mxu0 0
        %1878 = vmatprep.subr.bf16.mxu0 0
        %1879 = vmatpush2.bf16.xpose.msra.mxu0 0
        %1880 = vmatprep.subr.bf16.mxu0 0
        %1881 = vmatpush2.bf16.xpose.msra.mxu0 0
        %1882 = vmatprep.mubr.bf16.mxu0 0
        %1883 = vmatmul.mubr.bf16.gmra.mxu0 %v1845
        %v1884 = vpop.f32.mrf.mxu0
        %v1885 = vadd.f32 0.0, %v1884
        %v1886 = vpop.f32.mrf.mxu0
        %v1887 = vpop.f32.mrf.mxu0
        %v1888 = vpop.f32.mrf.mxu0
        %1889 = vdwg.mxu0
        %1891 = vrot.lane.b32.xlu0 %v1742, 96
        %v1892 = vpop.permute.xlu0 %1891
        %v1894 = vsel %vm907, %v1742, 0
        %v1897 = vsel %vm907, %v1892, 0
        %1899 = vmatprep.subr.bf16.mxu0 0
        %1900 = vmatpush1.bf16.xpose.msra.mxu0 0
        %1901 = vmatprep.subr.bf16.mxu0 0
        %1902 = vmatpush1.bf16.xpose.msra.mxu0 0
        %1903 = vmatprep.subr.bf16.mxu0 0
        %1904 = vmatpush1.bf16.xpose.msra.mxu0 0
        %1905 = vmatprep.subr.bf16.mxu0 0
        %1906 = vmatpush1.bf16.xpose.msra.mxu0 0
        %1907 = vmatprep.subr.bf16.mxu0 0
        %1908 = vmatpush1.bf16.xpose.msra.mxu0 0
        %1909 = vmatprep.subr.bf16.mxu0 0
        %1910 = vmatpush1.bf16.xpose.msra.mxu0 0
        %1911 = vmatprep.subr.bf16.mxu0 0
        %1912 = vmatpush1.bf16.xpose.msra.mxu0 0
        %1913 = vmatprep.subr.bf16.mxu0 0
        %1914 = vmatpush1.bf16.xpose.msra.mxu0 %v1897
        %1915 = vmatprep.subr.bf16.mxu0 0
        %1916 = vmatpush2.bf16.xpose.msra.mxu0 0
        %1917 = vmatprep.subr.bf16.mxu0 0
        %1918 = vmatpush2.bf16.xpose.msra.mxu0 0
        %1919 = vmatprep.subr.bf16.mxu0 0
        %1920 = vmatpush2.bf16.xpose.msra.mxu0 0
        %1921 = vmatprep.subr.bf16.mxu0 0
        %1922 = vmatpush2.bf16.xpose.msra.mxu0 0
        %1923 = vmatprep.subr.bf16.mxu0 0
        %1924 = vmatpush2.bf16.xpose.msra.mxu0 0
        %1925 = vmatprep.subr.bf16.mxu0 0
        %1926 = vmatpush2.bf16.xpose.msra.mxu0 0
        %1927 = vmatprep.subr.bf16.mxu0 0
        %1928 = vmatpush2.bf16.xpose.msra.mxu0 0
        %1929 = vmatprep.subr.bf16.mxu0 0
        %1930 = vmatpush2.bf16.xpose.msra.mxu0 0
        %1931 = vmatprep.mubr.bf16.mxu0 0
        %1932 = vmatmul.mubr.bf16.gmra.mxu0 %v1894
        %v1933 = vpop.f32.mrf.mxu0
        %v1934 = vadd.f32 0.0, %v1933
        %v1935 = vpop.f32.mrf.mxu0
        %v1936 = vpop.f32.mrf.mxu0
        %v1937 = vpop.f32.mrf.mxu0
        %1938 = vdwg.mxu0
        %v1939 = vmul.f32 %v1787, 0.35355338
        %v1940 = vmul.f32 %v1836, 0.35355338
        %v1941 = vmul.f32 %v1885, 0.35355338
        %v1942 = vmul.f32 %v1934, 0.35355338
        %v1943 = vadd.f32 %v1939, %v1109
        %v1944 = vadd.f32 %v1940, %v1109
        %v1945 = vadd.f32 %v1941, %v1109
        %v1946 = vadd.f32 %v1942, %v1109
        %v1947 = vsel %vm907, %v1943, -inf
        %1948 = vmax.xlane.f32.xlu0 %v1947
        %v1949 = vpop.xlane.xlu0 %1948
        %v1950 = vsel %vm907, %v1944, -inf
        %1951 = vmax.xlane.f32.xlu0 %v1950
        %v1952 = vpop.xlane.xlu0 %1951
        %v1953 = vsel %vm907, %v1945, -inf
        %1954 = vmax.xlane.f32.xlu0 %v1953
        %v1955 = vpop.xlane.xlu0 %1954
        %v1956 = vsel %vm907, %v1946, -inf
        %1957 = vmax.xlane.f32.xlu0 %v1956
        %v1958 = vpop.xlane.xlu0 %1957
        %v1959 = vsub.f32 %v1943, %v1949
        %v1960 = vsub.f32 %v1944, %v1952
        %v1961 = vsub.f32 %v1945, %v1955
        %v1962 = vsub.f32 %v1946, %v1958
        %v1963 = vmul.f32 %v1959, 1.442695
        %v1964 = vpow.pop %v1963
        %v1965 = vmul.f32 %v1960, 1.442695
        %v1966 = vpow.pop %v1965
        %v1967 = vmul.f32 %v1961, 1.442695
        %v1968 = vpow.pop %v1967
        %v1969 = vmul.f32 %v1962, 1.442695
        %v1970 = vpow.pop %v1969
        %v1971 = vsel %vm907, %v1964, 0.0
        %1972 = vadd.xlane.f32.xlu0 %v1971
        %v1973 = vpop.xlane.xlu0 %1972
        %v1974 = vsel %vm907, %v1966, 0.0
        %1975 = vadd.xlane.f32.xlu0 %v1974
        %v1976 = vpop.xlane.xlu0 %1975
        %v1977 = vsel %vm907, %v1968, 0.0
        %1978 = vadd.xlane.f32.xlu0 %v1977
        %v1979 = vpop.xlane.xlu0 %1978
        %v1980 = vsel %vm907, %v1970, 0.0
        %1981 = vadd.xlane.f32.xlu0 %v1980
        %v1982 = vpop.xlane.xlu0 %1981
        %v1983 = vrcp.pop %v1973
        %v1984 = vrcp.pop %v1976
        %v1985 = vrcp.pop %v1979
        %v1986 = vrcp.pop %v1982
        %v1987 = vmul.f32 %v1964, %v1983
        %v1988 = vmul.f32 %v1966, %v1984
        %v1989 = vmul.f32 %v1968, %v1985
        %v1990 = vmul.f32 %v1970, %v1986
        %v1991 = vpack.c.bf16 %v1987, %v1987
        %v1992 = vpack.c.bf16 %v1988, %v1988
        %v1993 = vpack.c.bf16 %v1989, %v1989
        %v1994 = vpack.c.bf16 %v1990, %v1990
        %1995 = vrot.lane.b32.xlu0 %v1739, 64
        %v1996 = vpop.permute.xlu0 %1995
        %v1998 = vsel %vm907, %v1991, 0
        %v2001 = vsel %vm1168, %v1996, 0
        %2003 = vmatprep.subr.bf16.mxu0 0
        %2004 = vmatpush1.bf16.msra.mxu0 0
        %2005 = vmatprep.subr.bf16.mxu0 0
        %2006 = vmatpush1.bf16.msra.mxu0 0
        %2007 = vmatprep.subr.bf16.mxu0 0
        %2008 = vmatpush1.bf16.msra.mxu0 0
        %2009 = vmatprep.subr.bf16.mxu0 0
        %2010 = vmatpush1.bf16.msra.mxu0 0
        %2011 = vmatprep.subr.bf16.mxu0 0
        %2012 = vmatpush1.bf16.msra.mxu0 0
        %2013 = vmatprep.subr.bf16.mxu0 0
        %2014 = vmatpush1.bf16.msra.mxu0 0
        %2015 = vmatprep.subr.bf16.mxu0 0
        %2016 = vmatpush1.bf16.msra.mxu0 0
        %2017 = vmatprep.subr.bf16.mxu0 0
        %2018 = vmatpush1.bf16.msra.mxu0 %v2001
        %2019 = vmatprep.subr.bf16.mxu0 0
        %2020 = vmatpush2.bf16.msra.mxu0 0
        %2021 = vmatprep.subr.bf16.mxu0 0
        %2022 = vmatpush2.bf16.msra.mxu0 0
        %2023 = vmatprep.subr.bf16.mxu0 0
        %2024 = vmatpush2.bf16.msra.mxu0 0
        %2025 = vmatprep.subr.bf16.mxu0 0
        %2026 = vmatpush2.bf16.msra.mxu0 0
        %2027 = vmatprep.subr.bf16.mxu0 0
        %2028 = vmatpush2.bf16.msra.mxu0 0
        %2029 = vmatprep.subr.bf16.mxu0 0
        %2030 = vmatpush2.bf16.msra.mxu0 0
        %2031 = vmatprep.subr.bf16.mxu0 0
        %2032 = vmatpush2.bf16.msra.mxu0 0
        %2033 = vmatprep.subr.bf16.mxu0 0
        %2034 = vmatpush2.bf16.msra.mxu0 0
        %2035 = vmatprep.mubr.bf16.mxu0 0
        %2036 = vmatmul.mubr.bf16.gmra.mxu0 %v1998
        %v2037 = vpop.f32.mrf.mxu0
        %v2038 = vadd.f32 0.0, %v2037
        %v2039 = vpop.f32.mrf.mxu0
        %v2040 = vpop.f32.mrf.mxu0
        %v2041 = vpop.f32.mrf.mxu0
        %2042 = vdwg.mxu0
        %2043 = vrot.lane.b32.xlu0 %v1740, 64
        %v2044 = vpop.permute.xlu0 %2043
        %v2046 = vsel %vm907, %v1992, 0
        %v2049 = vsel %vm1168, %v2044, 0
        %2051 = vmatprep.subr.bf16.mxu0 0
        %2052 = vmatpush1.bf16.msra.mxu0 0
        %2053 = vmatprep.subr.bf16.mxu0 0
        %2054 = vmatpush1.bf16.msra.mxu0 0
        %2055 = vmatprep.subr.bf16.mxu0 0
        %2056 = vmatpush1.bf16.msra.mxu0 0
        %2057 = vmatprep.subr.bf16.mxu0 0
        %2058 = vmatpush1.bf16.msra.mxu0 0
        %2059 = vmatprep.subr.bf16.mxu0 0
        %2060 = vmatpush1.bf16.msra.mxu0 0
        %2061 = vmatprep.subr.bf16.mxu0 0
        %2062 = vmatpush1.bf16.msra.mxu0 0
        %2063 = vmatprep.subr.bf16.mxu0 0
        %2064 = vmatpush1.bf16.msra.mxu0 0
        %2065 = vmatprep.subr.bf16.mxu0 0
        %2066 = vmatpush1.bf16.msra.mxu0 %v2049
        %2067 = vmatprep.subr.bf16.mxu0 0
        %2068 = vmatpush2.bf16.msra.mxu0 0
        %2069 = vmatprep.subr.bf16.mxu0 0
        %2070 = vmatpush2.bf16.msra.mxu0 0
        %2071 = vmatprep.subr.bf16.mxu0 0
        %2072 = vmatpush2.bf16.msra.mxu0 0
        %2073 = vmatprep.subr.bf16.mxu0 0
        %2074 = vmatpush2.bf16.msra.mxu0 0
        %2075 = vmatprep.subr.bf16.mxu0 0
        %2076 = vmatpush2.bf16.msra.mxu0 0
        %2077 = vmatprep.subr.bf16.mxu0 0
        %2078 = vmatpush2.bf16.msra.mxu0 0
        %2079 = vmatprep.subr.bf16.mxu0 0
        %2080 = vmatpush2.bf16.msra.mxu0 0
        %2081 = vmatprep.subr.bf16.mxu0 0
        %2082 = vmatpush2.bf16.msra.mxu0 0
        %2083 = vmatprep.mubr.bf16.mxu0 0
        %2084 = vmatmul.mubr.bf16.gmra.mxu0 %v2046
        %v2085 = vpop.f32.mrf.mxu0
        %v2086 = vadd.f32 0.0, %v2085
        %v2087 = vpop.f32.mrf.mxu0
        %v2088 = vpop.f32.mrf.mxu0
        %v2089 = vpop.f32.mrf.mxu0
        %2090 = vdwg.mxu0
        %2091 = vrot.lane.b32.xlu0 %v1741, 64
        %v2092 = vpop.permute.xlu0 %2091
        %v2094 = vsel %vm907, %v1993, 0
        %v2097 = vsel %vm1168, %v2092, 0
        %2099 = vmatprep.subr.bf16.mxu0 0
        %2100 = vmatpush1.bf16.msra.mxu0 0
        %2101 = vmatprep.subr.bf16.mxu0 0
        %2102 = vmatpush1.bf16.msra.mxu0 0
        %2103 = vmatprep.subr.bf16.mxu0 0
        %2104 = vmatpush1.bf16.msra.mxu0 0
        %2105 = vmatprep.subr.bf16.mxu0 0
        %2106 = vmatpush1.bf16.msra.mxu0 0
        %2107 = vmatprep.subr.bf16.mxu0 0
        %2108 = vmatpush1.bf16.msra.mxu0 0
        %2109 = vmatprep.subr.bf16.mxu0 0
        %2110 = vmatpush1.bf16.msra.mxu0 0
        %2111 = vmatprep.subr.bf16.mxu0 0
        %2112 = vmatpush1.bf16.msra.mxu0 0
        %2113 = vmatprep.subr.bf16.mxu0 0
        %2114 = vmatpush1.bf16.msra.mxu0 %v2097
        %2115 = vmatprep.subr.bf16.mxu0 0
        %2116 = vmatpush2.bf16.msra.mxu0 0
        %2117 = vmatprep.subr.bf16.mxu0 0
        %2118 = vmatpush2.bf16.msra.mxu0 0
        %2119 = vmatprep.subr.bf16.mxu0 0
        %2120 = vmatpush2.bf16.msra.mxu0 0
        %2121 = vmatprep.subr.bf16.mxu0 0
        %2122 = vmatpush2.bf16.msra.mxu0 0
        %2123 = vmatprep.subr.bf16.mxu0 0
        %2124 = vmatpush2.bf16.msra.mxu0 0
        %2125 = vmatprep.subr.bf16.mxu0 0
        %2126 = vmatpush2.bf16.msra.mxu0 0
        %2127 = vmatprep.subr.bf16.mxu0 0
        %2128 = vmatpush2.bf16.msra.mxu0 0
        %2129 = vmatprep.subr.bf16.mxu0 0
        %2130 = vmatpush2.bf16.msra.mxu0 0
        %2131 = vmatprep.mubr.bf16.mxu0 0
        %2132 = vmatmul.mubr.bf16.gmra.mxu0 %v2094
        %v2133 = vpop.f32.mrf.mxu0
        %v2134 = vadd.f32 0.0, %v2133
        %v2135 = vpop.f32.mrf.mxu0
        %v2136 = vpop.f32.mrf.mxu0
        %v2137 = vpop.f32.mrf.mxu0
        %2138 = vdwg.mxu0
        %2139 = vrot.lane.b32.xlu0 %v1742, 64
        %v2140 = vpop.permute.xlu0 %2139
        %v2142 = vsel %vm907, %v1994, 0
        %v2145 = vsel %vm1168, %v2140, 0
        %2147 = vmatprep.subr.bf16.mxu0 0
        %2148 = vmatpush1.bf16.msra.mxu0 0
        %2149 = vmatprep.subr.bf16.mxu0 0
        %2150 = vmatpush1.bf16.msra.mxu0 0
        %2151 = vmatprep.subr.bf16.mxu0 0
        %2152 = vmatpush1.bf16.msra.mxu0 0
        %2153 = vmatprep.subr.bf16.mxu0 0
        %2154 = vmatpush1.bf16.msra.mxu0 0
        %2155 = vmatprep.subr.bf16.mxu0 0
        %2156 = vmatpush1.bf16.msra.mxu0 0
        %2157 = vmatprep.subr.bf16.mxu0 0
        %2158 = vmatpush1.bf16.msra.mxu0 0
        %2159 = vmatprep.subr.bf16.mxu0 0
        %2160 = vmatpush1.bf16.msra.mxu0 0
        %2161 = vmatprep.subr.bf16.mxu0 0
        %2162 = vmatpush1.bf16.msra.mxu0 %v2145
        %2163 = vmatprep.subr.bf16.mxu0 0
        %2164 = vmatpush2.bf16.msra.mxu0 0
        %2165 = vmatprep.subr.bf16.mxu0 0
        %2166 = vmatpush2.bf16.msra.mxu0 0
        %2167 = vmatprep.subr.bf16.mxu0 0
        %2168 = vmatpush2.bf16.msra.mxu0 0
        %2169 = vmatprep.subr.bf16.mxu0 0
        %2170 = vmatpush2.bf16.msra.mxu0 0
        %2171 = vmatprep.subr.bf16.mxu0 0
        %2172 = vmatpush2.bf16.msra.mxu0 0
        %2173 = vmatprep.subr.bf16.mxu0 0
        %2174 = vmatpush2.bf16.msra.mxu0 0
        %2175 = vmatprep.subr.bf16.mxu0 0
        %2176 = vmatpush2.bf16.msra.mxu0 0
        %2177 = vmatprep.subr.bf16.mxu0 0
        %2178 = vmatpush2.bf16.msra.mxu0 0
        %2179 = vmatprep.mubr.bf16.mxu0 0
        %2180 = vmatmul.mubr.bf16.gmra.mxu0 %v2142
        %v2181 = vpop.f32.mrf.mxu0
        %v2182 = vadd.f32 0.0, %v2181
        %v2183 = vpop.f32.mrf.mxu0
        %v2184 = vpop.f32.mrf.mxu0
        %v2185 = vpop.f32.mrf.mxu0
        %2186 = vdwg.mxu0
        %2188 = vrot.lane.b32.xlu0 %v2086, 8
        %v2189 = vpop.permute.xlu0 %2188
        %2192 = vrot.lane.b32.xlu0 %v2134, 16
        %v2193 = vpop.permute.xlu0 %2192
        %2196 = vrot.lane.b32.xlu0 %v2182, 24
        %v2197 = vpop.permute.xlu0 %2196
        %v2199 = vsel %vm907, %v2038, %v2189
        %v2200 = vsel %vm1369, %v2199, %v2193
        %v2201 = vsel %vm1371, %v2200, %v2197
        %v2202 = vpack.c.bf16 %v2201, %v2201
        %s2203 = scalar_lea.vmem %s10, 16
        %v2204 = vld [vmem:[%s2203] sm:$0xf]
        %v2205 = vld [vmem:[%s2203 + $0x4] sm:$0xf]
        %v2206 = vld [vmem:[%s2203 + $0x8] sm:$0xf]
        %v2207 = vld [vmem:[%s2203 + $0xc] sm:$0xf]
        %s2208 = scalar_lea.vmem %s11, 1
        %v2209 = vld [vmem:[%s2208] sm:$0x1]
        %v2211 = vlaneseq
        %v2212 = vshrl.u32 %v2211, 7
        %v2213 = vsub.s32 0, %v2212
        %v2214 = vrot.slane %v2209, %v2213
        %v2220 = vunpack.c.l.b16 %v2204
        %v2221 = vunpack.c.l.b16 %v2205
        %v2222 = vunpack.c.l.b16 %v2206
        %v2223 = vunpack.c.l.b16 %v2207
        %v2224 = vpack.c.b16 %v2221, %v2220
        %v2225 = vpack.c.b16 %v2223, %v2222
        %v2229 = vsel %vm791, %v2202, 0
        %2231 = vmatprep.subr.bf16.mxu0 0
        %2232 = vmatpush1.bf16.msra.mxu0 0
        %2233 = vmatprep.subr.bf16.mxu0 0
        %2234 = vmatpush1.bf16.msra.mxu0 0
        %2235 = vmatprep.subr.bf16.mxu0 0
        %2236 = vmatpush1.bf16.msra.mxu0 0
        %2237 = vmatprep.subr.bf16.mxu0 0
        %2238 = vmatpush1.bf16.msra.mxu0 0
        %2239 = vmatprep.subr.bf16.mxu0 0
        %2240 = vmatpush1.bf16.msra.mxu0 0
        %2241 = vmatprep.subr.bf16.mxu0 0
        %2242 = vmatpush1.bf16.msra.mxu0 0
        %2243 = vmatprep.subr.bf16.mxu0 0
        %2244 = vmatpush1.bf16.msra.mxu0 %v2225
        %2245 = vmatprep.subr.bf16.mxu0 0
        %2246 = vmatpush1.bf16.msra.mxu0 %v2224
        %2247 = vmatprep.subr.bf16.mxu0 0
        %2248 = vmatpush2.bf16.msra.mxu0 0
        %2249 = vmatprep.subr.bf16.mxu0 0
        %2250 = vmatpush2.bf16.msra.mxu0 0
        %2251 = vmatprep.subr.bf16.mxu0 0
        %2252 = vmatpush2.bf16.msra.mxu0 0
        %2253 = vmatprep.subr.bf16.mxu0 0
        %2254 = vmatpush2.bf16.msra.mxu0 0
        %2255 = vmatprep.subr.bf16.mxu0 0
        %2256 = vmatpush2.bf16.msra.mxu0 0
        %2257 = vmatprep.subr.bf16.mxu0 0
        %2258 = vmatpush2.bf16.msra.mxu0 0
        %2259 = vmatprep.subr.bf16.mxu0 0
        %2260 = vmatpush2.bf16.msra.mxu0 0
        %2261 = vmatprep.subr.bf16.mxu0 0
        %2262 = vmatpush2.bf16.msra.mxu0 0
        %2263 = vmatprep.mubr.bf16.mxu0 0
        %2264 = vmatmul.mubr.bf16.gmra.mxu0 %v2229
        %v2265 = vpop.f32.mrf.mxu0
        %v2266 = vadd.f32 %v2214, %v2265
        %v2267 = vpop.f32.mrf.mxu0
        %v2268 = vpop.f32.mrf.mxu0
        %v2269 = vpop.f32.mrf.mxu0
        %2270 = vdwg.mxu0
        %v2271 = vadd.f32 %v2266, %v1659
        %s2272 = scalar_lea.vmem %s12, 1
        %v2273 = vld [vmem:[%s2272] sm:$0x1]
        %s2274 = scalar_lea.vmem %s13, 1
        %v2275 = vld [vmem:[%s2274] sm:$0x1]
        %v2276 = vsel %vm791, %v2271, 0.0
        %2277 = vadd.xlane.f32.xlu0 %v2276
        %v2278 = vpop.xlane.xlu0 %2277
        %v2279 = vmul.f32 %v2278, %v795
        %v2280 = vsub.f32 %v2271, %v2279
        %v2281 = vmul.f32 %v2280, %v2280
        %v2282 = vsel %vm791, %v2281, 0.0
        %2283 = vadd.xlane.f32.xlu0 %v2282
        %v2284 = vpop.xlane.xlu0 %2283
        %v2285 = vmul.f32 %v2284, %v795
        %v2286 = vadd.f32 %v2285, 1e-12
        %v2287 = vrsqrt.pop %v2286
        %v2288 = vmul.f32 %v2280, %v2287
        %v2290 = vlaneseq
        %v2291 = vshrl.u32 %v2290, 7
        %v2292 = vsub.s32 0, %v2291
        %v2293 = vrot.slane %v2273, %v2292
        %v2295 = vmul.f32 %v2288, %v2293
        %v2297 = vlaneseq
        %v2298 = vshrl.u32 %v2297, 7
        %v2299 = vsub.s32 0, %v2298
        %v2300 = vrot.slane %v2275, %v2299
        %v2302 = vadd.f32 %v2295, %v2300
        %v2303 = vpack.c.bf16 %v2302, %v2302
        %s2304 = scalar_lea.vmem %s14, 16
        %v2305 = vld [vmem:[%s2304] sm:$0xf]
        %v2306 = vld [vmem:[%s2304 + $0x4] sm:$0xf]
        %v2307 = vld [vmem:[%s2304 + $0x8] sm:$0xf]
        %v2308 = vld [vmem:[%s2304 + $0xc] sm:$0xf]
        %s2309 = scalar_lea.vmem %s15, 1
        %v2310 = vld [vmem:[%s2309] sm:$0x1]
        %v2312 = vlaneseq
        %v2313 = vshrl.u32 %v2312, 7
        %v2314 = vsub.s32 0, %v2313
        %v2315 = vrot.slane %v2310, %v2314
        %v2321 = vunpack.c.l.b16 %v2305
        %v2322 = vunpack.c.l.b16 %v2306
        %v2323 = vunpack.c.l.b16 %v2307
        %v2324 = vunpack.c.l.b16 %v2308
        %v2325 = vpack.c.b16 %v2322, %v2321
        %v2326 = vpack.c.b16 %v2324, %v2323
        %v2330 = vsel %vm791, %v2303, 0
        %2332 = vmatprep.subr.bf16.mxu0 0
        %2333 = vmatpush1.bf16.msra.mxu0 0
        %2334 = vmatprep.subr.bf16.mxu0 0
        %2335 = vmatpush1.bf16.msra.mxu0 0
        %2336 = vmatprep.subr.bf16.mxu0 0
        %2337 = vmatpush1.bf16.msra.mxu0 0
        %2338 = vmatprep.subr.bf16.mxu0 0
        %2339 = vmatpush1.bf16.msra.mxu0 0
        %2340 = vmatprep.subr.bf16.mxu0 0
        %2341 = vmatpush1.bf16.msra.mxu0 0
        %2342 = vmatprep.subr.bf16.mxu0 0
        %2343 = vmatpush1.bf16.msra.mxu0 0
        %2344 = vmatprep.subr.bf16.mxu0 0
        %2345 = vmatpush1.bf16.msra.mxu0 %v2326
        %2346 = vmatprep.subr.bf16.mxu0 0
        %2347 = vmatpush1.bf16.msra.mxu0 %v2325
        %2348 = vmatprep.subr.bf16.mxu0 0
        %2349 = vmatpush2.bf16.msra.mxu0 0
        %2350 = vmatprep.subr.bf16.mxu0 0
        %2351 = vmatpush2.bf16.msra.mxu0 0
        %2352 = vmatprep.subr.bf16.mxu0 0
        %2353 = vmatpush2.bf16.msra.mxu0 0
        %2354 = vmatprep.subr.bf16.mxu0 0
        %2355 = vmatpush2.bf16.msra.mxu0 0
        %2356 = vmatprep.subr.bf16.mxu0 0
        %2357 = vmatpush2.bf16.msra.mxu0 0
        %2358 = vmatprep.subr.bf16.mxu0 0
        %2359 = vmatpush2.bf16.msra.mxu0 0
        %2360 = vmatprep.subr.bf16.mxu0 0
        %2361 = vmatpush2.bf16.msra.mxu0 0
        %2362 = vmatprep.subr.bf16.mxu0 0
        %2363 = vmatpush2.bf16.msra.mxu0 0
        %2364 = vmatprep.mubr.bf16.mxu0 0
        %2365 = vmatmul.mubr.bf16.gmra.mxu0 %v2330
        %v2366 = vpop.f32.mrf.mxu0
        %v2367 = vadd.f32 %v2315, %v2366
        %v2368 = vpop.f32.mrf.mxu0
        %v2369 = vpop.f32.mrf.mxu0
        %v2370 = vpop.f32.mrf.mxu0
        %2371 = vdwg.mxu0
        %v2372 = vmul.f32 %v2367, %v2367
        %v2373 = vmul.f32 %v2367, %v2372
        %v2374 = vmul.f32 %v2373, 0.044715
        %v2375 = vadd.f32 %v2367, %v2374
        %v2376 = vmul.f32 %v2375, 0.7978846
        %v2377 = vtanh.pop %v2376
        %v2378 = vadd.f32 %v2377, 1.0
        %v2379 = vmul.f32 %v2378, 0.5
        %v2380 = vmul.f32 %v2367, %v2379
        %v2381 = vpack.c.bf16 %v2380, %v2380
        %s2382 = scalar_lea.vmem %s16, 32
        %v2383 = vld [vmem:[%s2382] sm:$0xf]
        %v2384 = vld [vmem:[%s2382 + $0x4] sm:$0xf]
        %v2385 = vld [vmem:[%s2382 + $0x8] sm:$0xf]
        %v2386 = vld [vmem:[%s2382 + $0xc] sm:$0xf]
        %v2387 = vld [vmem:[%s2382 + $0x10] sm:$0xf]
        %v2388 = vld [vmem:[%s2382 + $0x14] sm:$0xf]
        %v2389 = vld [vmem:[%s2382 + $0x18] sm:$0xf]
        %v2390 = vld [vmem:[%s2382 + $0x1c] sm:$0xf]
        %s2391 = scalar_lea.vmem %s17, 1
        %v2392 = vld [vmem:[%s2391] sm:$0x1]
        %v2394 = vlaneseq
        %v2395 = vshrl.u32 %v2394, 7
        %v2396 = vsub.s32 0, %v2395
        %v2397 = vrot.slane %v2392, %v2396
        %v2407 = vunpack.c.l.b16 %v2383
        %v2408 = vunpack.c.l.b16 %v2384
        %v2409 = vunpack.c.l.b16 %v2385
        %v2410 = vunpack.c.l.b16 %v2386
        %v2411 = vunpack.c.l.b16 %v2387
        %v2412 = vunpack.c.l.b16 %v2388
        %v2413 = vunpack.c.l.b16 %v2389
        %v2414 = vunpack.c.l.b16 %v2390
        %v2415 = vpack.c.b16 %v2408, %v2407
        %v2416 = vpack.c.b16 %v2410, %v2409
        %v2417 = vpack.c.b16 %v2412, %v2411
        %v2418 = vpack.c.b16 %v2414, %v2413
        %v2424 = vsel %vm1586, %v2381, 0
        %2426 = vmatprep.subr.bf16.mxu0 0
        %2427 = vmatpush1.bf16.msra.mxu0 0
        %2428 = vmatprep.subr.bf16.mxu0 0
        %2429 = vmatpush1.bf16.msra.mxu0 0
        %2430 = vmatprep.subr.bf16.mxu0 0
        %2431 = vmatpush1.bf16.msra.mxu0 0
        %2432 = vmatprep.subr.bf16.mxu0 0
        %2433 = vmatpush1.bf16.msra.mxu0 0
        %2434 = vmatprep.subr.bf16.mxu0 0
        %2435 = vmatpush1.bf16.msra.mxu0 %v2418
        %2436 = vmatprep.subr.bf16.mxu0 0
        %2437 = vmatpush1.bf16.msra.mxu0 %v2417
        %2438 = vmatprep.subr.bf16.mxu0 0
        %2439 = vmatpush1.bf16.msra.mxu0 %v2416
        %2440 = vmatprep.subr.bf16.mxu0 0
        %2441 = vmatpush1.bf16.msra.mxu0 %v2415
        %2442 = vmatprep.subr.bf16.mxu0 0
        %2443 = vmatpush2.bf16.msra.mxu0 0
        %2444 = vmatprep.subr.bf16.mxu0 0
        %2445 = vmatpush2.bf16.msra.mxu0 0
        %2446 = vmatprep.subr.bf16.mxu0 0
        %2447 = vmatpush2.bf16.msra.mxu0 0
        %2448 = vmatprep.subr.bf16.mxu0 0
        %2449 = vmatpush2.bf16.msra.mxu0 0
        %2450 = vmatprep.subr.bf16.mxu0 0
        %2451 = vmatpush2.bf16.msra.mxu0 0
        %2452 = vmatprep.subr.bf16.mxu0 0
        %2453 = vmatpush2.bf16.msra.mxu0 0
        %2454 = vmatprep.subr.bf16.mxu0 0
        %2455 = vmatpush2.bf16.msra.mxu0 0
        %2456 = vmatprep.subr.bf16.mxu0 0
        %2457 = vmatpush2.bf16.msra.mxu0 0
        %2458 = vmatprep.mubr.bf16.mxu0 0
        %2459 = vmatmul.mubr.bf16.gmra.mxu0 %v2424
        %v2460 = vpop.f32.mrf.mxu0
        %v2461 = vadd.f32 %v2397, %v2460
        %v2462 = vpop.f32.mrf.mxu0
        %v2463 = vpop.f32.mrf.mxu0
        %v2464 = vpop.f32.mrf.mxu0
        %2465 = vdwg.mxu0
        %v2466 = vadd.f32 %v2461, %v2302
        %s2467 = scalar_lea.vmem %s18, 1
        %v2468 = vld [vmem:[%s2467] sm:$0x1]
        %s2469 = scalar_lea.vmem %s19, 1
        %v2470 = vld [vmem:[%s2469] sm:$0x1]
        %v2471 = vsel %vm791, %v2466, 0.0
        %2472 = vadd.xlane.f32.xlu0 %v2471
        %v2473 = vpop.xlane.xlu0 %2472
        %v2474 = vmul.f32 %v2473, %v795
        %v2475 = vsub.f32 %v2466, %v2474
        %v2476 = vmul.f32 %v2475, %v2475
        %v2477 = vsel %vm791, %v2476, 0.0
        %2478 = vadd.xlane.f32.xlu0 %v2477
        %v2479 = vpop.xlane.xlu0 %2478
        %v2480 = vmul.f32 %v2479, %v795
        %v2481 = vadd.f32 %v2480, 1e-12
        %v2482 = vrsqrt.pop %v2481
        %v2483 = vmul.f32 %v2475, %v2482
        %v2485 = vlaneseq
        %v2486 = vshrl.u32 %v2485, 7
        %v2487 = vsub.s32 0, %v2486
        %v2488 = vrot.slane %v2468, %v2487
        %v2490 = vmul.f32 %v2483, %v2488
        %v2492 = vlaneseq
        %v2493 = vshrl.u32 %v2492, 7
        %v2494 = vsub.s32 0, %v2493
        %v2495 = vrot.slane %v2470, %v2494
        %v2497 = vadd.f32 %v2490, %v2495
        %v2499 = vsel %vm907, %v820, 0
        %2501 = vmatprep.subr.mxu0 0.0
        %2502 = vmatpush1.msra.mxu0 0.0
        %2503 = vmatprep.subr.mxu0 0.0
        %2504 = vmatpush1.msra.mxu0 0.0
        %2505 = vmatprep.subr.mxu0 0.0
        %2506 = vmatpush1.msra.mxu0 0.0
        %2507 = vmatprep.subr.mxu0 0.0
        %2508 = vmatpush1.msra.mxu0 0.0
        %2509 = vmatprep.subr.mxu0 0.0
        %2510 = vmatpush1.msra.mxu0 0.0
        %2511 = vmatprep.subr.mxu0 0.0
        %2512 = vmatpush1.msra.mxu0 0.0
        %2513 = vmatprep.subr.mxu0 0.0
        %2514 = vmatpush1.msra.mxu0 0.0
        %2515 = vmatprep.subr.mxu0 0.0
        %2516 = vmatpush1.msra.mxu0 0.0
        %2517 = vmatprep.subr.mxu0 0.0
        %2518 = vmatpush1.msra.mxu0 0.0
        %2519 = vmatprep.subr.mxu0 0.0
        %2520 = vmatpush1.msra.mxu0 0.0
        %2521 = vmatprep.subr.mxu0 0.0
        %2522 = vmatpush1.msra.mxu0 0.0
        %2523 = vmatprep.subr.mxu0 0.0
        %2524 = vmatpush1.msra.mxu0 0.0
        %2525 = vmatprep.subr.mxu0 0.0
        %2526 = vmatpush1.msra.mxu0 0.0
        %2527 = vmatprep.subr.mxu0 0.0
        %2528 = vmatpush1.msra.mxu0 0.0
        %2529 = vmatprep.subr.mxu0 0.0
        %2530 = vmatpush1.msra.mxu0 0.0
        %2531 = vmatprep.subr.mxu0 0.0
        %2532 = vmatpush1.msra.mxu0 %v2497
        %2533 = vmatprep.subr.mxu0 0.0
        %2534 = vmatpush2.msra.mxu0 0.0
        %2535 = vmatprep.subr.mxu0 0.0
        %2536 = vmatpush2.msra.mxu0 0.0
        %2537 = vmatprep.subr.mxu0 0.0
        %2538 = vmatpush2.msra.mxu0 0.0
        %2539 = vmatprep.subr.mxu0 0.0
        %2540 = vmatpush2.msra.mxu0 0.0
        %2541 = vmatprep.subr.mxu0 0.0
        %2542 = vmatpush2.msra.mxu0 0.0
        %2543 = vmatprep.subr.mxu0 0.0
        %2544 = vmatpush2.msra.mxu0 0.0
        %2545 = vmatprep.subr.mxu0 0.0
        %2546 = vmatpush2.msra.mxu0 0.0
        %2547 = vmatprep.subr.mxu0 0.0
        %2548 = vmatpush2.msra.mxu0 0.0
        %2549 = vmatprep.subr.mxu0 0.0
        %2550 = vmatpush2.msra.mxu0 0.0
        %2551 = vmatprep.subr.mxu0 0.0
        %2552 = vmatpush2.msra.mxu0 0.0
        %2553 = vmatprep.subr.mxu0 0.0
        %2554 = vmatpush2.msra.mxu0 0.0
        %2555 = vmatprep.subr.mxu0 0.0
        %2556 = vmatpush2.msra.mxu0 0.0
        %2557 = vmatprep.subr.mxu0 0.0
        %2558 = vmatpush2.msra.mxu0 0.0
        %2559 = vmatprep.subr.mxu0 0.0
        %2560 = vmatpush2.msra.mxu0 0.0
        %2561 = vmatprep.subr.mxu0 0.0
        %2562 = vmatpush2.msra.mxu0 0.0
        %2563 = vmatprep.subr.mxu0 0.0
        %2564 = vmatpush2.msra.mxu0 0.0
        %2565 = vmatprep.mubr.f32.mxu0 0.0
        %2566 = vmatmul.mubr.f32.gmra.mxu0 %v2499
        %v2567 = vpop.f32.mrf.mxu0
        %v2568 = vadd.f32 0.0, %v2567
        %v2569 = vpop.f32.mrf.mxu0
        %2570 = vdwg.mxu0
        %vm2571 = vcmask 57344
        %v2572 = vsel %vm2571, %v820, 0.0
        %2573 = vadd.xlane.f32.xlu0 %v2572
        %v2574 = vpop.xlane.xlu0 %2573
        %v2575 = vmax.f32 %v2574, 1e-09
        %v2576 = vrcp.pop %v2575
        %v2577 = vmul.f32 %v2568, %v2576
        %vm2578 = vcmask 253952
        %2579 = vst.msk [vmem:[%s643] sm:$0x1] %vm2578, %v2577
        %s2580 = sand.u32 %s477, 1
        %s2581 = scalar_lea.sflag [#allocation3], %s2580
        %s2582 = sand.u32 %s477, 1
        %s2583 = scalar_lea.vmem [#allocation2], %s2582
        // Predicated region
        $region101: #{encode_and_pool.1} parent=99 // pred_check
          %p2584 = pneg %p487
        $region102: #{encode_and_pool.1} parent=99 // pred_check_branch
          %2586 = sbr.rel (%p2584) target = $region104
        $region103: #{encode_and_pool.1} parent=99 // pred_region
          %s2588 = ssub.s32 16, 16
          %2589 = vsyncadd %s2581, %s2588
          %s2590 = smul.addr %s34, 16
          %s2591 = scalar_lea.hbm %s20, %s2590
          %s2593 = sshll.u32 %s2583, 4
          %s2594 = int_to_ptr.vmem [resolvable:$true] %s2593
          %2596 = dma.vmem_to_hbm [thread:$0]  %s2594, 16, %s2591, %s2581
        $region104: #{encode_and_pool.1} parent=99 // pred_fallthru
          _
      $region100: #{encode_and_pool.1} parent=5 // pred_fallthru
        _
      %p2597 = scmp.le.s32.totalorder 2, %s29
      // Predicated region
      $region105: #{encode_and_pool.1} parent=5 // pred_check
        %p2598 = pneg %p2597
      $region106: #{encode_and_pool.1} parent=5 // pred_check_branch
        %2600 = sbr.rel (%p2598) target = $region108
      $region107: #{encode_and_pool.1} parent=5 // pred_region
        %s2601 = ssub.s32 %s29, 2
        // Predicated region
        $region109: #{encode_and_pool.1} parent=107 // pred_check
          %p2602 = pneg %p493
        $region110: #{encode_and_pool.1} parent=107 // pred_check_branch
          %2604 = sbr.rel (%p2602) target = $region112
        $region111: #{encode_and_pool.1} parent=107 // pred_region
          %s2605 = sand.u32 %s478, 1
          %s2606 = scalar_lea.sflag [#allocation3], %s2605
          %s2607 = sand.u32 %s478, 1
          %s2608 = scalar_lea.vmem [#allocation2], %s2607
          %2609 = dma.done %s2606, 16
        $region112: #{encode_and_pool.1} parent=107 // pred_fallthru
          _
      $region108: #{encode_and_pool.1} parent=5 // pred_fallthru
        _
    $region6: #{encode_and_pool.1} parent=1 // loop_footer
      %s33 = sadd.s32 1, %s29
    $region7: #{encode_and_pool.1} parent=1 // loop_footer_branch
      %28 = sbr.rel target = $region3
    $region8: #{encode_and_pool.1} parent=1 // loop_exit
      _
    %2610 = vsyncpa [#allocation3], 1
    %s2611 = scalar_lea.sflag [#allocation3], 1
    %2612 = vsyncpa %s2611, 1

</llo_original>
